<compile_context>
chip_gen: v5e
topology: v5e:2x2
jax: 0.10.0
libtpu: 0.0.40
codegen_flags: <defaults>
</compile_context>

<pallas_src>
import functools

import jax
import jax.numpy as jnp
from jax.experimental import pallas as pl
from jax.experimental.pallas import tpu as pltpu


def cnn_kernel(x_ref, tbl_ref, b1_ref,
               w2_ref, b2_ref,
               w3_ref, b3_ref,
               wfc_ref, bfc_ref,
               out_ref, *, seq_len):
    n_rows = x_ref.shape[0]                  # Bblk * T
    V = tbl_ref.shape[0]
    H = w2_ref.shape[1]
    T = seq_len
    Bblk = n_rows // T

    # ---- fused embedding-gather + conv1-taps via one-hot matmul -------------
    # table rows are [emb[v] @ w1a | emb[v] @ w1b]  (precomputed on host, f32)
    ids = x_ref[...]                                            # (Bblk*T, 1) int32
    iota = jax.lax.broadcasted_iota(jnp.int32, (n_rows, V), 1)
    onehot = (ids == iota).astype(jnp.float32)                  # (Bblk*T, V)
    taps = jnp.dot(onehot, tbl_ref[...],
                   preferred_element_type=jnp.float32)          # (Bblk*T, 2H)
    taps = taps.reshape(Bblk, T, 2 * H)

    # conv1 (k=2) + ReLU: tap_a[t] + tap_b[t+1] + b1   (exact, f32)
    h = taps[:, :-1, :H] + taps[:, 1:, H:] + b1_ref[...]
    h = jnp.maximum(h, 0.0)                                     # (Bblk, T-1, H)

    # ---- conv2/conv3 (k=2) + ReLU: taps fused into one K=2H matmul ----------
    def fused_conv_relu(h3d, w_ref, b_ref):
        L = h3d.shape[1]
        xcat = jnp.concatenate([h3d[:, :-1, :], h3d[:, 1:, :]], axis=-1)
        xcat = xcat.reshape(Bblk * (L - 1), 2 * H).astype(jnp.bfloat16)
        y = jnp.dot(xcat, w_ref[...],
                    preferred_element_type=jnp.float32) + b_ref[...]
        return jnp.maximum(y, 0.0).reshape(Bblk, L - 1, H)

    h = fused_conv_relu(h, w2_ref, b2_ref)                      # (Bblk, T-2, H)
    h = fused_conv_relu(h, w3_ref, b3_ref)                      # (Bblk, T-3, H)

    # ---- temporal mean: sum here, 1/(T-3) is folded into wfc on the host ----
    pooled = jnp.sum(h, axis=1)                                 # (Bblk, H) f32

    # ---- fc -> lane-dense (Bblk, Vpad) logits -------------------------------
    out_ref[...] = (jnp.dot(pooled.astype(jnp.bfloat16), wfc_ref[...],
                            preferred_element_type=jnp.float32)
                    + bfc_ref[...]).astype(out_ref.dtype)


def cnn_forward(x_idx, params, *, batch_block=32):
    """x_idx: (B, T) int token ids. Returns logits (B, V) float32."""
    assert batch_block % 8 == 0
    emb_table = params["embedding"]                             # (V, E)
    B, T = x_idx.shape
    V, E = emb_table.shape
    H = params["w1a"].shape[1]
    assert T >= 4, "need T >= 4 for three kernel_size=2 convs"

    LANE = 128
    Vpad = pl.cdiv(V, LANE) * LANE                              # lane-dense fc/output
    Bblk = batch_block
    B_pad = pl.cdiv(B, Bblk) * Bblk

    # ---- host-side weight prep ----------------------------------------------
    # fold embedding + conv1 taps into one (V, 2H) lookup table (exact f32)
    tbl = jnp.concatenate([emb_table @ params["w1a"],
                           emb_table @ params["w1b"]], axis=1)  # (V, 2H) f32
    w2 = jnp.concatenate([params["w2a"], params["w2b"]],
                         axis=0).astype(jnp.bfloat16)           # (2H, H)
    w3 = jnp.concatenate([params["w3a"], params["w3b"]],
                         axis=0).astype(jnp.bfloat16)           # (2H, H)
    b1, b2, b3 = params["b1"], params["b2"], params["b3"]       # (1, H) f32
    # fold the 1/(T-3) temporal mean into the fc weight; pad V -> Vpad lanes
    wfc = jnp.zeros((H, Vpad), jnp.float32).at[:, :V].set(
        params["wfc"] / (T - 3)).astype(jnp.bfloat16)
    bfc = jnp.zeros((1, Vpad), jnp.float32).at[:, :V].set(params["bfc"])

    # pad batch to a multiple of the block; flatten ids to (B_pad*T, 1)
    x_pad = jnp.pad(x_idx.astype(jnp.int32), ((0, B_pad - B), (0, 0)))
    x_flat = x_pad.reshape(B_pad * T, 1)

    weights = [tbl, b1, w2, b2, w3, b3, wfc, bfc]
    full = lambda a: pl.BlockSpec(a.shape, lambda b: (0,) * a.ndim)

    grid_spec = pltpu.PrefetchScalarGridSpec(
        num_scalar_prefetch=0,
        grid=(B_pad // Bblk,),
        in_specs=[pl.BlockSpec((Bblk * T, 1), lambda b: (b, 0))]
                 + [full(w) for w in weights],
        out_specs=pl.BlockSpec((Bblk, Vpad), lambda b: (b, 0)),
    )

    out = pl.pallas_call(
        functools.partial(cnn_kernel, seq_len=T),
        out_shape=jax.ShapeDtypeStruct((B_pad, Vpad), jnp.float32),
        grid_spec=grid_spec,
        compiler_params=pltpu.CompilerParams(
            dimension_semantics=("parallel",)),
    )(x_flat, *weights)

    return out[:B, :V]


def init_params(key, vocab_size, embedding_dim=24, hidden_dim=128):
    """Deterministic synthetic init mirroring the PyTorch module's shapes.

    Conv weights use kaiming-uniform-style bounds (fan_in = Cin * K, K=2);
    conv/linear biases use the default +-1/sqrt(fan_in) uniform; embedding ~ N(0,1).
    Conv weights are stored already transposed per-tap as (Cin, Cout).
    """
    ks = jax.random.split(key, 12)
    E, H, V = embedding_dim, hidden_dim, vocab_size

    def kaiming_u(k, cin, cout, ksize):
        bound = jnp.sqrt(6.0 / (cin * ksize))          # gain=sqrt(2), fan_in=cin*k
        w = jax.random.uniform(k, (cout, cin, ksize), jnp.float32, -bound, bound)
        return jnp.transpose(w[:, :, 0]), jnp.transpose(w[:, :, 1])

    def bias_u(k, fan_in, n):
        bound = 1.0 / jnp.sqrt(fan_in)
        return jax.random.uniform(k, (1, n), jnp.float32, -bound, bound)

    w1a, w1b = kaiming_u(ks[0], E, H, 2)
    w2a, w2b = kaiming_u(ks[1], H, H, 2)
    w3a, w3b = kaiming_u(ks[2], H, H, 2)
    wfc_bound = 1.0 / jnp.sqrt(H)
    wfc = jax.random.uniform(ks[3], (H, V), jnp.float32, -wfc_bound, wfc_bound)

    return {
        "embedding": jax.random.normal(ks[4], (V, E), jnp.float32),
        "w1a": w1a, "w1b": w1b, "b1": bias_u(ks[5], E * 2, H),
        "w2a": w2a, "w2b": w2b, "b2": bias_u(ks[6], H * 2, H),
        "w3a": w3a, "w3b": w3b, "b3": bias_u(ks[7], H * 2, H),
        "wfc": wfc, "bfc": bias_u(ks[8], H, V),
    }


if __name__ == "__main__":
    key = jax.random.PRNGKey(0)
    vocab_size, embedding_dim, hidden_dim = 32, 24, 128
    batch, block_size = 48, 8                     # pads to 64 -> 2 parallel grid steps

    pkey, xkey = jax.random.split(key)
    params = init_params(pkey, vocab_size, embedding_dim, hidden_dim)
    x = jax.random.randint(xkey, (batch, block_size), 0, vocab_size,
                           dtype=jnp.int32)

    logits = cnn_forward(x, params)
    jax.block_until_ready(logits)

    # pure-JAX f32 reference of the same forward pass (kernel uses bf16 operands
    # for conv2/conv3/fc with f32 accumulation, hence the loose tolerance)
    emb = jnp.take(params["embedding"], x, axis=0)

    def conv(h, wa, wb, b):
        return jnp.maximum(h[:, :-1, :] @ wa + h[:, 1:, :] @ wb + b, 0.0)

    r = conv(emb, params["w1a"], params["w1b"], params["b1"])
    r = conv(r, params["w2a"], params["w2b"], params["b2"])
    r = conv(r, params["w3a"], params["w3b"], params["b3"])
    ref = r.mean(axis=1) @ params["wfc"] + params["bfc"]

    assert logits.shape == (batch, vocab_size)
    assert jnp.allclose(logits, ref, atol=5e-2, rtol=5e-2), \
        float(jnp.max(jnp.abs(logits - ref)))

    print("KERNEL_OK")
</pallas_src>

<mosaic_0001>
module attributes {stable_mosaic.version = 11 : i64} {
  func.func @cnn_kernel(%arg0: i32, %arg1: memref<256x1xi32, #tpu.memory_space<vmem>>, %arg2: memref<32x256xf32, #tpu.memory_space<vmem>>, %arg3: memref<1x128xf32, #tpu.memory_space<vmem>>, %arg4: memref<256x128xbf16, #tpu.memory_space<vmem>>, %arg5: memref<1x128xf32, #tpu.memory_space<vmem>>, %arg6: memref<256x128xbf16, #tpu.memory_space<vmem>>, %arg7: memref<1x128xf32, #tpu.memory_space<vmem>>, %arg8: memref<128x128xbf16, #tpu.memory_space<vmem>>, %arg9: memref<1x128xf32, #tpu.memory_space<vmem>>, %arg10: memref<32x128xf32, #tpu.memory_space<vmem>>) attributes {dimension_semantics = [#tpu.dimension_semantics<parallel>], iteration_bounds = array<i64: 2>, scalar_prefetch = 0 : i64, scratch_operands = 0 : i64, tpu.core_type = #tpu.core_type<tc>, window_params = [{transform_indices = @transform_0, window_bounds = array<i64: 256, 1>}, {pipeline_mode = #tpu.pipeline_mode<synchronous>, transform_indices = @transform_1, window_bounds = array<i64: 32, 256>}, {pipeline_mode = #tpu.pipeline_mode<synchronous>, transform_indices = @transform_2, window_bounds = array<i64: 1, 128>}, {pipeline_mode = #tpu.pipeline_mode<synchronous>, transform_indices = @transform_3, window_bounds = array<i64: 256, 128>}, {pipeline_mode = #tpu.pipeline_mode<synchronous>, transform_indices = @transform_4, window_bounds = array<i64: 1, 128>}, {pipeline_mode = #tpu.pipeline_mode<synchronous>, transform_indices = @transform_5, window_bounds = array<i64: 256, 128>}, {pipeline_mode = #tpu.pipeline_mode<synchronous>, transform_indices = @transform_6, window_bounds = array<i64: 1, 128>}, {pipeline_mode = #tpu.pipeline_mode<synchronous>, transform_indices = @transform_7, window_bounds = array<i64: 128, 128>}, {pipeline_mode = #tpu.pipeline_mode<synchronous>, transform_indices = @transform_8, window_bounds = array<i64: 1, 128>}, {transform_indices = @transform_9, window_bounds = array<i64: 32, 128>}]} {
    %c0 = arith.constant 0 : index
    %c0_0 = arith.constant 0 : index
    %0 = vector.load %arg1[%c0, %c0_0] : memref<256x1xi32, #tpu.memory_space<vmem>>, vector<256x1xi32>
    %1 = tpu.iota {dimensions = array<i32: 1>} : vector<256x32xi32>
    %2 = vector.broadcast %0 : vector<256x1xi32> to vector<256x32xi32>
    %3 = arith.cmpi eq, %2, %1 : vector<256x32xi32>
    %4 = arith.extui %3 : vector<256x32xi1> to vector<256x32xi32>
    %5 = arith.sitofp %4 : vector<256x32xi32> to vector<256x32xf32>
    %c0_1 = arith.constant 0 : index
    %c0_2 = arith.constant 0 : index
    %6 = vector.load %arg2[%c0_1, %c0_2] : memref<32x256xf32, #tpu.memory_space<vmem>>, vector<32x256xf32>
    %cst = arith.constant dense<0.000000e+00> : vector<256x256xf32>
    %7 = tpu.matmul %5, %6, %cst {dimension_numbers = #tpu.dot_dimension_numbers<[1], [0], [0], [1], [0, 0, 1, 1], [], []>} : vector<256x32xf32>, vector<32x256xf32>, vector<256x256xf32> -> vector<256x256xf32>
    %8 = vector.shape_cast %7 : vector<256x256xf32> to vector<32x8x256xf32>
    %9 = vector.extract_strided_slice %8 {offsets = [0, 0, 0], sizes = [32, 7, 128], strides = [1, 1, 1]} : vector<32x8x256xf32> to vector<32x7x128xf32>
    %10 = vector.extract_strided_slice %8 {offsets = [0, 1, 128], sizes = [32, 7, 128], strides = [1, 1, 1]} : vector<32x8x256xf32> to vector<32x7x128xf32>
    %11 = arith.addf %9, %10 : vector<32x7x128xf32>
    %c0_3 = arith.constant 0 : index
    %c0_4 = arith.constant 0 : index
    %12 = vector.load %arg3[%c0_3, %c0_4] : memref<1x128xf32, #tpu.memory_space<vmem>>, vector<1x128xf32>
    %13 = vector.shape_cast %12 : vector<1x128xf32> to vector<1x1x128xf32>
    %14 = vector.broadcast %13 : vector<1x1x128xf32> to vector<32x7x128xf32>
    %15 = arith.addf %11, %14 : vector<32x7x128xf32>
    %cst_5 = arith.constant 0.000000e+00 : f32
    %16 = vector.broadcast %cst_5 : f32 to vector<32x7x128xf32>
    %17 = arith.maximumf %15, %16 : vector<32x7x128xf32>
    %18 = vector.extract_strided_slice %17 {offsets = [0, 0, 0], sizes = [32, 6, 128], strides = [1, 1, 1]} : vector<32x7x128xf32> to vector<32x6x128xf32>
    %19 = vector.extract_strided_slice %17 {offsets = [0, 1, 0], sizes = [32, 6, 128], strides = [1, 1, 1]} : vector<32x7x128xf32> to vector<32x6x128xf32>
    %20 = tpu.concatenate %18, %19 in 2 : vector<32x6x128xf32>, vector<32x6x128xf32> -> vector<32x6x256xf32>
    %21 = vector.shape_cast %20 : vector<32x6x256xf32> to vector<192x256xf32>
    %22 = arith.truncf %21 : vector<192x256xf32> to vector<192x256xbf16>
    %c0_6 = arith.constant 0 : index
    %c0_7 = arith.constant 0 : index
    %23 = vector.load %arg4[%c0_6, %c0_7] : memref<256x128xbf16, #tpu.memory_space<vmem>>, vector<256x128xbf16>
    %cst_8 = arith.constant dense<0.000000e+00> : vector<192x128xf32>
    %24 = tpu.matmul %22, %23, %cst_8 {dimension_numbers = #tpu.dot_dimension_numbers<[1], [0], [0], [1], [0, 0, 1, 1], [], []>} : vector<192x256xbf16>, vector<256x128xbf16>, vector<192x128xf32> -> vector<192x128xf32>
    %c0_9 = arith.constant 0 : index
    %c0_10 = arith.constant 0 : index
    %25 = vector.load %arg5[%c0_9, %c0_10] : memref<1x128xf32, #tpu.memory_space<vmem>>, vector<1x128xf32>
    %26 = vector.broadcast %25 : vector<1x128xf32> to vector<192x128xf32>
    %27 = arith.addf %24, %26 : vector<192x128xf32>
    %cst_11 = arith.constant 0.000000e+00 : f32
    %28 = vector.broadcast %cst_11 : f32 to vector<192x128xf32>
    %29 = arith.maximumf %27, %28 : vector<192x128xf32>
    %30 = vector.shape_cast %29 : vector<192x128xf32> to vector<32x6x128xf32>
    %31 = vector.extract_strided_slice %30 {offsets = [0, 0, 0], sizes = [32, 5, 128], strides = [1, 1, 1]} : vector<32x6x128xf32> to vector<32x5x128xf32>
    %32 = vector.extract_strided_slice %30 {offsets = [0, 1, 0], sizes = [32, 5, 128], strides = [1, 1, 1]} : vector<32x6x128xf32> to vector<32x5x128xf32>
    %33 = tpu.concatenate %31, %32 in 2 : vector<32x5x128xf32>, vector<32x5x128xf32> -> vector<32x5x256xf32>
    %34 = vector.shape_cast %33 : vector<32x5x256xf32> to vector<160x256xf32>
    %35 = arith.truncf %34 : vector<160x256xf32> to vector<160x256xbf16>
    %c0_12 = arith.constant 0 : index
    %c0_13 = arith.constant 0 : index
    %36 = vector.load %arg6[%c0_12, %c0_13] : memref<256x128xbf16, #tpu.memory_space<vmem>>, vector<256x128xbf16>
    %cst_14 = arith.constant dense<0.000000e+00> : vector<160x128xf32>
    %37 = tpu.matmul %35, %36, %cst_14 {dimension_numbers = #tpu.dot_dimension_numbers<[1], [0], [0], [1], [0, 0, 1, 1], [], []>} : vector<160x256xbf16>, vector<256x128xbf16>, vector<160x128xf32> -> vector<160x128xf32>
    %c0_15 = arith.constant 0 : index
    %c0_16 = arith.constant 0 : index
    %38 = vector.load %arg7[%c0_15, %c0_16] : memref<1x128xf32, #tpu.memory_space<vmem>>, vector<1x128xf32>
    %39 = vector.broadcast %38 : vector<1x128xf32> to vector<160x128xf32>
    %40 = arith.addf %37, %39 : vector<160x128xf32>
    %cst_17 = arith.constant 0.000000e+00 : f32
    %41 = vector.broadcast %cst_17 : f32 to vector<160x128xf32>
    %42 = arith.maximumf %40, %41 : vector<160x128xf32>
    %43 = vector.shape_cast %42 : vector<160x128xf32> to vector<32x5x128xf32>
    %cst_18 = arith.constant dense<0.000000e+00> : vector<32x128xf32>
    %44 = vector.multi_reduction <add>, %43, %cst_18 [1] : vector<32x5x128xf32> to vector<32x128xf32>
    %45 = arith.truncf %44 : vector<32x128xf32> to vector<32x128xbf16>
    %c0_19 = arith.constant 0 : index
    %c0_20 = arith.constant 0 : index
    %46 = vector.load %arg8[%c0_19, %c0_20] : memref<128x128xbf16, #tpu.memory_space<vmem>>, vector<128x128xbf16>
    %cst_21 = arith.constant dense<0.000000e+00> : vector<32x128xf32>
    %47 = tpu.matmul %45, %46, %cst_21 {dimension_numbers = #tpu.dot_dimension_numbers<[1], [0], [0], [1], [0, 0, 1, 1], [], []>} : vector<32x128xbf16>, vector<128x128xbf16>, vector<32x128xf32> -> vector<32x128xf32>
    %c0_22 = arith.constant 0 : index
    %c0_23 = arith.constant 0 : index
    %48 = vector.load %arg9[%c0_22, %c0_23] : memref<1x128xf32, #tpu.memory_space<vmem>>, vector<1x128xf32>
    %49 = vector.broadcast %48 : vector<1x128xf32> to vector<32x128xf32>
    %50 = arith.addf %47, %49 : vector<32x128xf32>
    %c0_24 = arith.constant 0 : index
    %c0_25 = arith.constant 0 : index
    %51 = vector.load %arg10[%c0_24, %c0_25] : memref<32x128xf32, #tpu.memory_space<vmem>>, vector<32x128xf32>
    tpu.vector_store %arg10[%c0_24, %c0_25], %50 {strides = array<i32>} : memref<32x128xf32, #tpu.memory_space<vmem>>, vector<32x128xf32>,
    return
  }
  func.func @transform_0(%arg0: i32) -> (i32, i32) {
    %c0_i32 = arith.constant 0 : i32
    %c0_i32_0 = arith.constant 0 : i32
    return %arg0, %c0_i32 : i32, i32
  }
  func.func @transform_1(%arg0: i32) -> (i32, i32) {
    %c0_i32 = arith.constant 0 : i32
    %c0_i32_0 = arith.constant 0 : i32
    %c0_i32_1 = arith.constant 0 : i32
    return %c0_i32, %c0_i32_0 : i32, i32
  }
  func.func @transform_2(%arg0: i32) -> (i32, i32) {
    %c0_i32 = arith.constant 0 : i32
    %c0_i32_0 = arith.constant 0 : i32
    %c0_i32_1 = arith.constant 0 : i32
    return %c0_i32, %c0_i32_0 : i32, i32
  }
  func.func @transform_3(%arg0: i32) -> (i32, i32) {
    %c0_i32 = arith.constant 0 : i32
    %c0_i32_0 = arith.constant 0 : i32
    %c0_i32_1 = arith.constant 0 : i32
    return %c0_i32, %c0_i32_0 : i32, i32
  }
  func.func @transform_4(%arg0: i32) -> (i32, i32) {
    %c0_i32 = arith.constant 0 : i32
    %c0_i32_0 = arith.constant 0 : i32
    %c0_i32_1 = arith.constant 0 : i32
    return %c0_i32, %c0_i32_0 : i32, i32
  }
  func.func @transform_5(%arg0: i32) -> (i32, i32) {
    %c0_i32 = arith.constant 0 : i32
    %c0_i32_0 = arith.constant 0 : i32
    %c0_i32_1 = arith.constant 0 : i32
    return %c0_i32, %c0_i32_0 : i32, i32
  }
  func.func @transform_6(%arg0: i32) -> (i32, i32) {
    %c0_i32 = arith.constant 0 : i32
    %c0_i32_0 = arith.constant 0 : i32
    %c0_i32_1 = arith.constant 0 : i32
    return %c0_i32, %c0_i32_0 : i32, i32
  }
  func.func @transform_7(%arg0: i32) -> (i32, i32) {
    %c0_i32 = arith.constant 0 : i32
    %c0_i32_0 = arith.constant 0 : i32
    %c0_i32_1 = arith.constant 0 : i32
    return %c0_i32, %c0_i32_0 : i32, i32
  }
  func.func @transform_8(%arg0: i32) -> (i32, i32) {
    %c0_i32 = arith.constant 0 : i32
    %c0_i32_0 = arith.constant 0 : i32
    %c0_i32_1 = arith.constant 0 : i32
    return %c0_i32, %c0_i32_0 : i32, i32
  }
  func.func @transform_9(%arg0: i32) -> (i32, i32) {
    %c0_i32 = arith.constant 0 : i32
    %c0_i32_0 = arith.constant 0 : i32
    return %arg0, %c0_i32 : i32, i32
  }
}

</mosaic_0001>

<llo_original>
// kernel: tpu_custom_call.1
$region0: #{tpu_custom_call.1}
  #allocation0 [shape = 'u32[]', space=smem, size = 0x4, offset = 0x4, fixed_abs, tag = 'smem constant byte address 0x4 - core index']
  #allocation1 [shape = 'u32[72,128]{1,0:T(1,128)}', space=vmem, size = 0x9000, scoped, tag = 'internal scratch']
  %s0 = inlined_call_operand.vmem [shape: s32[512,1], index: 0, kind: input, shape index: {}]
  %s1 = inlined_call_operand.vmem [shape: f32[32,256], index: 1, kind: input, shape index: {}]
  %s2 = inlined_call_operand.vmem [shape: f32[1,128], index: 2, kind: input, shape index: {}]
  %s3 = inlined_call_operand.vmem [shape: bf16[256,128], index: 3, kind: input, shape index: {}]
  %s4 = inlined_call_operand.vmem [shape: f32[1,128], index: 4, kind: input, shape index: {}]
  %s5 = inlined_call_operand.vmem [shape: bf16[256,128], index: 5, kind: input, shape index: {}]
  %s6 = inlined_call_operand.vmem [shape: f32[1,128], index: 6, kind: input, shape index: {}]
  %s7 = inlined_call_operand.vmem [shape: bf16[128,128], index: 7, kind: input, shape index: {}]
  %s8 = inlined_call_operand.vmem [shape: f32[1,128], index: 8, kind: input, shape index: {}]
  %s9 = inlined_call_operand.hbm [shape: f32[64,128], index: 9, kind: output, shape index: {}]
  %s10 = sld [smem:[#allocation0]]
  $region69: #{tpu_custom_call.1} parent=0
    _
  %s12 = ssub.s32 1, %s10
  %s13 = scalar_select 0, %s12, %s10
  $region1: #{tpu_custom_call.1} parent=0
    #allocation2 [shape = 'u8[32768]{0}', space=vmem, size = 0x8000, scoped, tag = 'output window, operand 0']
    #allocation3 [shape = 's32[2]{0}', space=sflag, size = 0x8, scoped, tag = 'scoped memory for tpu_custom_call.1']
    %14 = vsyncpa [#allocation3], 0
    %s15 = scalar_lea.sflag [#allocation3], 1
    %16 = vsyncpa %s15, 0
    loop: start=0, step=1, limit=4
    $region2: #{tpu_custom_call.1} parent=1 // loop_pre_header
      _
    $region3: #{tpu_custom_call.1} parent=1 // loop_header
      %s18 = sphi 0, %s22
      %p19 = scmp.ge.s32.totalorder %s18, 4
      %s28 = sphi 0, %s30
      %s31 = sphi 0, %s28
      %s32 = sphi 0, %s31
      %s48 = sphi 0, %s32
      %s52 = sphi 0, %s52
      %s54 = sphi 0, %s52
      %s55 = sphi 0, %s54
      %s69 = sphi 0, %s55
      %s73 = sphi 0, %s73
      %s75 = sphi 0, %s73
      %s76 = sphi 0, %s75
      %s90 = sphi 0, %s76
      %s94 = sphi 0, %s94
      %s96 = sphi 0, %s94
      %s97 = sphi 0, %s96
      %s111 = sphi 0, %s97
      %s115 = sphi 0, %s115
      %s117 = sphi 0, %s115
      %s118 = sphi 0, %s117
      %s132 = sphi 0, %s118
      %s136 = sphi 0, %s136
      %s138 = sphi 0, %s136
      %s139 = sphi 0, %s138
      %s153 = sphi 0, %s139
      %s157 = sphi 0, %s157
      %s159 = sphi 0, %s157
      %s160 = sphi 0, %s159
      %s174 = sphi 0, %s160
      %s178 = sphi 0, %s178
      %s180 = sphi 0, %s178
      %s181 = sphi 0, %s180
      %s195 = sphi 0, %s181
      %s199 = sphi 0, %s199
      %s201 = sphi 0, %s199
      %s202 = sphi 0, %s201
      %s216 = sphi 0, %s202
      %s222 = sphi 0, %s224
      %s225 = sphi 0, %s222
      %s226 = sphi 0, %s225
      %s242 = sphi 0, %s226
    $region4: #{tpu_custom_call.1} parent=1 // loop_header_branch
      %21 = sbr.rel (%p19) target = $region8
    $region5: #{tpu_custom_call.1} parent=1 // loop_body
      %s23 = ssub.s32 %s18, 1
      %s24 = ssub.s32 %s18, 2
      %s25 = sadd.s32 %s18, 1
      %s26 = ssub.s32 %s18, %s25
      %p27 = scmp.eq.s32.totalorder %s26, 0
      %s29 = sadd.s32 %s28, 1
      %s30 = scalar_select %p27, %s28, %s29
      %p33 = pneg %p27
      %p34 = scmp.eq.s32.totalorder %s18, 1
      %p35 = por %p33, %p34
      %p36 = scmp.ne.s32.totalorder %s28, %s31
      %p37 = scmp.eq.s32.totalorder %s18, 0
      %p38 = por %p36, %p37
      %p39 = scmp.ne.s32.totalorder %s28, %s31
      %p40 = scmp.eq.s32.totalorder %s23, 1
      %p41 = por %p39, %p40
      %p42 = scmp.ne.s32.totalorder %s31, %s32
      %p43 = scmp.eq.s32.totalorder %s23, 0
      %p44 = por %p42, %p43
      %p45 = scmp.ne.s32.totalorder %s31, %s32
      %p46 = scmp.eq.s32.totalorder %s24, 1
      %p47 = por %p45, %p46
      %p49 = scmp.ne.s32.totalorder %s32, %s48
      %p50 = scmp.eq.s32.totalorder %s24, 0
      %p51 = por %p49, %p50
      %s53 = sadd.s32 %s52, 1
      %p56 = scmp.eq.s32.totalorder %s18, 1
      %p57 = scmp.ne.s32.totalorder %s52, %s54
      %p58 = scmp.eq.s32.totalorder %s18, 0
      %p59 = por %p57, %p58
      %p60 = scmp.ne.s32.totalorder %s52, %s54
      %p61 = scmp.eq.s32.totalorder %s23, 1
      %p62 = por %p60, %p61
      %p63 = scmp.ne.s32.totalorder %s54, %s55
      %p64 = scmp.eq.s32.totalorder %s23, 0
      %p65 = por %p63, %p64
      %p66 = scmp.ne.s32.totalorder %s54, %s55
      %p67 = scmp.eq.s32.totalorder %s24, 1
      %p68 = por %p66, %p67
      %p70 = scmp.ne.s32.totalorder %s55, %s69
      %p71 = scmp.eq.s32.totalorder %s24, 0
      %p72 = por %p70, %p71
      %s74 = sadd.s32 %s73, 1
      %p77 = scmp.eq.s32.totalorder %s18, 1
      %p78 = scmp.ne.s32.totalorder %s73, %s75
      %p79 = scmp.eq.s32.totalorder %s18, 0
      %p80 = por %p78, %p79
      %p81 = scmp.ne.s32.totalorder %s73, %s75
      %p82 = scmp.eq.s32.totalorder %s23, 1
      %p83 = por %p81, %p82
      %p84 = scmp.ne.s32.totalorder %s75, %s76
      %p85 = scmp.eq.s32.totalorder %s23, 0
      %p86 = por %p84, %p85
      %p87 = scmp.ne.s32.totalorder %s75, %s76
      %p88 = scmp.eq.s32.totalorder %s24, 1
      %p89 = por %p87, %p88
      %p91 = scmp.ne.s32.totalorder %s76, %s90
      %p92 = scmp.eq.s32.totalorder %s24, 0
      %p93 = por %p91, %p92
      %s95 = sadd.s32 %s94, 1
      %p98 = scmp.eq.s32.totalorder %s18, 1
      %p99 = scmp.ne.s32.totalorder %s94, %s96
      %p100 = scmp.eq.s32.totalorder %s18, 0
      %p101 = por %p99, %p100
      %p102 = scmp.ne.s32.totalorder %s94, %s96
      %p103 = scmp.eq.s32.totalorder %s23, 1
      %p104 = por %p102, %p103
      %p105 = scmp.ne.s32.totalorder %s96, %s97
      %p106 = scmp.eq.s32.totalorder %s23, 0
      %p107 = por %p105, %p106
      %p108 = scmp.ne.s32.totalorder %s96, %s97
      %p109 = scmp.eq.s32.totalorder %s24, 1
      %p110 = por %p108, %p109
      %p112 = scmp.ne.s32.totalorder %s97, %s111
      %p113 = scmp.eq.s32.totalorder %s24, 0
      %p114 = por %p112, %p113
      %s116 = sadd.s32 %s115, 1
      %p119 = scmp.eq.s32.totalorder %s18, 1
      %p120 = scmp.ne.s32.totalorder %s115, %s117
      %p121 = scmp.eq.s32.totalorder %s18, 0
      %p122 = por %p120, %p121
      %p123 = scmp.ne.s32.totalorder %s115, %s117
      %p124 = scmp.eq.s32.totalorder %s23, 1
      %p125 = por %p123, %p124
      %p126 = scmp.ne.s32.totalorder %s117, %s118
      %p127 = scmp.eq.s32.totalorder %s23, 0
      %p128 = por %p126, %p127
      %p129 = scmp.ne.s32.totalorder %s117, %s118
      %p130 = scmp.eq.s32.totalorder %s24, 1
      %p131 = por %p129, %p130
      %p133 = scmp.ne.s32.totalorder %s118, %s132
      %p134 = scmp.eq.s32.totalorder %s24, 0
      %p135 = por %p133, %p134
      %s137 = sadd.s32 %s136, 1
      %p140 = scmp.eq.s32.totalorder %s18, 1
      %p141 = scmp.ne.s32.totalorder %s136, %s138
      %p142 = scmp.eq.s32.totalorder %s18, 0
      %p143 = por %p141, %p142
      %p144 = scmp.ne.s32.totalorder %s136, %s138
      %p145 = scmp.eq.s32.totalorder %s23, 1
      %p146 = por %p144, %p145
      %p147 = scmp.ne.s32.totalorder %s138, %s139
      %p148 = scmp.eq.s32.totalorder %s23, 0
      %p149 = por %p147, %p148
      %p150 = scmp.ne.s32.totalorder %s138, %s139
      %p151 = scmp.eq.s32.totalorder %s24, 1
      %p152 = por %p150, %p151
      %p154 = scmp.ne.s32.totalorder %s139, %s153
      %p155 = scmp.eq.s32.totalorder %s24, 0
      %p156 = por %p154, %p155
      %s158 = sadd.s32 %s157, 1
      %p161 = scmp.eq.s32.totalorder %s18, 1
      %p162 = scmp.ne.s32.totalorder %s157, %s159
      %p163 = scmp.eq.s32.totalorder %s18, 0
      %p164 = por %p162, %p163
      %p165 = scmp.ne.s32.totalorder %s157, %s159
      %p166 = scmp.eq.s32.totalorder %s23, 1
      %p167 = por %p165, %p166
      %p168 = scmp.ne.s32.totalorder %s159, %s160
      %p169 = scmp.eq.s32.totalorder %s23, 0
      %p170 = por %p168, %p169
      %p171 = scmp.ne.s32.totalorder %s159, %s160
      %p172 = scmp.eq.s32.totalorder %s24, 1
      %p173 = por %p171, %p172
      %p175 = scmp.ne.s32.totalorder %s160, %s174
      %p176 = scmp.eq.s32.totalorder %s24, 0
      %p177 = por %p175, %p176
      %s179 = sadd.s32 %s178, 1
      %p182 = scmp.eq.s32.totalorder %s18, 1
      %p183 = scmp.ne.s32.totalorder %s178, %s180
      %p184 = scmp.eq.s32.totalorder %s18, 0
      %p185 = por %p183, %p184
      %p186 = scmp.ne.s32.totalorder %s178, %s180
      %p187 = scmp.eq.s32.totalorder %s23, 1
      %p188 = por %p186, %p187
      %p189 = scmp.ne.s32.totalorder %s180, %s181
      %p190 = scmp.eq.s32.totalorder %s23, 0
      %p191 = por %p189, %p190
      %p192 = scmp.ne.s32.totalorder %s180, %s181
      %p193 = scmp.eq.s32.totalorder %s24, 1
      %p194 = por %p192, %p193
      %p196 = scmp.ne.s32.totalorder %s181, %s195
      %p197 = scmp.eq.s32.totalorder %s24, 0
      %p198 = por %p196, %p197
      %s200 = sadd.s32 %s199, 1
      %p203 = scmp.eq.s32.totalorder %s18, 1
      %p204 = scmp.ne.s32.totalorder %s199, %s201
      %p205 = scmp.eq.s32.totalorder %s18, 0
      %p206 = por %p204, %p205
      %p207 = scmp.ne.s32.totalorder %s199, %s201
      %p208 = scmp.eq.s32.totalorder %s23, 1
      %p209 = por %p207, %p208
      %p210 = scmp.ne.s32.totalorder %s201, %s202
      %p211 = scmp.eq.s32.totalorder %s23, 0
      %p212 = por %p210, %p211
      %p213 = scmp.ne.s32.totalorder %s201, %s202
      %p214 = scmp.eq.s32.totalorder %s24, 1
      %p215 = por %p213, %p214
      %p217 = scmp.ne.s32.totalorder %s202, %s216
      %p218 = scmp.eq.s32.totalorder %s24, 0
      %p219 = por %p217, %p218
      %s220 = ssub.s32 %s18, %s25
      %p221 = scmp.eq.s32.totalorder %s220, 0
      %s223 = sadd.s32 %s222, 1
      %s224 = scalar_select %p221, %s222, %s223
      %p227 = pneg %p221
      %p228 = scmp.eq.s32.totalorder %s18, 1
      %p229 = por %p227, %p228
      %p230 = scmp.ne.s32.totalorder %s222, %s225
      %p231 = scmp.eq.s32.totalorder %s18, 0
      %p232 = por %p230, %p231
      %p233 = scmp.ne.s32.totalorder %s222, %s225
      %p234 = scmp.eq.s32.totalorder %s23, 1
      %p235 = por %p233, %p234
      %p236 = scmp.ne.s32.totalorder %s225, %s226
      %p237 = scmp.eq.s32.totalorder %s23, 0
      %p238 = por %p236, %p237
      %p239 = scmp.ne.s32.totalorder %s225, %s226
      %p240 = scmp.eq.s32.totalorder %s24, 1
      %p241 = por %p239, %p240
      %p243 = scmp.ne.s32.totalorder %s226, %s242
      %p244 = scmp.eq.s32.totalorder %s24, 0
      %p245 = por %p243, %p244
      %p246 = scmp.le.s32.totalorder 1, %s18
      %p247 = scmp.lt.s32.totalorder %s18, 3
      %p248 = pnand %p246, %p247
      %p249 = pneg %p248
      // Predicated region
      $region9: #{tpu_custom_call.1} parent=5 // pred_check
        _
      $region10: #{tpu_custom_call.1} parent=5 // pred_check_branch
        %251 = sbr.rel (%p248) target = $region12
      $region11: #{tpu_custom_call.1} parent=5 // pred_region
        %s252 = ssub.s32 %s18, 1
        // Predicated region
        $region13: #{tpu_custom_call.1} parent=11 // pred_check
          %p253 = pneg %p65
        $region14: #{tpu_custom_call.1} parent=11 // pred_check_branch
          %255 = sbr.rel (%p253) target = $region16
        $region15: #{tpu_custom_call.1} parent=11 // pred_region
          _
        $region16: #{tpu_custom_call.1} parent=11 // pred_fallthru
          _
        // Predicated region
        $region17: #{tpu_custom_call.1} parent=11 // pred_check
          %p256 = pneg %p86
        $region18: #{tpu_custom_call.1} parent=11 // pred_check_branch
          %258 = sbr.rel (%p256) target = $region20
        $region19: #{tpu_custom_call.1} parent=11 // pred_region
          _
        $region20: #{tpu_custom_call.1} parent=11 // pred_fallthru
          _
        // Predicated region
        $region21: #{tpu_custom_call.1} parent=11 // pred_check
          %p259 = pneg %p107
        $region22: #{tpu_custom_call.1} parent=11 // pred_check_branch
          %261 = sbr.rel (%p259) target = $region24
        $region23: #{tpu_custom_call.1} parent=11 // pred_region
          _
        $region24: #{tpu_custom_call.1} parent=11 // pred_fallthru
          _
        // Predicated region
        $region25: #{tpu_custom_call.1} parent=11 // pred_check
          %p262 = pneg %p128
        $region26: #{tpu_custom_call.1} parent=11 // pred_check_branch
          %264 = sbr.rel (%p262) target = $region28
        $region27: #{tpu_custom_call.1} parent=11 // pred_region
          _
        $region28: #{tpu_custom_call.1} parent=11 // pred_fallthru
          _
        // Predicated region
        $region29: #{tpu_custom_call.1} parent=11 // pred_check
          %p265 = pneg %p149
        $region30: #{tpu_custom_call.1} parent=11 // pred_check_branch
          %267 = sbr.rel (%p265) target = $region32
        $region31: #{tpu_custom_call.1} parent=11 // pred_region
          _
        $region32: #{tpu_custom_call.1} parent=11 // pred_fallthru
          _
        // Predicated region
        $region33: #{tpu_custom_call.1} parent=11 // pred_check
          %p268 = pneg %p170
        $region34: #{tpu_custom_call.1} parent=11 // pred_check_branch
          %270 = sbr.rel (%p268) target = $region36
        $region35: #{tpu_custom_call.1} parent=11 // pred_region
          _
        $region36: #{tpu_custom_call.1} parent=11 // pred_fallthru
          _
        // Predicated region
        $region37: #{tpu_custom_call.1} parent=11 // pred_check
          %p271 = pneg %p191
        $region38: #{tpu_custom_call.1} parent=11 // pred_check_branch
          %273 = sbr.rel (%p271) target = $region40
        $region39: #{tpu_custom_call.1} parent=11 // pred_region
          _
        $region40: #{tpu_custom_call.1} parent=11 // pred_fallthru
          _
        // Predicated region
        $region41: #{tpu_custom_call.1} parent=11 // pred_check
          %p274 = pneg %p212
        $region42: #{tpu_custom_call.1} parent=11 // pred_check_branch
          %276 = sbr.rel (%p274) target = $region44
        $region43: #{tpu_custom_call.1} parent=11 // pred_region
          _
        $region44: #{tpu_custom_call.1} parent=11 // pred_fallthru
          _
      $region12: #{tpu_custom_call.1} parent=5 // pred_fallthru
        _
      %p277 = scmp.lt.s32.totalorder %s18, 2
      // Predicated region
      $region45: #{tpu_custom_call.1} parent=5 // pred_check
        %p278 = pneg %p277
      $region46: #{tpu_custom_call.1} parent=5 // pred_check_branch
        %280 = sbr.rel (%p278) target = $region48
      $region47: #{tpu_custom_call.1} parent=5 // pred_region
        // Predicated region
        $region49: #{tpu_custom_call.1} parent=47 // pred_check
          %p281 = pneg %p38
        $region50: #{tpu_custom_call.1} parent=47 // pred_check_branch
          %283 = sbr.rel (%p281) target = $region52
        $region51: #{tpu_custom_call.1} parent=47 // pred_region
          %s284 = smul.u32 32, %s18
          %p285 = scmp.lt.s32.totalorder %s284, 63
          %s286 = scalar_select %p285, %s284, 63
          %s287 = smul.addr %s286, 8
          %s288 = scalar_lea.vmem %s0, %s287
          %s289 = smul.u32 32, %s18
        $region52: #{tpu_custom_call.1} parent=47 // pred_fallthru
          _
      $region48: #{tpu_custom_call.1} parent=5 // pred_fallthru
        _
      %p290 = scmp.le.s32.totalorder 1, %s18
      %p291 = scmp.lt.s32.totalorder %s18, 3
      %p292 = pnand %p290, %p291
      %p293 = pneg %p292
      // Predicated region
      $region53: #{tpu_custom_call.1} parent=5 // pred_check
        _
      $region54: #{tpu_custom_call.1} parent=5 // pred_check_branch
        %295 = sbr.rel (%p292) target = $region56
      $region55: #{tpu_custom_call.1} parent=5 // pred_region
        %s296 = ssub.s32 %s18, 1
        %s297 = smul.u32 32, %s23
        %p298 = scmp.lt.s32.totalorder %s297, 63
        %s299 = scalar_select %p298, %s297, 63
        %s300 = smul.addr %s299, 8
        %s301 = scalar_lea.vmem %s0, %s300
        %p302 = pneg %p44
        %p303 = pneg %p41
        %p304 = pneg %p65
        %p305 = pneg %p62
        %p306 = pneg %p86
        %p307 = pneg %p83
        %p308 = pneg %p107
        %p309 = pneg %p104
        %p310 = pneg %p128
        %p311 = pneg %p125
        %p312 = pneg %p149
        %p313 = pneg %p146
        %p314 = pneg %p170
        %p315 = pneg %p167
        %p316 = pneg %p191
        %p317 = pneg %p188
        %p318 = pneg %p212
        %p319 = pneg %p209
        %p320 = pneg %p238
        %p321 = pneg %p235
        %s322 = sand.u32 %s225, 1
        %s323 = scalar_lea.sflag [#allocation3], %s322
        %s324 = sand.u32 %s225, 1
        %s325 = smul.addr %s324, 32
        %s326 = scalar_lea.vmem [#allocation2], %s325
        %s327 = smul.u32 32, %s23
        %p328 = scmp.lt.s32.totalorder %s327, 63
        %s329 = scalar_select %p328, %s327, 63
        %s330 = smul.addr %s329, 8
        %s331 = scalar_lea.vmem %s0, %s330
        %s332 = smul.u32 32, %s23
        %s333 = smul.u32 4, %s23
        %v334 = vld [vmem:[%s331] sm:$0xff]
        %v335 = vld [vmem:[%s331 + $0x8] sm:$0xff]
        %v336 = vld [vmem:[%s331 + $0x10] sm:$0xff]
        %v337 = vld [vmem:[%s331 + $0x18] sm:$0xff]
        %v338 = vld [vmem:[%s331 + $0x20] sm:$0xff]
        %v339 = vld [vmem:[%s331 + $0x28] sm:$0xff]
        %v340 = vld [vmem:[%s331 + $0x30] sm:$0xff]
        %v341 = vld [vmem:[%s331 + $0x38] sm:$0xff]
        %v342 = vld [vmem:[%s331 + $0x40] sm:$0xff]
        %v343 = vld [vmem:[%s331 + $0x48] sm:$0xff]
        %v344 = vld [vmem:[%s331 + $0x50] sm:$0xff]
        %v345 = vld [vmem:[%s331 + $0x58] sm:$0xff]
        %v346 = vld [vmem:[%s331 + $0x60] sm:$0xff]
        %v347 = vld [vmem:[%s331 + $0x68] sm:$0xff]
        %v348 = vld [vmem:[%s331 + $0x70] sm:$0xff]
        %v349 = vld [vmem:[%s331 + $0x78] sm:$0xff]
        %v350 = vld [vmem:[%s331 + $0x80] sm:$0xff]
        %v351 = vld [vmem:[%s331 + $0x88] sm:$0xff]
        %v352 = vld [vmem:[%s331 + $0x90] sm:$0xff]
        %v353 = vld [vmem:[%s331 + $0x98] sm:$0xff]
        %v354 = vld [vmem:[%s331 + $0xa0] sm:$0xff]
        %v355 = vld [vmem:[%s331 + $0xa8] sm:$0xff]
        %v356 = vld [vmem:[%s331 + $0xb0] sm:$0xff]
        %v357 = vld [vmem:[%s331 + $0xb8] sm:$0xff]
        %v358 = vld [vmem:[%s331 + $0xc0] sm:$0xff]
        %v359 = vld [vmem:[%s331 + $0xc8] sm:$0xff]
        %v360 = vld [vmem:[%s331 + $0xd0] sm:$0xff]
        %v361 = vld [vmem:[%s331 + $0xd8] sm:$0xff]
        %v362 = vld [vmem:[%s331 + $0xe0] sm:$0xff]
        %v363 = vld [vmem:[%s331 + $0xe8] sm:$0xff]
        %v364 = vld [vmem:[%s331 + $0xf0] sm:$0xff]
        %v365 = vld [vmem:[%s331 + $0xf8] sm:$0xff]
        %v366 = vlaneseq
        %v367 = vand.u32 %v366, 127
        %368 = vset.pattern.permute.xlu0 0
        %369 = vperm.xlu0 %368, %v334
        %v370 = vpop.permute.xlu0 %369
        %371 = vset.pattern.permute.xlu0 0
        %372 = vperm.xlu0 %371, %v335
        %v373 = vpop.permute.xlu0 %372
        %374 = vset.pattern.permute.xlu0 0
        %375 = vperm.xlu0 %374, %v336
        %v376 = vpop.permute.xlu0 %375
        %377 = vset.pattern.permute.xlu0 0
        %378 = vperm.xlu0 %377, %v337
        %v379 = vpop.permute.xlu0 %378
        %380 = vset.pattern.permute.xlu0 0
        %381 = vperm.xlu0 %380, %v338
        %v382 = vpop.permute.xlu0 %381
        %383 = vset.pattern.permute.xlu0 0
        %384 = vperm.xlu0 %383, %v339
        %v385 = vpop.permute.xlu0 %384
        %386 = vset.pattern.permute.xlu0 0
        %387 = vperm.xlu0 %386, %v340
        %v388 = vpop.permute.xlu0 %387
        %389 = vset.pattern.permute.xlu0 0
        %390 = vperm.xlu0 %389, %v341
        %v391 = vpop.permute.xlu0 %390
        %392 = vset.pattern.permute.xlu0 0
        %393 = vperm.xlu0 %392, %v342
        %v394 = vpop.permute.xlu0 %393
        %395 = vset.pattern.permute.xlu0 0
        %396 = vperm.xlu0 %395, %v343
        %v397 = vpop.permute.xlu0 %396
        %398 = vset.pattern.permute.xlu0 0
        %399 = vperm.xlu0 %398, %v344
        %v400 = vpop.permute.xlu0 %399
        %401 = vset.pattern.permute.xlu0 0
        %402 = vperm.xlu0 %401, %v345
        %v403 = vpop.permute.xlu0 %402
        %404 = vset.pattern.permute.xlu0 0
        %405 = vperm.xlu0 %404, %v346
        %v406 = vpop.permute.xlu0 %405
        %407 = vset.pattern.permute.xlu0 0
        %408 = vperm.xlu0 %407, %v347
        %v409 = vpop.permute.xlu0 %408
        %410 = vset.pattern.permute.xlu0 0
        %411 = vperm.xlu0 %410, %v348
        %v412 = vpop.permute.xlu0 %411
        %413 = vset.pattern.permute.xlu0 0
        %414 = vperm.xlu0 %413, %v349
        %v415 = vpop.permute.xlu0 %414
        %416 = vset.pattern.permute.xlu0 0
        %417 = vperm.xlu0 %416, %v350
        %v418 = vpop.permute.xlu0 %417
        %419 = vset.pattern.permute.xlu0 0
        %420 = vperm.xlu0 %419, %v351
        %v421 = vpop.permute.xlu0 %420
        %422 = vset.pattern.permute.xlu0 0
        %423 = vperm.xlu0 %422, %v352
        %v424 = vpop.permute.xlu0 %423
        %425 = vset.pattern.permute.xlu0 0
        %426 = vperm.xlu0 %425, %v353
        %v427 = vpop.permute.xlu0 %426
        %428 = vset.pattern.permute.xlu0 0
        %429 = vperm.xlu0 %428, %v354
        %v430 = vpop.permute.xlu0 %429
        %431 = vset.pattern.permute.xlu0 0
        %432 = vperm.xlu0 %431, %v355
        %v433 = vpop.permute.xlu0 %432
        %434 = vset.pattern.permute.xlu0 0
        %435 = vperm.xlu0 %434, %v356
        %v436 = vpop.permute.xlu0 %435
        %437 = vset.pattern.permute.xlu0 0
        %438 = vperm.xlu0 %437, %v357
        %v439 = vpop.permute.xlu0 %438
        %440 = vset.pattern.permute.xlu0 0
        %441 = vperm.xlu0 %440, %v358
        %v442 = vpop.permute.xlu0 %441
        %443 = vset.pattern.permute.xlu0 0
        %444 = vperm.xlu0 %443, %v359
        %v445 = vpop.permute.xlu0 %444
        %446 = vset.pattern.permute.xlu0 0
        %447 = vperm.xlu0 %446, %v360
        %v448 = vpop.permute.xlu0 %447
        %449 = vset.pattern.permute.xlu0 0
        %450 = vperm.xlu0 %449, %v361
        %v451 = vpop.permute.xlu0 %450
        %452 = vset.pattern.permute.xlu0 0
        %453 = vperm.xlu0 %452, %v362
        %v454 = vpop.permute.xlu0 %453
        %455 = vset.pattern.permute.xlu0 0
        %456 = vperm.xlu0 %455, %v363
        %v457 = vpop.permute.xlu0 %456
        %458 = vset.pattern.permute.xlu0 0
        %459 = vperm.xlu0 %458, %v364
        %v460 = vpop.permute.xlu0 %459
        %461 = vset.pattern.permute.xlu0 0
        %462 = vperm.xlu0 %461, %v365
        %v463 = vpop.permute.xlu0 %462
        %vm464 = vcmp.eq.s32.totalorder %v370, %v367
        %vm465 = vcmp.eq.s32.totalorder %v373, %v367
        %vm466 = vcmp.eq.s32.totalorder %v376, %v367
        %vm467 = vcmp.eq.s32.totalorder %v379, %v367
        %vm468 = vcmp.eq.s32.totalorder %v382, %v367
        %vm469 = vcmp.eq.s32.totalorder %v385, %v367
        %vm470 = vcmp.eq.s32.totalorder %v388, %v367
        %vm471 = vcmp.eq.s32.totalorder %v391, %v367
        %vm472 = vcmp.eq.s32.totalorder %v394, %v367
        %vm473 = vcmp.eq.s32.totalorder %v397, %v367
        %vm474 = vcmp.eq.s32.totalorder %v400, %v367
        %vm475 = vcmp.eq.s32.totalorder %v403, %v367
        %vm476 = vcmp.eq.s32.totalorder %v406, %v367
        %vm477 = vcmp.eq.s32.totalorder %v409, %v367
        %vm478 = vcmp.eq.s32.totalorder %v412, %v367
        %vm479 = vcmp.eq.s32.totalorder %v415, %v367
        %vm480 = vcmp.eq.s32.totalorder %v418, %v367
        %vm481 = vcmp.eq.s32.totalorder %v421, %v367
        %vm482 = vcmp.eq.s32.totalorder %v424, %v367
        %vm483 = vcmp.eq.s32.totalorder %v427, %v367
        %vm484 = vcmp.eq.s32.totalorder %v430, %v367
        %vm485 = vcmp.eq.s32.totalorder %v433, %v367
        %vm486 = vcmp.eq.s32.totalorder %v436, %v367
        %vm487 = vcmp.eq.s32.totalorder %v439, %v367
        %vm488 = vcmp.eq.s32.totalorder %v442, %v367
        %vm489 = vcmp.eq.s32.totalorder %v445, %v367
        %vm490 = vcmp.eq.s32.totalorder %v448, %v367
        %vm491 = vcmp.eq.s32.totalorder %v451, %v367
        %vm492 = vcmp.eq.s32.totalorder %v454, %v367
        %vm493 = vcmp.eq.s32.totalorder %v457, %v367
        %vm494 = vcmp.eq.s32.totalorder %v460, %v367
        %vm495 = vcmp.eq.s32.totalorder %v463, %v367
        %v496 = vsel %vm464, 1, 0
        %v497 = vsel %vm465, 1, 0
        %v498 = vsel %vm466, 1, 0
        %v499 = vsel %vm467, 1, 0
        %v500 = vsel %vm468, 1, 0
        %v501 = vsel %vm469, 1, 0
        %v502 = vsel %vm470, 1, 0
        %v503 = vsel %vm471, 1, 0
        %v504 = vsel %vm472, 1, 0
        %v505 = vsel %vm473, 1, 0
        %v506 = vsel %vm474, 1, 0
        %v507 = vsel %vm475, 1, 0
        %v508 = vsel %vm476, 1, 0
        %v509 = vsel %vm477, 1, 0
        %v510 = vsel %vm478, 1, 0
        %v511 = vsel %vm479, 1, 0
        %v512 = vsel %vm480, 1, 0
        %v513 = vsel %vm481, 1, 0
        %v514 = vsel %vm482, 1, 0
        %v515 = vsel %vm483, 1, 0
        %v516 = vsel %vm484, 1, 0
        %v517 = vsel %vm485, 1, 0
        %v518 = vsel %vm486, 1, 0
        %v519 = vsel %vm487, 1, 0
        %v520 = vsel %vm488, 1, 0
        %v521 = vsel %vm489, 1, 0
        %v522 = vsel %vm490, 1, 0
        %v523 = vsel %vm491, 1, 0
        %v524 = vsel %vm492, 1, 0
        %v525 = vsel %vm493, 1, 0
        %v526 = vsel %vm494, 1, 0
        %v527 = vsel %vm495, 1, 0
        %v528 = vcvt.s32.f32 %v496
        %v529 = vcvt.s32.f32 %v497
        %v530 = vcvt.s32.f32 %v498
        %v531 = vcvt.s32.f32 %v499
        %v532 = vcvt.s32.f32 %v500
        %v533 = vcvt.s32.f32 %v501
        %v534 = vcvt.s32.f32 %v502
        %v535 = vcvt.s32.f32 %v503
        %v536 = vcvt.s32.f32 %v504
        %v537 = vcvt.s32.f32 %v505
        %v538 = vcvt.s32.f32 %v506
        %v539 = vcvt.s32.f32 %v507
        %v540 = vcvt.s32.f32 %v508
        %v541 = vcvt.s32.f32 %v509
        %v542 = vcvt.s32.f32 %v510
        %v543 = vcvt.s32.f32 %v511
        %v544 = vcvt.s32.f32 %v512
        %v545 = vcvt.s32.f32 %v513
        %v546 = vcvt.s32.f32 %v514
        %v547 = vcvt.s32.f32 %v515
        %v548 = vcvt.s32.f32 %v516
        %v549 = vcvt.s32.f32 %v517
        %v550 = vcvt.s32.f32 %v518
        %v551 = vcvt.s32.f32 %v519
        %v552 = vcvt.s32.f32 %v520
        %v553 = vcvt.s32.f32 %v521
        %v554 = vcvt.s32.f32 %v522
        %v555 = vcvt.s32.f32 %v523
        %v556 = vcvt.s32.f32 %v524
        %v557 = vcvt.s32.f32 %v525
        %v558 = vcvt.s32.f32 %v526
        %v559 = vcvt.s32.f32 %v527
        %v560 = vld [vmem:[%s1] sm:$0xff]
        %v561 = vld [vmem:[%s1 + $0x8] sm:$0xff]
        %v562 = vld [vmem:[%s1 + $0x10] sm:$0xff]
        %v563 = vld [vmem:[%s1 + $0x18] sm:$0xff]
        %v564 = vld [vmem:[%s1 + $0x20] sm:$0xff]
        %v565 = vld [vmem:[%s1 + $0x28] sm:$0xff]
        %v566 = vld [vmem:[%s1 + $0x30] sm:$0xff]
        %v567 = vld [vmem:[%s1 + $0x38] sm:$0xff]
        %vm568 = vcmask 261120
        %v570 = vsel %vm568, %v528, 0
        %v573 = vsel %vm568, %v529, 0
        %v576 = vsel %vm568, %v530, 0
        %v579 = vsel %vm568, %v531, 0
        %v582 = vsel %vm568, %v532, 0
        %v585 = vsel %vm568, %v533, 0
        %v588 = vsel %vm568, %v534, 0
        %v591 = vsel %vm568, %v535, 0
        %v594 = vsel %vm568, %v536, 0
        %v597 = vsel %vm568, %v537, 0
        %v600 = vsel %vm568, %v538, 0
        %v603 = vsel %vm568, %v539, 0
        %v606 = vsel %vm568, %v540, 0
        %v609 = vsel %vm568, %v541, 0
        %v612 = vsel %vm568, %v542, 0
        %v615 = vsel %vm568, %v543, 0
        %v618 = vsel %vm568, %v544, 0
        %v621 = vsel %vm568, %v545, 0
        %v624 = vsel %vm568, %v546, 0
        %v627 = vsel %vm568, %v547, 0
        %v630 = vsel %vm568, %v548, 0
        %v633 = vsel %vm568, %v549, 0
        %v636 = vsel %vm568, %v550, 0
        %v639 = vsel %vm568, %v551, 0
        %v642 = vsel %vm568, %v552, 0
        %v645 = vsel %vm568, %v553, 0
        %v648 = vsel %vm568, %v554, 0
        %v651 = vsel %vm568, %v555, 0
        %v654 = vsel %vm568, %v556, 0
        %v657 = vsel %vm568, %v557, 0
        %v660 = vsel %vm568, %v558, 0
        %v663 = vsel %vm568, %v559, 0
        %665 = vmatpush.msra.mxu0 0.0
        %666 = vmatpush.msra.mxu0 0.0
        %667 = vmatpush.msra.mxu0 0.0
        %668 = vmatpush.msra.mxu0 0.0
        %669 = vmatpush.msra.mxu0 0.0
        %670 = vmatpush.msra.mxu0 0.0
        %671 = vmatpush.msra.mxu0 0.0
        %672 = vmatpush.msra.mxu0 0.0
        %673 = vmatpush.msra.mxu0 0.0
        %674 = vmatpush.msra.mxu0 0.0
        %675 = vmatpush.msra.mxu0 0.0
        %676 = vmatpush.msra.mxu0 0.0
        %677 = vmatpush.msra.mxu0 %v566
        %678 = vmatpush.msra.mxu0 %v564
        %679 = vmatpush.msra.mxu0 %v562
        %680 = vmatpush.msra.mxu0 %v560
        %681 = vmatmul.f32.gmra.mxu0 %v570
        %v682 = vpop.f32.mrf.mxu0
        %v683 = vadd.f32 0.0, %v682
        %684 = vmatmul.f32.gmra.mxu0 %v573
        %v685 = vpop.f32.mrf.mxu0
        %v686 = vadd.f32 0.0, %v685
        %687 = vmatmul.f32.gmra.mxu0 %v576
        %v688 = vpop.f32.mrf.mxu0
        %v689 = vadd.f32 0.0, %v688
        %690 = vmatmul.f32.gmra.mxu0 %v579
        %v691 = vpop.f32.mrf.mxu0
        %v692 = vadd.f32 0.0, %v691
        %693 = vmatmul.f32.gmra.mxu0 %v582
        %v694 = vpop.f32.mrf.mxu0
        %v695 = vadd.f32 0.0, %v694
        %696 = vmatmul.f32.gmra.mxu0 %v585
        %v697 = vpop.f32.mrf.mxu0
        %v698 = vadd.f32 0.0, %v697
        %699 = vmatmul.f32.gmra.mxu0 %v588
        %v700 = vpop.f32.mrf.mxu0
        %v701 = vadd.f32 0.0, %v700
        %702 = vmatmul.f32.gmra.mxu0 %v591
        %v703 = vpop.f32.mrf.mxu0
        %v704 = vadd.f32 0.0, %v703
        %705 = vmatmul.f32.gmra.mxu0 %v594
        %v706 = vpop.f32.mrf.mxu0
        %v707 = vadd.f32 0.0, %v706
        %708 = vmatmul.f32.gmra.mxu0 %v597
        %v709 = vpop.f32.mrf.mxu0
        %v710 = vadd.f32 0.0, %v709
        %711 = vmatmul.f32.gmra.mxu0 %v600
        %v712 = vpop.f32.mrf.mxu0
        %v713 = vadd.f32 0.0, %v712
        %714 = vmatmul.f32.gmra.mxu0 %v603
        %v715 = vpop.f32.mrf.mxu0
        %v716 = vadd.f32 0.0, %v715
        %717 = vmatmul.f32.gmra.mxu0 %v606
        %v718 = vpop.f32.mrf.mxu0
        %v719 = vadd.f32 0.0, %v718
        %720 = vmatmul.f32.gmra.mxu0 %v609
        %v721 = vpop.f32.mrf.mxu0
        %v722 = vadd.f32 0.0, %v721
        %723 = vmatmul.f32.gmra.mxu0 %v612
        %v724 = vpop.f32.mrf.mxu0
        %v725 = vadd.f32 0.0, %v724
        %726 = vmatmul.f32.gmra.mxu0 %v615
        %v727 = vpop.f32.mrf.mxu0
        %v728 = vadd.f32 0.0, %v727
        %729 = vmatmul.f32.gmra.mxu0 %v618
        %v730 = vpop.f32.mrf.mxu0
        %v731 = vadd.f32 0.0, %v730
        %732 = vmatmul.f32.gmra.mxu0 %v621
        %v733 = vpop.f32.mrf.mxu0
        %v734 = vadd.f32 0.0, %v733
        %735 = vmatmul.f32.gmra.mxu0 %v624
        %v736 = vpop.f32.mrf.mxu0
        %v737 = vadd.f32 0.0, %v736
        %738 = vmatmul.f32.gmra.mxu0 %v627
        %v739 = vpop.f32.mrf.mxu0
        %v740 = vadd.f32 0.0, %v739
        %741 = vmatmul.f32.gmra.mxu0 %v630
        %v742 = vpop.f32.mrf.mxu0
        %v743 = vadd.f32 0.0, %v742
        %744 = vmatmul.f32.gmra.mxu0 %v633
        %v745 = vpop.f32.mrf.mxu0
        %v746 = vadd.f32 0.0, %v745
        %747 = vmatmul.f32.gmra.mxu0 %v636
        %v748 = vpop.f32.mrf.mxu0
        %v749 = vadd.f32 0.0, %v748
        %750 = vmatmul.f32.gmra.mxu0 %v639
        %v751 = vpop.f32.mrf.mxu0
        %v752 = vadd.f32 0.0, %v751
        %753 = vmatmul.f32.gmra.mxu0 %v642
        %v754 = vpop.f32.mrf.mxu0
        %v755 = vadd.f32 0.0, %v754
        %756 = vmatmul.f32.gmra.mxu0 %v645
        %v757 = vpop.f32.mrf.mxu0
        %v758 = vadd.f32 0.0, %v757
        %759 = vmatmul.f32.gmra.mxu0 %v648
        %v760 = vpop.f32.mrf.mxu0
        %v761 = vadd.f32 0.0, %v760
        %762 = vmatmul.f32.gmra.mxu0 %v651
        %v763 = vpop.f32.mrf.mxu0
        %v764 = vadd.f32 0.0, %v763
        %765 = vmatmul.f32.gmra.mxu0 %v654
        %v766 = vpop.f32.mrf.mxu0
        %v767 = vadd.f32 0.0, %v766
        %768 = vmatmul.f32.gmra.mxu0 %v657
        %v769 = vpop.f32.mrf.mxu0
        %v770 = vadd.f32 0.0, %v769
        %771 = vmatmul.f32.gmra.mxu0 %v660
        %v772 = vpop.f32.mrf.mxu0
        %v773 = vadd.f32 0.0, %v772
        %774 = vmatmul.f32.gmra.mxu0 %v663
        %v775 = vpop.f32.mrf.mxu0
        %v776 = vadd.f32 0.0, %v775
        %777 = vdwg.mxu0
        %778 = vmatpush.msra.mxu0 0.0
        %779 = vmatpush.msra.mxu0 0.0
        %780 = vmatpush.msra.mxu0 0.0
        %781 = vmatpush.msra.mxu0 0.0
        %782 = vmatpush.msra.mxu0 0.0
        %783 = vmatpush.msra.mxu0 0.0
        %784 = vmatpush.msra.mxu0 0.0
        %785 = vmatpush.msra.mxu0 0.0
        %786 = vmatpush.msra.mxu0 0.0
        %787 = vmatpush.msra.mxu0 0.0
        %788 = vmatpush.msra.mxu0 0.0
        %789 = vmatpush.msra.mxu0 0.0
        %790 = vmatpush.msra.mxu0 %v567
        %791 = vmatpush.msra.mxu0 %v565
        %792 = vmatpush.msra.mxu0 %v563
        %793 = vmatpush.msra.mxu0 %v561
        %794 = vmatmul.f32.gmra.mxu0 %v570
        %v795 = vpop.f32.mrf.mxu0
        %v796 = vadd.f32 0.0, %v795
        %797 = vmatmul.f32.gmra.mxu0 %v573
        %v798 = vpop.f32.mrf.mxu0
        %v799 = vadd.f32 0.0, %v798
        %800 = vmatmul.f32.gmra.mxu0 %v576
        %v801 = vpop.f32.mrf.mxu0
        %v802 = vadd.f32 0.0, %v801
        %803 = vmatmul.f32.gmra.mxu0 %v579
        %v804 = vpop.f32.mrf.mxu0
        %v805 = vadd.f32 0.0, %v804
        %806 = vmatmul.f32.gmra.mxu0 %v582
        %v807 = vpop.f32.mrf.mxu0
        %v808 = vadd.f32 0.0, %v807
        %809 = vmatmul.f32.gmra.mxu0 %v585
        %v810 = vpop.f32.mrf.mxu0
        %v811 = vadd.f32 0.0, %v810
        %812 = vmatmul.f32.gmra.mxu0 %v588
        %v813 = vpop.f32.mrf.mxu0
        %v814 = vadd.f32 0.0, %v813
        %815 = vmatmul.f32.gmra.mxu0 %v591
        %v816 = vpop.f32.mrf.mxu0
        %v817 = vadd.f32 0.0, %v816
        %818 = vmatmul.f32.gmra.mxu0 %v594
        %v819 = vpop.f32.mrf.mxu0
        %v820 = vadd.f32 0.0, %v819
        %821 = vmatmul.f32.gmra.mxu0 %v597
        %v822 = vpop.f32.mrf.mxu0
        %v823 = vadd.f32 0.0, %v822
        %824 = vmatmul.f32.gmra.mxu0 %v600
        %v825 = vpop.f32.mrf.mxu0
        %v826 = vadd.f32 0.0, %v825
        %827 = vmatmul.f32.gmra.mxu0 %v603
        %v828 = vpop.f32.mrf.mxu0
        %v829 = vadd.f32 0.0, %v828
        %830 = vmatmul.f32.gmra.mxu0 %v606
        %v831 = vpop.f32.mrf.mxu0
        %v832 = vadd.f32 0.0, %v831
        %833 = vmatmul.f32.gmra.mxu0 %v609
        %v834 = vpop.f32.mrf.mxu0
        %v835 = vadd.f32 0.0, %v834
        %836 = vmatmul.f32.gmra.mxu0 %v612
        %v837 = vpop.f32.mrf.mxu0
        %v838 = vadd.f32 0.0, %v837
        %839 = vmatmul.f32.gmra.mxu0 %v615
        %v840 = vpop.f32.mrf.mxu0
        %v841 = vadd.f32 0.0, %v840
        %842 = vmatmul.f32.gmra.mxu0 %v618
        %v843 = vpop.f32.mrf.mxu0
        %v844 = vadd.f32 0.0, %v843
        %845 = vmatmul.f32.gmra.mxu0 %v621
        %v846 = vpop.f32.mrf.mxu0
        %v847 = vadd.f32 0.0, %v846
        %848 = vmatmul.f32.gmra.mxu0 %v624
        %v849 = vpop.f32.mrf.mxu0
        %v850 = vadd.f32 0.0, %v849
        %851 = vmatmul.f32.gmra.mxu0 %v627
        %v852 = vpop.f32.mrf.mxu0
        %v853 = vadd.f32 0.0, %v852
        %854 = vmatmul.f32.gmra.mxu0 %v630
        %v855 = vpop.f32.mrf.mxu0
        %v856 = vadd.f32 0.0, %v855
        %857 = vmatmul.f32.gmra.mxu0 %v633
        %v858 = vpop.f32.mrf.mxu0
        %v859 = vadd.f32 0.0, %v858
        %860 = vmatmul.f32.gmra.mxu0 %v636
        %v861 = vpop.f32.mrf.mxu0
        %v862 = vadd.f32 0.0, %v861
        %863 = vmatmul.f32.gmra.mxu0 %v639
        %v864 = vpop.f32.mrf.mxu0
        %v865 = vadd.f32 0.0, %v864
        %866 = vmatmul.f32.gmra.mxu0 %v642
        %v867 = vpop.f32.mrf.mxu0
        %v868 = vadd.f32 0.0, %v867
        %869 = vmatmul.f32.gmra.mxu0 %v645
        %v870 = vpop.f32.mrf.mxu0
        %v871 = vadd.f32 0.0, %v870
        %872 = vmatmul.f32.gmra.mxu0 %v648
        %v873 = vpop.f32.mrf.mxu0
        %v874 = vadd.f32 0.0, %v873
        %875 = vmatmul.f32.gmra.mxu0 %v651
        %v876 = vpop.f32.mrf.mxu0
        %v877 = vadd.f32 0.0, %v876
        %878 = vmatmul.f32.gmra.mxu0 %v654
        %v879 = vpop.f32.mrf.mxu0
        %v880 = vadd.f32 0.0, %v879
        %881 = vmatmul.f32.gmra.mxu0 %v657
        %v882 = vpop.f32.mrf.mxu0
        %v883 = vadd.f32 0.0, %v882
        %884 = vmatmul.f32.gmra.mxu0 %v660
        %v885 = vpop.f32.mrf.mxu0
        %v886 = vadd.f32 0.0, %v885
        %887 = vmatmul.f32.gmra.mxu0 %v663
        %v888 = vpop.f32.mrf.mxu0
        %v889 = vadd.f32 0.0, %v888
        %890 = vdwg.mxu0
        %v923 = vrot.slane %v796, 1
        %v924 = vrot.slane %v799, 1
        %v925 = vrot.slane %v802, 1
        %v926 = vrot.slane %v805, 1
        %v927 = vrot.slane %v808, 1
        %v928 = vrot.slane %v811, 1
        %v929 = vrot.slane %v814, 1
        %v930 = vrot.slane %v817, 1
        %v931 = vrot.slane %v820, 1
        %v932 = vrot.slane %v823, 1
        %v933 = vrot.slane %v826, 1
        %v934 = vrot.slane %v829, 1
        %v935 = vrot.slane %v832, 1
        %v936 = vrot.slane %v835, 1
        %v937 = vrot.slane %v838, 1
        %v938 = vrot.slane %v841, 1
        %v939 = vrot.slane %v844, 1
        %v940 = vrot.slane %v847, 1
        %v941 = vrot.slane %v850, 1
        %v942 = vrot.slane %v853, 1
        %v943 = vrot.slane %v856, 1
        %v944 = vrot.slane %v859, 1
        %v945 = vrot.slane %v862, 1
        %v946 = vrot.slane %v865, 1
        %v947 = vrot.slane %v868, 1
        %v948 = vrot.slane %v871, 1
        %v949 = vrot.slane %v874, 1
        %v950 = vrot.slane %v877, 1
        %v951 = vrot.slane %v880, 1
        %v952 = vrot.slane %v883, 1
        %v953 = vrot.slane %v886, 1
        %v954 = vrot.slane %v889, 1
        %v987 = vadd.f32 %v683, %v923
        %v988 = vadd.f32 %v686, %v924
        %v989 = vadd.f32 %v689, %v925
        %v990 = vadd.f32 %v692, %v926
        %v991 = vadd.f32 %v695, %v927
        %v992 = vadd.f32 %v698, %v928
        %v993 = vadd.f32 %v701, %v929
        %v994 = vadd.f32 %v704, %v930
        %v995 = vadd.f32 %v707, %v931
        %v996 = vadd.f32 %v710, %v932
        %v997 = vadd.f32 %v713, %v933
        %v998 = vadd.f32 %v716, %v934
        %v999 = vadd.f32 %v719, %v935
        %v1000 = vadd.f32 %v722, %v936
        %v1001 = vadd.f32 %v725, %v937
        %v1002 = vadd.f32 %v728, %v938
        %v1003 = vadd.f32 %v731, %v939
        %v1004 = vadd.f32 %v734, %v940
        %v1005 = vadd.f32 %v737, %v941
        %v1006 = vadd.f32 %v740, %v942
        %v1007 = vadd.f32 %v743, %v943
        %v1008 = vadd.f32 %v746, %v944
        %v1009 = vadd.f32 %v749, %v945
        %v1010 = vadd.f32 %v752, %v946
        %v1011 = vadd.f32 %v755, %v947
        %v1012 = vadd.f32 %v758, %v948
        %v1013 = vadd.f32 %v761, %v949
        %v1014 = vadd.f32 %v764, %v950
        %v1015 = vadd.f32 %v767, %v951
        %v1016 = vadd.f32 %v770, %v952
        %v1017 = vadd.f32 %v773, %v953
        %v1018 = vadd.f32 %v776, %v954
        %v1019 = vld [vmem:[%s2] sm:$0x1]
        %v1021 = vperm.slane %v1019, 0
        %v1023 = vadd.f32 %v987, %v1021
        %v1024 = vadd.f32 %v988, %v1021
        %v1025 = vadd.f32 %v989, %v1021
        %v1026 = vadd.f32 %v990, %v1021
        %v1027 = vadd.f32 %v991, %v1021
        %v1028 = vadd.f32 %v992, %v1021
        %v1029 = vadd.f32 %v993, %v1021
        %v1030 = vadd.f32 %v994, %v1021
        %v1031 = vadd.f32 %v995, %v1021
        %v1032 = vadd.f32 %v996, %v1021
        %v1033 = vadd.f32 %v997, %v1021
        %v1034 = vadd.f32 %v998, %v1021
        %v1035 = vadd.f32 %v999, %v1021
        %v1036 = vadd.f32 %v1000, %v1021
        %v1037 = vadd.f32 %v1001, %v1021
        %v1038 = vadd.f32 %v1002, %v1021
        %v1039 = vadd.f32 %v1003, %v1021
        %v1040 = vadd.f32 %v1004, %v1021
        %v1041 = vadd.f32 %v1005, %v1021
        %v1042 = vadd.f32 %v1006, %v1021
        %v1043 = vadd.f32 %v1007, %v1021
        %v1044 = vadd.f32 %v1008, %v1021
        %v1045 = vadd.f32 %v1009, %v1021
        %v1046 = vadd.f32 %v1010, %v1021
        %v1047 = vadd.f32 %v1011, %v1021
        %v1048 = vadd.f32 %v1012, %v1021
        %v1049 = vadd.f32 %v1013, %v1021
        %v1050 = vadd.f32 %v1014, %v1021
        %v1051 = vadd.f32 %v1015, %v1021
        %v1052 = vadd.f32 %v1016, %v1021
        %v1053 = vadd.f32 %v1017, %v1021
        %v1054 = vadd.f32 %v1018, %v1021
        %v1055 = vmax.f32 %v1023, 0.0
        %v1056 = vmax.f32 %v1024, 0.0
        %v1057 = vmax.f32 %v1025, 0.0
        %v1058 = vmax.f32 %v1026, 0.0
        %v1059 = vmax.f32 %v1027, 0.0
        %v1060 = vmax.f32 %v1028, 0.0
        %v1061 = vmax.f32 %v1029, 0.0
        %v1062 = vmax.f32 %v1030, 0.0
        %v1063 = vmax.f32 %v1031, 0.0
        %v1064 = vmax.f32 %v1032, 0.0
        %v1065 = vmax.f32 %v1033, 0.0
        %v1066 = vmax.f32 %v1034, 0.0
        %v1067 = vmax.f32 %v1035, 0.0
        %v1068 = vmax.f32 %v1036, 0.0
        %v1069 = vmax.f32 %v1037, 0.0
        %v1070 = vmax.f32 %v1038, 0.0
        %v1071 = vmax.f32 %v1039, 0.0
        %v1072 = vmax.f32 %v1040, 0.0
        %v1073 = vmax.f32 %v1041, 0.0
        %v1074 = vmax.f32 %v1042, 0.0
        %v1075 = vmax.f32 %v1043, 0.0
        %v1076 = vmax.f32 %v1044, 0.0
        %v1077 = vmax.f32 %v1045, 0.0
        %v1078 = vmax.f32 %v1046, 0.0
        %v1079 = vmax.f32 %v1047, 0.0
        %v1080 = vmax.f32 %v1048, 0.0
        %v1081 = vmax.f32 %v1049, 0.0
        %v1082 = vmax.f32 %v1050, 0.0
        %v1083 = vmax.f32 %v1051, 0.0
        %v1084 = vmax.f32 %v1052, 0.0
        %v1085 = vmax.f32 %v1053, 0.0
        %v1086 = vmax.f32 %v1054, 0.0
        %v1119 = vrot.slane %v1055, 1
        %v1120 = vrot.slane %v1056, 1
        %v1121 = vrot.slane %v1057, 1
        %v1122 = vrot.slane %v1058, 1
        %v1123 = vrot.slane %v1059, 1
        %v1124 = vrot.slane %v1060, 1
        %v1125 = vrot.slane %v1061, 1
        %v1126 = vrot.slane %v1062, 1
        %v1127 = vrot.slane %v1063, 1
        %v1128 = vrot.slane %v1064, 1
        %v1129 = vrot.slane %v1065, 1
        %v1130 = vrot.slane %v1066, 1
        %v1131 = vrot.slane %v1067, 1
        %v1132 = vrot.slane %v1068, 1
        %v1133 = vrot.slane %v1069, 1
        %v1134 = vrot.slane %v1070, 1
        %v1135 = vrot.slane %v1071, 1
        %v1136 = vrot.slane %v1072, 1
        %v1137 = vrot.slane %v1073, 1
        %v1138 = vrot.slane %v1074, 1
        %v1139 = vrot.slane %v1075, 1
        %v1140 = vrot.slane %v1076, 1
        %v1141 = vrot.slane %v1077, 1
        %v1142 = vrot.slane %v1078, 1
        %v1143 = vrot.slane %v1079, 1
        %v1144 = vrot.slane %v1080, 1
        %v1145 = vrot.slane %v1081, 1
        %v1146 = vrot.slane %v1082, 1
        %v1147 = vrot.slane %v1083, 1
        %v1148 = vrot.slane %v1084, 1
        %v1149 = vrot.slane %v1085, 1
        %v1150 = vrot.slane %v1086, 1
        %v1151 = vrot.slane %v1119, 6
        %v1152 = vrot.slane %v1120, 6
        %v1153 = vrot.slane %v1121, 6
        %v1154 = vrot.slane %v1122, 6
        %v1155 = vrot.slane %v1123, 6
        %v1156 = vrot.slane %v1124, 6
        %v1157 = vrot.slane %v1125, 6
        %v1158 = vrot.slane %v1126, 6
        %v1159 = vrot.slane %v1127, 6
        %v1160 = vrot.slane %v1128, 6
        %v1161 = vrot.slane %v1129, 6
        %v1162 = vrot.slane %v1130, 6
        %v1163 = vrot.slane %v1131, 6
        %v1164 = vrot.slane %v1132, 6
        %v1165 = vrot.slane %v1133, 6
        %v1166 = vrot.slane %v1134, 6
        %v1167 = vrot.slane %v1135, 6
        %v1168 = vrot.slane %v1136, 6
        %v1169 = vrot.slane %v1137, 6
        %v1170 = vrot.slane %v1138, 6
        %v1171 = vrot.slane %v1139, 6
        %v1172 = vrot.slane %v1140, 6
        %v1173 = vrot.slane %v1141, 6
        %v1174 = vrot.slane %v1142, 6
        %v1175 = vrot.slane %v1143, 6
        %v1176 = vrot.slane %v1144, 6
        %v1177 = vrot.slane %v1145, 6
        %v1178 = vrot.slane %v1146, 6
        %v1179 = vrot.slane %v1147, 6
        %v1180 = vrot.slane %v1148, 6
        %v1181 = vrot.slane %v1149, 6
        %v1182 = vrot.slane %v1150, 6
        %vm1183 = vcmask 1041408
        %v1184 = vsel %vm1183, %v1055, %v1151
        %vm1185 = vcmask 1043458
        %v1186 = vsel %vm1185, %v1055, %v1151
        %v1187 = vrot.slane %v1186, 2
        %vm1188 = vcmask 1045508
        %v1189 = vsel %vm1188, %v1055, %v1151
        %v1190 = vrot.slane %v1189, 4
        %v1191 = vsel %vm1183, %v1056, %v1152
        %v1192 = vsel %vm1185, %v1056, %v1152
        %v1193 = vrot.slane %v1192, 2
        %v1194 = vsel %vm1188, %v1056, %v1152
        %v1195 = vrot.slane %v1194, 4
        %v1196 = vsel %vm1183, %v1057, %v1153
        %v1197 = vsel %vm1185, %v1057, %v1153
        %v1198 = vrot.slane %v1197, 2
        %v1199 = vsel %vm1188, %v1057, %v1153
        %v1200 = vrot.slane %v1199, 4
        %v1201 = vsel %vm1183, %v1058, %v1154
        %v1202 = vsel %vm1185, %v1058, %v1154
        %v1203 = vrot.slane %v1202, 2
        %v1204 = vsel %vm1188, %v1058, %v1154
        %v1205 = vrot.slane %v1204, 4
        %v1206 = vsel %vm1183, %v1059, %v1155
        %v1207 = vsel %vm1185, %v1059, %v1155
        %v1208 = vrot.slane %v1207, 2
        %v1209 = vsel %vm1188, %v1059, %v1155
        %v1210 = vrot.slane %v1209, 4
        %v1211 = vsel %vm1183, %v1060, %v1156
        %v1212 = vsel %vm1185, %v1060, %v1156
        %v1213 = vrot.slane %v1212, 2
        %v1214 = vsel %vm1188, %v1060, %v1156
        %v1215 = vrot.slane %v1214, 4
        %v1216 = vsel %vm1183, %v1061, %v1157
        %v1217 = vsel %vm1185, %v1061, %v1157
        %v1218 = vrot.slane %v1217, 2
        %v1219 = vsel %vm1188, %v1061, %v1157
        %v1220 = vrot.slane %v1219, 4
        %v1221 = vsel %vm1183, %v1062, %v1158
        %v1222 = vsel %vm1185, %v1062, %v1158
        %v1223 = vrot.slane %v1222, 2
        %v1224 = vsel %vm1188, %v1062, %v1158
        %v1225 = vrot.slane %v1224, 4
        %v1226 = vsel %vm1183, %v1063, %v1159
        %v1227 = vsel %vm1185, %v1063, %v1159
        %v1228 = vrot.slane %v1227, 2
        %v1229 = vsel %vm1188, %v1063, %v1159
        %v1230 = vrot.slane %v1229, 4
        %v1231 = vsel %vm1183, %v1064, %v1160
        %v1232 = vsel %vm1185, %v1064, %v1160
        %v1233 = vrot.slane %v1232, 2
        %v1234 = vsel %vm1188, %v1064, %v1160
        %v1235 = vrot.slane %v1234, 4
        %v1236 = vsel %vm1183, %v1065, %v1161
        %v1237 = vsel %vm1185, %v1065, %v1161
        %v1238 = vrot.slane %v1237, 2
        %v1239 = vsel %vm1188, %v1065, %v1161
        %v1240 = vrot.slane %v1239, 4
        %v1241 = vsel %vm1183, %v1066, %v1162
        %v1242 = vsel %vm1185, %v1066, %v1162
        %v1243 = vrot.slane %v1242, 2
        %v1244 = vsel %vm1188, %v1066, %v1162
        %v1245 = vrot.slane %v1244, 4
        %v1246 = vsel %vm1183, %v1067, %v1163
        %v1247 = vsel %vm1185, %v1067, %v1163
        %v1248 = vrot.slane %v1247, 2
        %v1249 = vsel %vm1188, %v1067, %v1163
        %v1250 = vrot.slane %v1249, 4
        %v1251 = vsel %vm1183, %v1068, %v1164
        %v1252 = vsel %vm1185, %v1068, %v1164
        %v1253 = vrot.slane %v1252, 2
        %v1254 = vsel %vm1188, %v1068, %v1164
        %v1255 = vrot.slane %v1254, 4
        %v1256 = vsel %vm1183, %v1069, %v1165
        %v1257 = vsel %vm1185, %v1069, %v1165
        %v1258 = vrot.slane %v1257, 2
        %v1259 = vsel %vm1188, %v1069, %v1165
        %v1260 = vrot.slane %v1259, 4
        %v1261 = vsel %vm1183, %v1070, %v1166
        %v1262 = vsel %vm1185, %v1070, %v1166
        %v1263 = vrot.slane %v1262, 2
        %v1264 = vsel %vm1188, %v1070, %v1166
        %v1265 = vrot.slane %v1264, 4
        %v1266 = vsel %vm1183, %v1071, %v1167
        %v1267 = vsel %vm1185, %v1071, %v1167
        %v1268 = vrot.slane %v1267, 2
        %v1269 = vsel %vm1188, %v1071, %v1167
        %v1270 = vrot.slane %v1269, 4
        %v1271 = vsel %vm1183, %v1072, %v1168
        %v1272 = vsel %vm1185, %v1072, %v1168
        %v1273 = vrot.slane %v1272, 2
        %v1274 = vsel %vm1188, %v1072, %v1168
        %v1275 = vrot.slane %v1274, 4
        %v1276 = vsel %vm1183, %v1073, %v1169
        %v1277 = vsel %vm1185, %v1073, %v1169
        %v1278 = vrot.slane %v1277, 2
        %v1279 = vsel %vm1188, %v1073, %v1169
        %v1280 = vrot.slane %v1279, 4
        %v1281 = vsel %vm1183, %v1074, %v1170
        %v1282 = vsel %vm1185, %v1074, %v1170
        %v1283 = vrot.slane %v1282, 2
        %v1284 = vsel %vm1188, %v1074, %v1170
        %v1285 = vrot.slane %v1284, 4
        %v1286 = vsel %vm1183, %v1075, %v1171
        %v1287 = vsel %vm1185, %v1075, %v1171
        %v1288 = vrot.slane %v1287, 2
        %v1289 = vsel %vm1188, %v1075, %v1171
        %v1290 = vrot.slane %v1289, 4
        %v1291 = vsel %vm1183, %v1076, %v1172
        %v1292 = vsel %vm1185, %v1076, %v1172
        %v1293 = vrot.slane %v1292, 2
        %v1294 = vsel %vm1188, %v1076, %v1172
        %v1295 = vrot.slane %v1294, 4
        %v1296 = vsel %vm1183, %v1077, %v1173
        %v1297 = vsel %vm1185, %v1077, %v1173
        %v1298 = vrot.slane %v1297, 2
        %v1299 = vsel %vm1188, %v1077, %v1173
        %v1300 = vrot.slane %v1299, 4
        %v1301 = vsel %vm1183, %v1078, %v1174
        %v1302 = vsel %vm1185, %v1078, %v1174
        %v1303 = vrot.slane %v1302, 2
        %v1304 = vsel %vm1188, %v1078, %v1174
        %v1305 = vrot.slane %v1304, 4
        %v1306 = vsel %vm1183, %v1079, %v1175
        %v1307 = vsel %vm1185, %v1079, %v1175
        %v1308 = vrot.slane %v1307, 2
        %v1309 = vsel %vm1188, %v1079, %v1175
        %v1310 = vrot.slane %v1309, 4
        %v1311 = vsel %vm1183, %v1080, %v1176
        %v1312 = vsel %vm1185, %v1080, %v1176
        %v1313 = vrot.slane %v1312, 2
        %v1314 = vsel %vm1188, %v1080, %v1176
        %v1315 = vrot.slane %v1314, 4
        %v1316 = vsel %vm1183, %v1081, %v1177
        %v1317 = vsel %vm1185, %v1081, %v1177
        %v1318 = vrot.slane %v1317, 2
        %v1319 = vsel %vm1188, %v1081, %v1177
        %v1320 = vrot.slane %v1319, 4
        %v1321 = vsel %vm1183, %v1082, %v1178
        %v1322 = vsel %vm1185, %v1082, %v1178
        %v1323 = vrot.slane %v1322, 2
        %v1324 = vsel %vm1188, %v1082, %v1178
        %v1325 = vrot.slane %v1324, 4
        %v1326 = vsel %vm1183, %v1083, %v1179
        %v1327 = vsel %vm1185, %v1083, %v1179
        %v1328 = vrot.slane %v1327, 2
        %v1329 = vsel %vm1188, %v1083, %v1179
        %v1330 = vrot.slane %v1329, 4
        %v1331 = vsel %vm1183, %v1084, %v1180
        %v1332 = vsel %vm1185, %v1084, %v1180
        %v1333 = vrot.slane %v1332, 2
        %v1334 = vsel %vm1188, %v1084, %v1180
        %v1335 = vrot.slane %v1334, 4
        %v1336 = vsel %vm1183, %v1085, %v1181
        %v1337 = vsel %vm1185, %v1085, %v1181
        %v1338 = vrot.slane %v1337, 2
        %v1339 = vsel %vm1188, %v1085, %v1181
        %v1340 = vrot.slane %v1339, 4
        %v1341 = vsel %vm1183, %v1086, %v1182
        %v1342 = vsel %vm1185, %v1086, %v1182
        %v1343 = vrot.slane %v1342, 2
        %v1344 = vsel %vm1188, %v1086, %v1182
        %v1345 = vrot.slane %v1344, 4
        %1346 = vst [vmem:[#allocation1] ss:$4 sm:$0xff] %v1184
        %s1347 = scalar_lea.vmem [#allocation1], 1
        %1348 = vst [vmem:[%s1347] ss:$4 sm:$0xff] %v1187
        %s1349 = scalar_lea.vmem [#allocation1], 2
        %1350 = vst [vmem:[%s1349] ss:$4 sm:$0xff] %v1190
        %s1351 = scalar_lea.vmem [#allocation1], 3
        %1352 = vst [vmem:[%s1351] ss:$4 sm:$0xff] %v1191
        %s1353 = scalar_lea.vmem [#allocation1], 32
        %1354 = vst [vmem:[%s1353] ss:$4 sm:$0xff] %v1193
        %s1355 = scalar_lea.vmem [#allocation1], 33
        %1356 = vst [vmem:[%s1355] ss:$4 sm:$0xff] %v1195
        %s1357 = scalar_lea.vmem [#allocation1], 34
        %1358 = vst [vmem:[%s1357] ss:$4 sm:$0xff] %v1196
        %s1359 = scalar_lea.vmem [#allocation1], 35
        %1360 = vst [vmem:[%s1359] ss:$4 sm:$0xff] %v1198
        %v1361 = vld.sshfl [vmem:[#allocation1] sm:$0xff pattern:$0x73625140]
        %v1362 = vld.sshfl [vmem:[#allocation1 + $0x8] sm:$0xff pattern:$0x73625140]
        %v1363 = vld.sshfl [vmem:[#allocation1 + $0x20] sm:$0xff pattern:$0x73625140]
        %v1364 = vld.sshfl [vmem:[#allocation1 + $0x28] sm:$0xff pattern:$0x73625140]
        %1365 = vst [vmem:[#allocation1] ss:$4 sm:$0xff] %v1200
        %1366 = vst [vmem:[%s1347] ss:$4 sm:$0xff] %v1201
        %1367 = vst [vmem:[%s1349] ss:$4 sm:$0xff] %v1203
        %1368 = vst [vmem:[%s1351] ss:$4 sm:$0xff] %v1205
        %1369 = vst [vmem:[%s1353] ss:$4 sm:$0xff] %v1206
        %1370 = vst [vmem:[%s1355] ss:$4 sm:$0xff] %v1208
        %1371 = vst [vmem:[%s1357] ss:$4 sm:$0xff] %v1210
        %1372 = vst [vmem:[%s1359] ss:$4 sm:$0xff] %v1211
        %v1373 = vld.sshfl [vmem:[#allocation1] sm:$0xff pattern:$0x73625140]
        %v1374 = vld.sshfl [vmem:[#allocation1 + $0x8] sm:$0xff pattern:$0x73625140]
        %v1375 = vld.sshfl [vmem:[#allocation1 + $0x20] sm:$0xff pattern:$0x73625140]
        %v1376 = vld.sshfl [vmem:[#allocation1 + $0x28] sm:$0xff pattern:$0x73625140]
        %1377 = vst [vmem:[#allocation1] ss:$4 sm:$0xff] %v1213
        %1378 = vst [vmem:[%s1347] ss:$4 sm:$0xff] %v1215
        %1379 = vst [vmem:[%s1349] ss:$4 sm:$0xff] %v1216
        %1380 = vst [vmem:[%s1351] ss:$4 sm:$0xff] %v1218
        %1381 = vst [vmem:[%s1353] ss:$4 sm:$0xff] %v1220
        %1382 = vst [vmem:[%s1355] ss:$4 sm:$0xff] %v1221
        %1383 = vst [vmem:[%s1357] ss:$4 sm:$0xff] %v1223
        %1384 = vst [vmem:[%s1359] ss:$4 sm:$0xff] %v1225
        %v1385 = vld.sshfl [vmem:[#allocation1] sm:$0xff pattern:$0x73625140]
        %v1386 = vld.sshfl [vmem:[#allocation1 + $0x8] sm:$0xff pattern:$0x73625140]
        %v1387 = vld.sshfl [vmem:[#allocation1 + $0x20] sm:$0xff pattern:$0x73625140]
        %v1388 = vld.sshfl [vmem:[#allocation1 + $0x28] sm:$0xff pattern:$0x73625140]
        %1389 = vst [vmem:[#allocation1] ss:$4 sm:$0xff] %v1226
        %1390 = vst [vmem:[%s1347] ss:$4 sm:$0xff] %v1228
        %1391 = vst [vmem:[%s1349] ss:$4 sm:$0xff] %v1230
        %1392 = vst [vmem:[%s1351] ss:$4 sm:$0xff] %v1231
        %1393 = vst [vmem:[%s1353] ss:$4 sm:$0xff] %v1233
        %1394 = vst [vmem:[%s1355] ss:$4 sm:$0xff] %v1235
        %1395 = vst [vmem:[%s1357] ss:$4 sm:$0xff] %v1236
        %1396 = vst [vmem:[%s1359] ss:$4 sm:$0xff] %v1238
        %v1397 = vld.sshfl [vmem:[#allocation1] sm:$0xff pattern:$0x73625140]
        %v1398 = vld.sshfl [vmem:[#allocation1 + $0x8] sm:$0xff pattern:$0x73625140]
        %v1399 = vld.sshfl [vmem:[#allocation1 + $0x20] sm:$0xff pattern:$0x73625140]
        %v1400 = vld.sshfl [vmem:[#allocation1 + $0x28] sm:$0xff pattern:$0x73625140]
        %1401 = vst [vmem:[#allocation1] ss:$4 sm:$0xff] %v1240
        %1402 = vst [vmem:[%s1347] ss:$4 sm:$0xff] %v1241
        %1403 = vst [vmem:[%s1349] ss:$4 sm:$0xff] %v1243
        %1404 = vst [vmem:[%s1351] ss:$4 sm:$0xff] %v1245
        %1405 = vst [vmem:[%s1353] ss:$4 sm:$0xff] %v1246
        %1406 = vst [vmem:[%s1355] ss:$4 sm:$0xff] %v1248
        %1407 = vst [vmem:[%s1357] ss:$4 sm:$0xff] %v1250
        %1408 = vst [vmem:[%s1359] ss:$4 sm:$0xff] %v1251
        %v1409 = vld.sshfl [vmem:[#allocation1] sm:$0xff pattern:$0x73625140]
        %v1410 = vld.sshfl [vmem:[#allocation1 + $0x8] sm:$0xff pattern:$0x73625140]
        %v1411 = vld.sshfl [vmem:[#allocation1 + $0x20] sm:$0xff pattern:$0x73625140]
        %v1412 = vld.sshfl [vmem:[#allocation1 + $0x28] sm:$0xff pattern:$0x73625140]
        %1413 = vst [vmem:[#allocation1] ss:$4 sm:$0xff] %v1253
        %1414 = vst [vmem:[%s1347] ss:$4 sm:$0xff] %v1255
        %1415 = vst [vmem:[%s1349] ss:$4 sm:$0xff] %v1256
        %1416 = vst [vmem:[%s1351] ss:$4 sm:$0xff] %v1258
        %1417 = vst [vmem:[%s1353] ss:$4 sm:$0xff] %v1260
        %1418 = vst [vmem:[%s1355] ss:$4 sm:$0xff] %v1261
        %1419 = vst [vmem:[%s1357] ss:$4 sm:$0xff] %v1263
        %1420 = vst [vmem:[%s1359] ss:$4 sm:$0xff] %v1265
        %v1421 = vld.sshfl [vmem:[#allocation1] sm:$0xff pattern:$0x73625140]
        %v1422 = vld.sshfl [vmem:[#allocation1 + $0x8] sm:$0xff pattern:$0x73625140]
        %v1423 = vld.sshfl [vmem:[#allocation1 + $0x20] sm:$0xff pattern:$0x73625140]
        %v1424 = vld.sshfl [vmem:[#allocation1 + $0x28] sm:$0xff pattern:$0x73625140]
        %1425 = vst [vmem:[#allocation1] ss:$4 sm:$0xff] %v1266
        %1426 = vst [vmem:[%s1347] ss:$4 sm:$0xff] %v1268
        %1427 = vst [vmem:[%s1349] ss:$4 sm:$0xff] %v1270
        %1428 = vst [vmem:[%s1351] ss:$4 sm:$0xff] %v1271
        %1429 = vst [vmem:[%s1353] ss:$4 sm:$0xff] %v1273
        %1430 = vst [vmem:[%s1355] ss:$4 sm:$0xff] %v1275
        %1431 = vst [vmem:[%s1357] ss:$4 sm:$0xff] %v1276
        %1432 = vst [vmem:[%s1359] ss:$4 sm:$0xff] %v1278
        %v1433 = vld.sshfl [vmem:[#allocation1] sm:$0xff pattern:$0x73625140]
        %v1434 = vld.sshfl [vmem:[#allocation1 + $0x8] sm:$0xff pattern:$0x73625140]
        %v1435 = vld.sshfl [vmem:[#allocation1 + $0x20] sm:$0xff pattern:$0x73625140]
        %v1436 = vld.sshfl [vmem:[#allocation1 + $0x28] sm:$0xff pattern:$0x73625140]
        %1437 = vst [vmem:[#allocation1] ss:$4 sm:$0xff] %v1280
        %1438 = vst [vmem:[%s1347] ss:$4 sm:$0xff] %v1281
        %1439 = vst [vmem:[%s1349] ss:$4 sm:$0xff] %v1283
        %1440 = vst [vmem:[%s1351] ss:$4 sm:$0xff] %v1285
        %1441 = vst [vmem:[%s1353] ss:$4 sm:$0xff] %v1286
        %1442 = vst [vmem:[%s1355] ss:$4 sm:$0xff] %v1288
        %1443 = vst [vmem:[%s1357] ss:$4 sm:$0xff] %v1290
        %1444 = vst [vmem:[%s1359] ss:$4 sm:$0xff] %v1291
        %v1445 = vld.sshfl [vmem:[#allocation1] sm:$0xff pattern:$0x73625140]
        %v1446 = vld.sshfl [vmem:[#allocation1 + $0x8] sm:$0xff pattern:$0x73625140]
        %v1447 = vld.sshfl [vmem:[#allocation1 + $0x20] sm:$0xff pattern:$0x73625140]
        %v1448 = vld.sshfl [vmem:[#allocation1 + $0x28] sm:$0xff pattern:$0x73625140]
        %1449 = vst [vmem:[#allocation1] ss:$4 sm:$0xff] %v1293
        %1450 = vst [vmem:[%s1347] ss:$4 sm:$0xff] %v1295
        %1451 = vst [vmem:[%s1349] ss:$4 sm:$0xff] %v1296
        %1452 = vst [vmem:[%s1351] ss:$4 sm:$0xff] %v1298
        %1453 = vst [vmem:[%s1353] ss:$4 sm:$0xff] %v1300
        %1454 = vst [vmem:[%s1355] ss:$4 sm:$0xff] %v1301
        %1455 = vst [vmem:[%s1357] ss:$4 sm:$0xff] %v1303
        %1456 = vst [vmem:[%s1359] ss:$4 sm:$0xff] %v1305
        %v1457 = vld.sshfl [vmem:[#allocation1] sm:$0xff pattern:$0x73625140]
        %v1458 = vld.sshfl [vmem:[#allocation1 + $0x8] sm:$0xff pattern:$0x73625140]
        %v1459 = vld.sshfl [vmem:[#allocation1 + $0x20] sm:$0xff pattern:$0x73625140]
        %v1460 = vld.sshfl [vmem:[#allocation1 + $0x28] sm:$0xff pattern:$0x73625140]
        %1461 = vst [vmem:[#allocation1] ss:$4 sm:$0xff] %v1306
        %1462 = vst [vmem:[%s1347] ss:$4 sm:$0xff] %v1308
        %1463 = vst [vmem:[%s1349] ss:$4 sm:$0xff] %v1310
        %1464 = vst [vmem:[%s1351] ss:$4 sm:$0xff] %v1311
        %1465 = vst [vmem:[%s1353] ss:$4 sm:$0xff] %v1313
        %1466 = vst [vmem:[%s1355] ss:$4 sm:$0xff] %v1315
        %1467 = vst [vmem:[%s1357] ss:$4 sm:$0xff] %v1316
        %1468 = vst [vmem:[%s1359] ss:$4 sm:$0xff] %v1318
        %v1469 = vld.sshfl [vmem:[#allocation1] sm:$0xff pattern:$0x73625140]
        %v1470 = vld.sshfl [vmem:[#allocation1 + $0x8] sm:$0xff pattern:$0x73625140]
        %v1471 = vld.sshfl [vmem:[#allocation1 + $0x20] sm:$0xff pattern:$0x73625140]
        %v1472 = vld.sshfl [vmem:[#allocation1 + $0x28] sm:$0xff pattern:$0x73625140]
        %1473 = vst [vmem:[#allocation1] ss:$4 sm:$0xff] %v1320
        %1474 = vst [vmem:[%s1347] ss:$4 sm:$0xff] %v1321
        %1475 = vst [vmem:[%s1349] ss:$4 sm:$0xff] %v1323
        %1476 = vst [vmem:[%s1351] ss:$4 sm:$0xff] %v1325
        %1477 = vst [vmem:[%s1353] ss:$4 sm:$0xff] %v1326
        %1478 = vst [vmem:[%s1355] ss:$4 sm:$0xff] %v1328
        %1479 = vst [vmem:[%s1357] ss:$4 sm:$0xff] %v1330
        %1480 = vst [vmem:[%s1359] ss:$4 sm:$0xff] %v1331
        %v1481 = vld.sshfl [vmem:[#allocation1] sm:$0xff pattern:$0x73625140]
        %v1482 = vld.sshfl [vmem:[#allocation1 + $0x8] sm:$0xff pattern:$0x73625140]
        %v1483 = vld.sshfl [vmem:[#allocation1 + $0x20] sm:$0xff pattern:$0x73625140]
        %v1484 = vld.sshfl [vmem:[#allocation1 + $0x28] sm:$0xff pattern:$0x73625140]
        %1485 = vst [vmem:[#allocation1] ss:$4 sm:$0xff] %v1333
        %1486 = vst [vmem:[%s1347] ss:$4 sm:$0xff] %v1335
        %1487 = vst [vmem:[%s1349] ss:$4 sm:$0xff] %v1336
        %1488 = vst [vmem:[%s1351] ss:$4 sm:$0xff] %v1338
        %1489 = vst [vmem:[%s1353] ss:$4 sm:$0xff] %v1340
        %1490 = vst [vmem:[%s1355] ss:$4 sm:$0xff] %v1341
        %1491 = vst [vmem:[%s1357] ss:$4 sm:$0xff] %v1343
        %1492 = vst [vmem:[%s1359] ss:$4 sm:$0xff] %v1345
        %v1493 = vld.sshfl [vmem:[#allocation1] sm:$0xff pattern:$0x73625140]
        %v1494 = vld.sshfl [vmem:[#allocation1 + $0x8] sm:$0xff pattern:$0x73625140]
        %v1495 = vld.sshfl [vmem:[#allocation1 + $0x20] sm:$0xff pattern:$0x73625140]
        %v1496 = vld.sshfl [vmem:[#allocation1 + $0x28] sm:$0xff pattern:$0x73625140]
        %v1545 = vpack.c.bf16 %v1363, %v1361
        %v1546 = vpack.c.bf16 %v1364, %v1362
        %v1547 = vpack.c.bf16 %v1375, %v1373
        %v1548 = vpack.c.bf16 %v1376, %v1374
        %v1549 = vpack.c.bf16 %v1387, %v1385
        %v1550 = vpack.c.bf16 %v1388, %v1386
        %v1551 = vpack.c.bf16 %v1399, %v1397
        %v1552 = vpack.c.bf16 %v1400, %v1398
        %v1553 = vpack.c.bf16 %v1411, %v1409
        %v1554 = vpack.c.bf16 %v1412, %v1410
        %v1555 = vpack.c.bf16 %v1423, %v1421
        %v1556 = vpack.c.bf16 %v1424, %v1422
        %v1557 = vpack.c.bf16 %v1435, %v1433
        %v1558 = vpack.c.bf16 %v1436, %v1434
        %v1559 = vpack.c.bf16 %v1447, %v1445
        %v1560 = vpack.c.bf16 %v1448, %v1446
        %v1561 = vpack.c.bf16 %v1459, %v1457
        %v1562 = vpack.c.bf16 %v1460, %v1458
        %v1563 = vpack.c.bf16 %v1471, %v1469
        %v1564 = vpack.c.bf16 %v1472, %v1470
        %v1565 = vpack.c.bf16 %v1483, %v1481
        %v1566 = vpack.c.bf16 %v1484, %v1482
        %v1567 = vpack.c.bf16 %v1495, %v1493
        %v1568 = vpack.c.bf16 %v1496, %v1494
        %v1569 = vld [vmem:[%s3] sm:$0xf]
        %v1570 = vld [vmem:[%s3 + $0x4] sm:$0xf]
        %v1571 = vld [vmem:[%s3 + $0x8] sm:$0xf]
        %v1572 = vld [vmem:[%s3 + $0xc] sm:$0xf]
        %v1573 = vld [vmem:[%s3 + $0x10] sm:$0xf]
        %v1574 = vld [vmem:[%s3 + $0x14] sm:$0xf]
        %v1575 = vld [vmem:[%s3 + $0x18] sm:$0xf]
        %v1576 = vld [vmem:[%s3 + $0x1c] sm:$0xf]
        %v1577 = vld [vmem:[%s3 + $0x20] sm:$0xf]
        %v1578 = vld [vmem:[%s3 + $0x24] sm:$0xf]
        %v1579 = vld [vmem:[%s3 + $0x28] sm:$0xf]
        %v1580 = vld [vmem:[%s3 + $0x2c] sm:$0xf]
        %v1581 = vld [vmem:[%s3 + $0x30] sm:$0xf]
        %v1582 = vld [vmem:[%s3 + $0x34] sm:$0xf]
        %v1583 = vld [vmem:[%s3 + $0x38] sm:$0xf]
        %v1584 = vld [vmem:[%s3 + $0x3c] sm:$0xf]
        %v1585 = vld [vmem:[%s3 + $0x40] sm:$0xf]
        %v1586 = vld [vmem:[%s3 + $0x44] sm:$0xf]
        %v1587 = vld [vmem:[%s3 + $0x48] sm:$0xf]
        %v1588 = vld [vmem:[%s3 + $0x4c] sm:$0xf]
        %v1589 = vld [vmem:[%s3 + $0x50] sm:$0xf]
        %v1590 = vld [vmem:[%s3 + $0x54] sm:$0xf]
        %v1591 = vld [vmem:[%s3 + $0x58] sm:$0xf]
        %v1592 = vld [vmem:[%s3 + $0x5c] sm:$0xf]
        %v1593 = vld [vmem:[%s3 + $0x60] sm:$0xf]
        %v1594 = vld [vmem:[%s3 + $0x64] sm:$0xf]
        %v1595 = vld [vmem:[%s3 + $0x68] sm:$0xf]
        %v1596 = vld [vmem:[%s3 + $0x6c] sm:$0xf]
        %v1597 = vld [vmem:[%s3 + $0x70] sm:$0xf]
        %v1598 = vld [vmem:[%s3 + $0x74] sm:$0xf]
        %v1599 = vld [vmem:[%s3 + $0x78] sm:$0xf]
        %v1600 = vld [vmem:[%s3 + $0x7c] sm:$0xf]
        %v1601 = vld [vmem:[%s4] sm:$0x1]
        %v1603 = vperm.slane %v1601, 0
        %v1637 = vunpack.c.l.b16 %v1569
        %v1638 = vunpack.c.l.b16 %v1570
        %v1639 = vunpack.c.l.b16 %v1571
        %v1640 = vunpack.c.l.b16 %v1572
        %v1641 = vunpack.c.l.b16 %v1573
        %v1642 = vunpack.c.l.b16 %v1574
        %v1643 = vunpack.c.l.b16 %v1575
        %v1644 = vunpack.c.l.b16 %v1576
        %v1645 = vunpack.c.l.b16 %v1577
        %v1646 = vunpack.c.l.b16 %v1578
        %v1647 = vunpack.c.l.b16 %v1579
        %v1648 = vunpack.c.l.b16 %v1580
        %v1649 = vunpack.c.l.b16 %v1581
        %v1650 = vunpack.c.l.b16 %v1582
        %v1651 = vunpack.c.l.b16 %v1583
        %v1652 = vunpack.c.l.b16 %v1584
        %v1653 = vunpack.c.l.b16 %v1585
        %v1654 = vunpack.c.l.b16 %v1586
        %v1655 = vunpack.c.l.b16 %v1587
        %v1656 = vunpack.c.l.b16 %v1588
        %v1657 = vunpack.c.l.b16 %v1589
        %v1658 = vunpack.c.l.b16 %v1590
        %v1659 = vunpack.c.l.b16 %v1591
        %v1660 = vunpack.c.l.b16 %v1592
        %v1661 = vunpack.c.l.b16 %v1593
        %v1662 = vunpack.c.l.b16 %v1594
        %v1663 = vunpack.c.l.b16 %v1595
        %v1664 = vunpack.c.l.b16 %v1596
        %v1665 = vunpack.c.l.b16 %v1597
        %v1666 = vunpack.c.l.b16 %v1598
        %v1667 = vunpack.c.l.b16 %v1599
        %v1668 = vunpack.c.l.b16 %v1600
        %v1669 = vpack.c.b16 %v1638, %v1637
        %v1670 = vpack.c.b16 %v1640, %v1639
        %v1671 = vpack.c.b16 %v1642, %v1641
        %v1672 = vpack.c.b16 %v1644, %v1643
        %v1673 = vpack.c.b16 %v1646, %v1645
        %v1674 = vpack.c.b16 %v1648, %v1647
        %v1675 = vpack.c.b16 %v1650, %v1649
        %v1676 = vpack.c.b16 %v1652, %v1651
        %v1677 = vpack.c.b16 %v1654, %v1653
        %v1678 = vpack.c.b16 %v1656, %v1655
        %v1679 = vpack.c.b16 %v1658, %v1657
        %v1680 = vpack.c.b16 %v1660, %v1659
        %v1681 = vpack.c.b16 %v1662, %v1661
        %v1682 = vpack.c.b16 %v1664, %v1663
        %v1683 = vpack.c.b16 %v1666, %v1665
        %v1684 = vpack.c.b16 %v1668, %v1667
        %1701 = vmatpush.bf16.msra.mxu0 %v1676
        %1702 = vmatpush.bf16.msra.mxu0 %v1675
        %1703 = vmatpush.bf16.msra.mxu0 %v1674
        %1704 = vmatpush.bf16.msra.mxu0 %v1673
        %1705 = vmatpush.bf16.msra.mxu0 %v1672
        %1706 = vmatpush.bf16.msra.mxu0 %v1671
        %1707 = vmatpush.bf16.msra.mxu0 %v1670
        %1708 = vmatpush.bf16.msra.mxu0 %v1669
        %1709 = vmatmul.bf16.gmra.mxu0 %v1545
        %v1710 = vpop.f32.mrf.mxu0
        %v1711 = vadd.f32 %v1603, %v1710
        %v1712 = vpop.f32.mrf.mxu0
        %v1713 = vadd.f32 %v1603, %v1712
        %1714 = vmatmul.bf16.gmra.mxu0 %v1547
        %v1715 = vpop.f32.mrf.mxu0
        %v1716 = vadd.f32 %v1603, %v1715
        %v1717 = vpop.f32.mrf.mxu0
        %v1718 = vadd.f32 %v1603, %v1717
        %1719 = vmatmul.bf16.gmra.mxu0 %v1549
        %v1720 = vpop.f32.mrf.mxu0
        %v1721 = vadd.f32 %v1603, %v1720
        %v1722 = vpop.f32.mrf.mxu0
        %v1723 = vadd.f32 %v1603, %v1722
        %1724 = vmatmul.bf16.gmra.mxu0 %v1551
        %v1725 = vpop.f32.mrf.mxu0
        %v1726 = vadd.f32 %v1603, %v1725
        %v1727 = vpop.f32.mrf.mxu0
        %v1728 = vadd.f32 %v1603, %v1727
        %1729 = vmatmul.bf16.gmra.mxu0 %v1553
        %v1730 = vpop.f32.mrf.mxu0
        %v1731 = vadd.f32 %v1603, %v1730
        %v1732 = vpop.f32.mrf.mxu0
        %v1733 = vadd.f32 %v1603, %v1732
        %1734 = vmatmul.bf16.gmra.mxu0 %v1555
        %v1735 = vpop.f32.mrf.mxu0
        %v1736 = vadd.f32 %v1603, %v1735
        %v1737 = vpop.f32.mrf.mxu0
        %v1738 = vadd.f32 %v1603, %v1737
        %1739 = vmatmul.bf16.gmra.mxu0 %v1557
        %v1740 = vpop.f32.mrf.mxu0
        %v1741 = vadd.f32 %v1603, %v1740
        %v1742 = vpop.f32.mrf.mxu0
        %v1743 = vadd.f32 %v1603, %v1742
        %1744 = vmatmul.bf16.gmra.mxu0 %v1559
        %v1745 = vpop.f32.mrf.mxu0
        %v1746 = vadd.f32 %v1603, %v1745
        %v1747 = vpop.f32.mrf.mxu0
        %v1748 = vadd.f32 %v1603, %v1747
        %1749 = vmatmul.bf16.gmra.mxu0 %v1561
        %v1750 = vpop.f32.mrf.mxu0
        %v1751 = vadd.f32 %v1603, %v1750
        %v1752 = vpop.f32.mrf.mxu0
        %v1753 = vadd.f32 %v1603, %v1752
        %1754 = vmatmul.bf16.gmra.mxu0 %v1563
        %v1755 = vpop.f32.mrf.mxu0
        %v1756 = vadd.f32 %v1603, %v1755
        %v1757 = vpop.f32.mrf.mxu0
        %v1758 = vadd.f32 %v1603, %v1757
        %1759 = vmatmul.bf16.gmra.mxu0 %v1565
        %v1760 = vpop.f32.mrf.mxu0
        %v1761 = vadd.f32 %v1603, %v1760
        %v1762 = vpop.f32.mrf.mxu0
        %v1763 = vadd.f32 %v1603, %v1762
        %1764 = vmatmul.bf16.gmra.mxu0 %v1567
        %v1765 = vpop.f32.mrf.mxu0
        %v1766 = vadd.f32 %v1603, %v1765
        %v1767 = vpop.f32.mrf.mxu0
        %v1768 = vadd.f32 %v1603, %v1767
        %1769 = vdwg.mxu0
        %1770 = vmatpush.bf16.msra.mxu0 %v1684
        %1771 = vmatpush.bf16.msra.mxu0 %v1683
        %1772 = vmatpush.bf16.msra.mxu0 %v1682
        %1773 = vmatpush.bf16.msra.mxu0 %v1681
        %1774 = vmatpush.bf16.msra.mxu0 %v1680
        %1775 = vmatpush.bf16.msra.mxu0 %v1679
        %1776 = vmatpush.bf16.msra.mxu0 %v1678
        %1777 = vmatpush.bf16.msra.mxu0 %v1677
        %1778 = vmatmul.bf16.gmra.mxu0 %v1546
        %v1779 = vpop.f32.mrf.mxu0
        %v1780 = vadd.f32 %v1711, %v1779
        %v1781 = vpop.f32.mrf.mxu0
        %v1782 = vadd.f32 %v1713, %v1781
        %1783 = vmatmul.bf16.gmra.mxu0 %v1548
        %v1784 = vpop.f32.mrf.mxu0
        %v1785 = vadd.f32 %v1716, %v1784
        %v1786 = vpop.f32.mrf.mxu0
        %v1787 = vadd.f32 %v1718, %v1786
        %1788 = vmatmul.bf16.gmra.mxu0 %v1550
        %v1789 = vpop.f32.mrf.mxu0
        %v1790 = vadd.f32 %v1721, %v1789
        %v1791 = vpop.f32.mrf.mxu0
        %v1792 = vadd.f32 %v1723, %v1791
        %1793 = vmatmul.bf16.gmra.mxu0 %v1552
        %v1794 = vpop.f32.mrf.mxu0
        %v1795 = vadd.f32 %v1726, %v1794
        %v1796 = vpop.f32.mrf.mxu0
        %v1797 = vadd.f32 %v1728, %v1796
        %1798 = vmatmul.bf16.gmra.mxu0 %v1554
        %v1799 = vpop.f32.mrf.mxu0
        %v1800 = vadd.f32 %v1731, %v1799
        %v1801 = vpop.f32.mrf.mxu0
        %v1802 = vadd.f32 %v1733, %v1801
        %1803 = vmatmul.bf16.gmra.mxu0 %v1556
        %v1804 = vpop.f32.mrf.mxu0
        %v1805 = vadd.f32 %v1736, %v1804
        %v1806 = vpop.f32.mrf.mxu0
        %v1807 = vadd.f32 %v1738, %v1806
        %1808 = vmatmul.bf16.gmra.mxu0 %v1558
        %v1809 = vpop.f32.mrf.mxu0
        %v1810 = vadd.f32 %v1741, %v1809
        %v1811 = vpop.f32.mrf.mxu0
        %v1812 = vadd.f32 %v1743, %v1811
        %1813 = vmatmul.bf16.gmra.mxu0 %v1560
        %v1814 = vpop.f32.mrf.mxu0
        %v1815 = vadd.f32 %v1746, %v1814
        %v1816 = vpop.f32.mrf.mxu0
        %v1817 = vadd.f32 %v1748, %v1816
        %1818 = vmatmul.bf16.gmra.mxu0 %v1562
        %v1819 = vpop.f32.mrf.mxu0
        %v1820 = vadd.f32 %v1751, %v1819
        %v1821 = vpop.f32.mrf.mxu0
        %v1822 = vadd.f32 %v1753, %v1821
        %1823 = vmatmul.bf16.gmra.mxu0 %v1564
        %v1824 = vpop.f32.mrf.mxu0
        %v1825 = vadd.f32 %v1756, %v1824
        %v1826 = vpop.f32.mrf.mxu0
        %v1827 = vadd.f32 %v1758, %v1826
        %1828 = vmatmul.bf16.gmra.mxu0 %v1566
        %v1829 = vpop.f32.mrf.mxu0
        %v1830 = vadd.f32 %v1761, %v1829
        %v1831 = vpop.f32.mrf.mxu0
        %v1832 = vadd.f32 %v1763, %v1831
        %1833 = vmatmul.bf16.gmra.mxu0 %v1568
        %v1834 = vpop.f32.mrf.mxu0
        %v1835 = vadd.f32 %v1766, %v1834
        %v1836 = vpop.f32.mrf.mxu0
        %v1837 = vadd.f32 %v1768, %v1836
        %1838 = vdwg.mxu0
        %v1839 = vmax.f32 %v1780, 0.0
        %v1840 = vmax.f32 %v1782, 0.0
        %v1841 = vmax.f32 %v1785, 0.0
        %v1842 = vmax.f32 %v1787, 0.0
        %v1843 = vmax.f32 %v1790, 0.0
        %v1844 = vmax.f32 %v1792, 0.0
        %v1845 = vmax.f32 %v1795, 0.0
        %v1846 = vmax.f32 %v1797, 0.0
        %v1847 = vmax.f32 %v1800, 0.0
        %v1848 = vmax.f32 %v1802, 0.0
        %v1849 = vmax.f32 %v1805, 0.0
        %v1850 = vmax.f32 %v1807, 0.0
        %v1851 = vmax.f32 %v1810, 0.0
        %v1852 = vmax.f32 %v1812, 0.0
        %v1853 = vmax.f32 %v1815, 0.0
        %v1854 = vmax.f32 %v1817, 0.0
        %v1855 = vmax.f32 %v1820, 0.0
        %v1856 = vmax.f32 %v1822, 0.0
        %v1857 = vmax.f32 %v1825, 0.0
        %v1858 = vmax.f32 %v1827, 0.0
        %v1859 = vmax.f32 %v1830, 0.0
        %v1860 = vmax.f32 %v1832, 0.0
        %v1861 = vmax.f32 %v1835, 0.0
        %v1862 = vmax.f32 %v1837, 0.0
        %v1887 = vrot.slane %v1839, 2
        %v1888 = vrot.slane %v1839, 4
        %v1889 = vrot.slane %v1839, 6
        %v1890 = vrot.slane %v1840, 2
        %v1891 = vrot.slane %v1840, 4
        %v1892 = vrot.slane %v1840, 6
        %v1893 = vrot.slane %v1841, 2
        %v1894 = vrot.slane %v1841, 4
        %v1895 = vrot.slane %v1841, 6
        %v1896 = vrot.slane %v1842, 2
        %v1897 = vrot.slane %v1842, 4
        %v1898 = vrot.slane %v1842, 6
        %v1899 = vrot.slane %v1843, 2
        %v1900 = vrot.slane %v1843, 4
        %v1901 = vrot.slane %v1843, 6
        %v1902 = vrot.slane %v1844, 2
        %v1903 = vrot.slane %v1844, 4
        %v1904 = vrot.slane %v1844, 6
        %v1905 = vrot.slane %v1845, 2
        %v1906 = vrot.slane %v1845, 4
        %v1907 = vrot.slane %v1845, 6
        %v1908 = vrot.slane %v1846, 2
        %v1909 = vrot.slane %v1846, 4
        %v1910 = vrot.slane %v1846, 6
        %v1911 = vrot.slane %v1847, 2
        %v1912 = vrot.slane %v1847, 4
        %v1913 = vrot.slane %v1847, 6
        %v1914 = vrot.slane %v1848, 2
        %v1915 = vrot.slane %v1848, 4
        %v1916 = vrot.slane %v1848, 6
        %v1917 = vrot.slane %v1849, 2
        %v1918 = vrot.slane %v1849, 4
        %v1919 = vrot.slane %v1849, 6
        %v1920 = vrot.slane %v1850, 2
        %v1921 = vrot.slane %v1850, 4
        %v1922 = vrot.slane %v1850, 6
        %v1923 = vrot.slane %v1851, 2
        %v1924 = vrot.slane %v1851, 4
        %v1925 = vrot.slane %v1851, 6
        %v1926 = vrot.slane %v1852, 2
        %v1927 = vrot.slane %v1852, 4
        %v1928 = vrot.slane %v1852, 6
        %v1929 = vrot.slane %v1853, 2
        %v1930 = vrot.slane %v1853, 4
        %v1931 = vrot.slane %v1853, 6
        %v1932 = vrot.slane %v1854, 2
        %v1933 = vrot.slane %v1854, 4
        %v1934 = vrot.slane %v1854, 6
        %v1935 = vrot.slane %v1855, 2
        %v1936 = vrot.slane %v1855, 4
        %v1937 = vrot.slane %v1855, 6
        %v1938 = vrot.slane %v1856, 2
        %v1939 = vrot.slane %v1856, 4
        %v1940 = vrot.slane %v1856, 6
        %v1941 = vrot.slane %v1857, 2
        %v1942 = vrot.slane %v1857, 4
        %v1943 = vrot.slane %v1857, 6
        %v1944 = vrot.slane %v1858, 2
        %v1945 = vrot.slane %v1858, 4
        %v1946 = vrot.slane %v1858, 6
        %v1947 = vrot.slane %v1859, 2
        %v1948 = vrot.slane %v1859, 4
        %v1949 = vrot.slane %v1859, 6
        %v1950 = vrot.slane %v1860, 2
        %v1951 = vrot.slane %v1860, 4
        %v1952 = vrot.slane %v1860, 6
        %v1953 = vrot.slane %v1861, 2
        %v1954 = vrot.slane %v1861, 4
        %v1955 = vrot.slane %v1861, 6
        %v1956 = vrot.slane %v1862, 2
        %v1957 = vrot.slane %v1862, 4
        %v1958 = vrot.slane %v1862, 6
        %1959 = vst [vmem:[#allocation1] ss:$4 sm:$0xff] %v1839
        %s1960 = scalar_lea.vmem [#allocation1], 1
        %1961 = vst [vmem:[%s1960] ss:$4 sm:$0xff] %v1887
        %s1962 = scalar_lea.vmem [#allocation1], 2
        %1963 = vst [vmem:[%s1962] ss:$4 sm:$0xff] %v1888
        %v1964 = vld.sshfl [vmem:[#allocation1] sm:$0xff pattern:$0x73625140]
        %s1965 = scalar_lea.vmem [#allocation1], 32
        %1966 = vst [vmem:[%s1965] ss:$4 sm:$0xff] %v1889
        %s1967 = scalar_lea.vmem [#allocation1], 33
        %1968 = vst [vmem:[%s1967] ss:$4 sm:$0xff] %v1840
        %s1969 = scalar_lea.vmem [#allocation1], 34
        %1970 = vst [vmem:[%s1969] ss:$4 sm:$0xff] %v1890
        %v1971 = vld.sshfl [vmem:[#allocation1 + $0x20] sm:$0xff pattern:$0x73625140]
        %1972 = vst [vmem:[#allocation1] ss:$4 sm:$0xff] %v1891
        %1973 = vst [vmem:[%s1960] ss:$4 sm:$0xff] %v1892
        %1974 = vst [vmem:[%s1962] ss:$4 sm:$0xff] %v1841
        %v1975 = vld.sshfl [vmem:[#allocation1] sm:$0xff pattern:$0x73625140]
        %1976 = vst [vmem:[%s1965] ss:$4 sm:$0xff] %v1893
        %1977 = vst [vmem:[%s1967] ss:$4 sm:$0xff] %v1894
        %1978 = vst [vmem:[%s1969] ss:$4 sm:$0xff] %v1895
        %v1979 = vld.sshfl [vmem:[#allocation1 + $0x20] sm:$0xff pattern:$0x73625140]
        %1980 = vst [vmem:[#allocation1] ss:$4 sm:$0xff] %v1842
        %1981 = vst [vmem:[%s1960] ss:$4 sm:$0xff] %v1896
        %1982 = vst [vmem:[%s1962] ss:$4 sm:$0xff] %v1897
        %v1983 = vld.sshfl [vmem:[#allocation1] sm:$0xff pattern:$0x73625140]
        %1984 = vst [vmem:[%s1965] ss:$4 sm:$0xff] %v1898
        %1985 = vst [vmem:[%s1967] ss:$4 sm:$0xff] %v1843
        %1986 = vst [vmem:[%s1969] ss:$4 sm:$0xff] %v1899
        %v1987 = vld.sshfl [vmem:[#allocation1 + $0x20] sm:$0xff pattern:$0x73625140]
        %1988 = vst [vmem:[#allocation1] ss:$4 sm:$0xff] %v1900
        %1989 = vst [vmem:[%s1960] ss:$4 sm:$0xff] %v1901
        %1990 = vst [vmem:[%s1962] ss:$4 sm:$0xff] %v1844
        %v1991 = vld.sshfl [vmem:[#allocation1] sm:$0xff pattern:$0x73625140]
        %1992 = vst [vmem:[%s1965] ss:$4 sm:$0xff] %v1902
        %1993 = vst [vmem:[%s1967] ss:$4 sm:$0xff] %v1903
        %1994 = vst [vmem:[%s1969] ss:$4 sm:$0xff] %v1904
        %v1995 = vld.sshfl [vmem:[#allocation1 + $0x20] sm:$0xff pattern:$0x73625140]
        %1996 = vst [vmem:[#allocation1] ss:$4 sm:$0xff] %v1845
        %1997 = vst [vmem:[%s1960] ss:$4 sm:$0xff] %v1905
        %1998 = vst [vmem:[%s1962] ss:$4 sm:$0xff] %v1906
        %v1999 = vld.sshfl [vmem:[#allocation1] sm:$0xff pattern:$0x73625140]
        %2000 = vst [vmem:[%s1965] ss:$4 sm:$0xff] %v1907
        %2001 = vst [vmem:[%s1967] ss:$4 sm:$0xff] %v1846
        %2002 = vst [vmem:[%s1969] ss:$4 sm:$0xff] %v1908
        %v2003 = vld.sshfl [vmem:[#allocation1 + $0x20] sm:$0xff pattern:$0x73625140]
        %2004 = vst [vmem:[#allocation1] ss:$4 sm:$0xff] %v1909
        %2005 = vst [vmem:[%s1960] ss:$4 sm:$0xff] %v1910
        %2006 = vst [vmem:[%s1962] ss:$4 sm:$0xff] %v1847
        %v2007 = vld.sshfl [vmem:[#allocation1] sm:$0xff pattern:$0x73625140]
        %2008 = vst [vmem:[%s1965] ss:$4 sm:$0xff] %v1911
        %2009 = vst [vmem:[%s1967] ss:$4 sm:$0xff] %v1912
        %2010 = vst [vmem:[%s1969] ss:$4 sm:$0xff] %v1913
        %v2011 = vld.sshfl [vmem:[#allocation1 + $0x20] sm:$0xff pattern:$0x73625140]
        %2012 = vst [vmem:[#allocation1] ss:$4 sm:$0xff] %v1848
        %2013 = vst [vmem:[%s1960] ss:$4 sm:$0xff] %v1914
        %2014 = vst [vmem:[%s1962] ss:$4 sm:$0xff] %v1915
        %v2015 = vld.sshfl [vmem:[#allocation1] sm:$0xff pattern:$0x73625140]
        %2016 = vst [vmem:[%s1965] ss:$4 sm:$0xff] %v1916
        %2017 = vst [vmem:[%s1967] ss:$4 sm:$0xff] %v1849
        %2018 = vst [vmem:[%s1969] ss:$4 sm:$0xff] %v1917
        %v2019 = vld.sshfl [vmem:[#allocation1 + $0x20] sm:$0xff pattern:$0x73625140]
        %2020 = vst [vmem:[#allocation1] ss:$4 sm:$0xff] %v1918
        %2021 = vst [vmem:[%s1960] ss:$4 sm:$0xff] %v1919
        %2022 = vst [vmem:[%s1962] ss:$4 sm:$0xff] %v1850
        %v2023 = vld.sshfl [vmem:[#allocation1] sm:$0xff pattern:$0x73625140]
        %2024 = vst [vmem:[%s1965] ss:$4 sm:$0xff] %v1920
        %2025 = vst [vmem:[%s1967] ss:$4 sm:$0xff] %v1921
        %2026 = vst [vmem:[%s1969] ss:$4 sm:$0xff] %v1922
        %v2027 = vld.sshfl [vmem:[#allocation1 + $0x20] sm:$0xff pattern:$0x73625140]
        %2028 = vst [vmem:[#allocation1] ss:$4 sm:$0xff] %v1851
        %2029 = vst [vmem:[%s1960] ss:$4 sm:$0xff] %v1923
        %2030 = vst [vmem:[%s1962] ss:$4 sm:$0xff] %v1924
        %v2031 = vld.sshfl [vmem:[#allocation1] sm:$0xff pattern:$0x73625140]
        %2032 = vst [vmem:[%s1965] ss:$4 sm:$0xff] %v1925
        %2033 = vst [vmem:[%s1967] ss:$4 sm:$0xff] %v1852
        %2034 = vst [vmem:[%s1969] ss:$4 sm:$0xff] %v1926
        %v2035 = vld.sshfl [vmem:[#allocation1 + $0x20] sm:$0xff pattern:$0x73625140]
        %2036 = vst [vmem:[#allocation1] ss:$4 sm:$0xff] %v1927
        %2037 = vst [vmem:[%s1960] ss:$4 sm:$0xff] %v1928
        %2038 = vst [vmem:[%s1962] ss:$4 sm:$0xff] %v1853
        %v2039 = vld.sshfl [vmem:[#allocation1] sm:$0xff pattern:$0x73625140]
        %2040 = vst [vmem:[%s1965] ss:$4 sm:$0xff] %v1929
        %2041 = vst [vmem:[%s1967] ss:$4 sm:$0xff] %v1930
        %2042 = vst [vmem:[%s1969] ss:$4 sm:$0xff] %v1931
        %v2043 = vld.sshfl [vmem:[#allocation1 + $0x20] sm:$0xff pattern:$0x73625140]
        %2044 = vst [vmem:[#allocation1] ss:$4 sm:$0xff] %v1854
        %2045 = vst [vmem:[%s1960] ss:$4 sm:$0xff] %v1932
        %2046 = vst [vmem:[%s1962] ss:$4 sm:$0xff] %v1933
        %v2047 = vld.sshfl [vmem:[#allocation1] sm:$0xff pattern:$0x73625140]
        %2048 = vst [vmem:[%s1965] ss:$4 sm:$0xff] %v1934
        %2049 = vst [vmem:[%s1967] ss:$4 sm:$0xff] %v1855
        %2050 = vst [vmem:[%s1969] ss:$4 sm:$0xff] %v1935
        %v2051 = vld.sshfl [vmem:[#allocation1 + $0x20] sm:$0xff pattern:$0x73625140]
        %2052 = vst [vmem:[#allocation1] ss:$4 sm:$0xff] %v1936
        %2053 = vst [vmem:[%s1960] ss:$4 sm:$0xff] %v1937
        %2054 = vst [vmem:[%s1962] ss:$4 sm:$0xff] %v1856
        %v2055 = vld.sshfl [vmem:[#allocation1] sm:$0xff pattern:$0x73625140]
        %2056 = vst [vmem:[%s1965] ss:$4 sm:$0xff] %v1938
        %2057 = vst [vmem:[%s1967] ss:$4 sm:$0xff] %v1939
        %2058 = vst [vmem:[%s1969] ss:$4 sm:$0xff] %v1940
        %v2059 = vld.sshfl [vmem:[#allocation1 + $0x20] sm:$0xff pattern:$0x73625140]
        %2060 = vst [vmem:[#allocation1] ss:$4 sm:$0xff] %v1857
        %2061 = vst [vmem:[%s1960] ss:$4 sm:$0xff] %v1941
        %2062 = vst [vmem:[%s1962] ss:$4 sm:$0xff] %v1942
        %v2063 = vld.sshfl [vmem:[#allocation1] sm:$0xff pattern:$0x73625140]
        %2064 = vst [vmem:[%s1965] ss:$4 sm:$0xff] %v1943
        %2065 = vst [vmem:[%s1967] ss:$4 sm:$0xff] %v1858
        %2066 = vst [vmem:[%s1969] ss:$4 sm:$0xff] %v1944
        %v2067 = vld.sshfl [vmem:[#allocation1 + $0x20] sm:$0xff pattern:$0x73625140]
        %2068 = vst [vmem:[#allocation1] ss:$4 sm:$0xff] %v1945
        %2069 = vst [vmem:[%s1960] ss:$4 sm:$0xff] %v1946
        %2070 = vst [vmem:[%s1962] ss:$4 sm:$0xff] %v1859
        %v2071 = vld.sshfl [vmem:[#allocation1] sm:$0xff pattern:$0x73625140]
        %2072 = vst [vmem:[%s1965] ss:$4 sm:$0xff] %v1947
        %2073 = vst [vmem:[%s1967] ss:$4 sm:$0xff] %v1948
        %2074 = vst [vmem:[%s1969] ss:$4 sm:$0xff] %v1949
        %v2075 = vld.sshfl [vmem:[#allocation1 + $0x20] sm:$0xff pattern:$0x73625140]
        %2076 = vst [vmem:[#allocation1] ss:$4 sm:$0xff] %v1860
        %2077 = vst [vmem:[%s1960] ss:$4 sm:$0xff] %v1950
        %2078 = vst [vmem:[%s1962] ss:$4 sm:$0xff] %v1951
        %v2079 = vld.sshfl [vmem:[#allocation1] sm:$0xff pattern:$0x73625140]
        %2080 = vst [vmem:[%s1965] ss:$4 sm:$0xff] %v1952
        %2081 = vst [vmem:[%s1967] ss:$4 sm:$0xff] %v1861
        %2082 = vst [vmem:[%s1969] ss:$4 sm:$0xff] %v1953
        %v2083 = vld.sshfl [vmem:[#allocation1 + $0x20] sm:$0xff pattern:$0x73625140]
        %2084 = vst [vmem:[#allocation1] ss:$4 sm:$0xff] %v1954
        %2085 = vst [vmem:[%s1960] ss:$4 sm:$0xff] %v1955
        %2086 = vst [vmem:[%s1962] ss:$4 sm:$0xff] %v1862
        %v2087 = vld.sshfl [vmem:[#allocation1] sm:$0xff pattern:$0x73625140]
        %2088 = vst [vmem:[%s1965] ss:$4 sm:$0xff] %v1956
        %2089 = vst [vmem:[%s1967] ss:$4 sm:$0xff] %v1957
        %2090 = vst [vmem:[%s1969] ss:$4 sm:$0xff] %v1958
        %v2091 = vld.sshfl [vmem:[#allocation1 + $0x20] sm:$0xff pattern:$0x73625140]
        %2092 = vst [vmem:[#allocation1] ss:$4 sm:$0xff] %v1839
        %s2093 = scalar_lea.vmem [#allocation1], 1
        %2094 = vst [vmem:[%s2093] ss:$4 sm:$0xff] %v1887
        %s2095 = scalar_lea.vmem [#allocation1], 2
        %2096 = vst [vmem:[%s2095] ss:$4 sm:$0xff] %v1888
        %v2097 = vld.sshfl [vmem:[#allocation1] sm:$0xff pattern:$0x73625140]
        %s2098 = scalar_lea.vmem [#allocation1], 32
        %2099 = vst [vmem:[%s2098] ss:$4 sm:$0xff] %v1889
        %s2100 = scalar_lea.vmem [#allocation1], 33
        %2101 = vst [vmem:[%s2100] ss:$4 sm:$0xff] %v1840
        %s2102 = scalar_lea.vmem [#allocation1], 34
        %2103 = vst [vmem:[%s2102] ss:$4 sm:$0xff] %v1890
        %v2104 = vld.sshfl [vmem:[#allocation1 + $0x20] sm:$0xff pattern:$0x73625140]
        %2105 = vst [vmem:[#allocation1] ss:$4 sm:$0xff] %v1891
        %2106 = vst [vmem:[%s2093] ss:$4 sm:$0xff] %v1892
        %2107 = vst [vmem:[%s2095] ss:$4 sm:$0xff] %v1841
        %v2108 = vld.sshfl [vmem:[#allocation1] sm:$0xff pattern:$0x73625140]
        %2109 = vst [vmem:[%s2098] ss:$4 sm:$0xff] %v1893
        %2110 = vst [vmem:[%s2100] ss:$4 sm:$0xff] %v1894
        %2111 = vst [vmem:[%s2102] ss:$4 sm:$0xff] %v1895
        %v2112 = vld.sshfl [vmem:[#allocation1 + $0x20] sm:$0xff pattern:$0x73625140]
        %2113 = vst [vmem:[#allocation1] ss:$4 sm:$0xff] %v1842
        %2114 = vst [vmem:[%s2093] ss:$4 sm:$0xff] %v1896
        %2115 = vst [vmem:[%s2095] ss:$4 sm:$0xff] %v1897
        %v2116 = vld.sshfl [vmem:[#allocation1] sm:$0xff pattern:$0x73625140]
        %2117 = vst [vmem:[%s2098] ss:$4 sm:$0xff] %v1898
        %2118 = vst [vmem:[%s2100] ss:$4 sm:$0xff] %v1843
        %2119 = vst [vmem:[%s2102] ss:$4 sm:$0xff] %v1899
        %v2120 = vld.sshfl [vmem:[#allocation1 + $0x20] sm:$0xff pattern:$0x73625140]
        %2121 = vst [vmem:[#allocation1] ss:$4 sm:$0xff] %v1900
        %2122 = vst [vmem:[%s2093] ss:$4 sm:$0xff] %v1901
        %2123 = vst [vmem:[%s2095] ss:$4 sm:$0xff] %v1844
        %v2124 = vld.sshfl [vmem:[#allocation1] sm:$0xff pattern:$0x73625140]
        %2125 = vst [vmem:[%s2098] ss:$4 sm:$0xff] %v1902
        %2126 = vst [vmem:[%s2100] ss:$4 sm:$0xff] %v1903
        %2127 = vst [vmem:[%s2102] ss:$4 sm:$0xff] %v1904
        %v2128 = vld.sshfl [vmem:[#allocation1 + $0x20] sm:$0xff pattern:$0x73625140]
        %2129 = vst [vmem:[#allocation1] ss:$4 sm:$0xff] %v1845
        %2130 = vst [vmem:[%s2093] ss:$4 sm:$0xff] %v1905
        %2131 = vst [vmem:[%s2095] ss:$4 sm:$0xff] %v1906
        %v2132 = vld.sshfl [vmem:[#allocation1] sm:$0xff pattern:$0x73625140]
        %2133 = vst [vmem:[%s2098] ss:$4 sm:$0xff] %v1907
        %2134 = vst [vmem:[%s2100] ss:$4 sm:$0xff] %v1846
        %2135 = vst [vmem:[%s2102] ss:$4 sm:$0xff] %v1908
        %v2136 = vld.sshfl [vmem:[#allocation1 + $0x20] sm:$0xff pattern:$0x73625140]
        %2137 = vst [vmem:[#allocation1] ss:$4 sm:$0xff] %v1909
        %2138 = vst [vmem:[%s2093] ss:$4 sm:$0xff] %v1910
        %2139 = vst [vmem:[%s2095] ss:$4 sm:$0xff] %v1847
        %v2140 = vld.sshfl [vmem:[#allocation1] sm:$0xff pattern:$0x73625140]
        %2141 = vst [vmem:[%s2098] ss:$4 sm:$0xff] %v1911
        %2142 = vst [vmem:[%s2100] ss:$4 sm:$0xff] %v1912
        %2143 = vst [vmem:[%s2102] ss:$4 sm:$0xff] %v1913
        %v2144 = vld.sshfl [vmem:[#allocation1 + $0x20] sm:$0xff pattern:$0x73625140]
        %2145 = vst [vmem:[#allocation1] ss:$4 sm:$0xff] %v1848
        %2146 = vst [vmem:[%s2093] ss:$4 sm:$0xff] %v1914
        %2147 = vst [vmem:[%s2095] ss:$4 sm:$0xff] %v1915
        %v2148 = vld.sshfl [vmem:[#allocation1] sm:$0xff pattern:$0x73625140]
        %2149 = vst [vmem:[%s2098] ss:$4 sm:$0xff] %v1916
        %2150 = vst [vmem:[%s2100] ss:$4 sm:$0xff] %v1849
        %2151 = vst [vmem:[%s2102] ss:$4 sm:$0xff] %v1917
        %v2152 = vld.sshfl [vmem:[#allocation1 + $0x20] sm:$0xff pattern:$0x73625140]
        %2153 = vst [vmem:[#allocation1] ss:$4 sm:$0xff] %v1918
        %2154 = vst [vmem:[%s2093] ss:$4 sm:$0xff] %v1919
        %2155 = vst [vmem:[%s2095] ss:$4 sm:$0xff] %v1850
        %v2156 = vld.sshfl [vmem:[#allocation1] sm:$0xff pattern:$0x73625140]
        %2157 = vst [vmem:[%s2098] ss:$4 sm:$0xff] %v1920
        %2158 = vst [vmem:[%s2100] ss:$4 sm:$0xff] %v1921
        %2159 = vst [vmem:[%s2102] ss:$4 sm:$0xff] %v1922
        %v2160 = vld.sshfl [vmem:[#allocation1 + $0x20] sm:$0xff pattern:$0x73625140]
        %2161 = vst [vmem:[#allocation1] ss:$4 sm:$0xff] %v1851
        %2162 = vst [vmem:[%s2093] ss:$4 sm:$0xff] %v1923
        %2163 = vst [vmem:[%s2095] ss:$4 sm:$0xff] %v1924
        %v2164 = vld.sshfl [vmem:[#allocation1] sm:$0xff pattern:$0x73625140]
        %2165 = vst [vmem:[%s2098] ss:$4 sm:$0xff] %v1925
        %2166 = vst [vmem:[%s2100] ss:$4 sm:$0xff] %v1852
        %2167 = vst [vmem:[%s2102] ss:$4 sm:$0xff] %v1926
        %v2168 = vld.sshfl [vmem:[#allocation1 + $0x20] sm:$0xff pattern:$0x73625140]
        %2169 = vst [vmem:[#allocation1] ss:$4 sm:$0xff] %v1927
        %2170 = vst [vmem:[%s2093] ss:$4 sm:$0xff] %v1928
        %2171 = vst [vmem:[%s2095] ss:$4 sm:$0xff] %v1853
        %v2172 = vld.sshfl [vmem:[#allocation1] sm:$0xff pattern:$0x73625140]
        %2173 = vst [vmem:[%s2098] ss:$4 sm:$0xff] %v1929
        %2174 = vst [vmem:[%s2100] ss:$4 sm:$0xff] %v1930
        %2175 = vst [vmem:[%s2102] ss:$4 sm:$0xff] %v1931
        %v2176 = vld.sshfl [vmem:[#allocation1 + $0x20] sm:$0xff pattern:$0x73625140]
        %2177 = vst [vmem:[#allocation1] ss:$4 sm:$0xff] %v1854
        %2178 = vst [vmem:[%s2093] ss:$4 sm:$0xff] %v1932
        %2179 = vst [vmem:[%s2095] ss:$4 sm:$0xff] %v1933
        %v2180 = vld.sshfl [vmem:[#allocation1] sm:$0xff pattern:$0x73625140]
        %2181 = vst [vmem:[%s2098] ss:$4 sm:$0xff] %v1934
        %2182 = vst [vmem:[%s2100] ss:$4 sm:$0xff] %v1855
        %2183 = vst [vmem:[%s2102] ss:$4 sm:$0xff] %v1935
        %v2184 = vld.sshfl [vmem:[#allocation1 + $0x20] sm:$0xff pattern:$0x73625140]
        %2185 = vst [vmem:[#allocation1] ss:$4 sm:$0xff] %v1936
        %2186 = vst [vmem:[%s2093] ss:$4 sm:$0xff] %v1937
        %2187 = vst [vmem:[%s2095] ss:$4 sm:$0xff] %v1856
        %v2188 = vld.sshfl [vmem:[#allocation1] sm:$0xff pattern:$0x73625140]
        %2189 = vst [vmem:[%s2098] ss:$4 sm:$0xff] %v1938
        %2190 = vst [vmem:[%s2100] ss:$4 sm:$0xff] %v1939
        %2191 = vst [vmem:[%s2102] ss:$4 sm:$0xff] %v1940
        %v2192 = vld.sshfl [vmem:[#allocation1 + $0x20] sm:$0xff pattern:$0x73625140]
        %2193 = vst [vmem:[#allocation1] ss:$4 sm:$0xff] %v1857
        %2194 = vst [vmem:[%s2093] ss:$4 sm:$0xff] %v1941
        %2195 = vst [vmem:[%s2095] ss:$4 sm:$0xff] %v1942
        %v2196 = vld.sshfl [vmem:[#allocation1] sm:$0xff pattern:$0x73625140]
        %2197 = vst [vmem:[%s2098] ss:$4 sm:$0xff] %v1943
        %2198 = vst [vmem:[%s2100] ss:$4 sm:$0xff] %v1858
        %2199 = vst [vmem:[%s2102] ss:$4 sm:$0xff] %v1944
        %v2200 = vld.sshfl [vmem:[#allocation1 + $0x20] sm:$0xff pattern:$0x73625140]
        %2201 = vst [vmem:[#allocation1] ss:$4 sm:$0xff] %v1945
        %2202 = vst [vmem:[%s2093] ss:$4 sm:$0xff] %v1946
        %2203 = vst [vmem:[%s2095] ss:$4 sm:$0xff] %v1859
        %v2204 = vld.sshfl [vmem:[#allocation1] sm:$0xff pattern:$0x73625140]
        %2205 = vst [vmem:[%s2098] ss:$4 sm:$0xff] %v1947
        %2206 = vst [vmem:[%s2100] ss:$4 sm:$0xff] %v1948
        %2207 = vst [vmem:[%s2102] ss:$4 sm:$0xff] %v1949
        %v2208 = vld.sshfl [vmem:[#allocation1 + $0x20] sm:$0xff pattern:$0x73625140]
        %2209 = vst [vmem:[#allocation1] ss:$4 sm:$0xff] %v1860
        %2210 = vst [vmem:[%s2093] ss:$4 sm:$0xff] %v1950
        %2211 = vst [vmem:[%s2095] ss:$4 sm:$0xff] %v1951
        %v2212 = vld.sshfl [vmem:[#allocation1] sm:$0xff pattern:$0x73625140]
        %2213 = vst [vmem:[%s2098] ss:$4 sm:$0xff] %v1952
        %2214 = vst [vmem:[%s2100] ss:$4 sm:$0xff] %v1861
        %2215 = vst [vmem:[%s2102] ss:$4 sm:$0xff] %v1953
        %v2216 = vld.sshfl [vmem:[#allocation1 + $0x20] sm:$0xff pattern:$0x73625140]
        %2217 = vst [vmem:[#allocation1] ss:$4 sm:$0xff] %v1954
        %2218 = vst [vmem:[%s2093] ss:$4 sm:$0xff] %v1955
        %2219 = vst [vmem:[%s2095] ss:$4 sm:$0xff] %v1862
        %v2220 = vld.sshfl [vmem:[#allocation1] sm:$0xff pattern:$0x73625140]
        %2221 = vst [vmem:[%s2098] ss:$4 sm:$0xff] %v1956
        %2222 = vst [vmem:[%s2100] ss:$4 sm:$0xff] %v1957
        %2223 = vst [vmem:[%s2102] ss:$4 sm:$0xff] %v1958
        %v2224 = vld.sshfl [vmem:[#allocation1 + $0x20] sm:$0xff pattern:$0x73625140]
        %v2225 = vrot.slane %v2097, 1
        %v2226 = vrot.slane %v2104, 1
        %v2227 = vrot.slane %v2108, 1
        %v2228 = vrot.slane %v2112, 1
        %v2229 = vrot.slane %v2116, 1
        %v2230 = vrot.slane %v2120, 1
        %v2231 = vrot.slane %v2124, 1
        %v2232 = vrot.slane %v2128, 1
        %v2233 = vrot.slane %v2132, 1
        %v2234 = vrot.slane %v2136, 1
        %v2235 = vrot.slane %v2140, 1
        %v2236 = vrot.slane %v2144, 1
        %v2237 = vrot.slane %v2148, 1
        %v2238 = vrot.slane %v2152, 1
        %v2239 = vrot.slane %v2156, 1
        %v2240 = vrot.slane %v2160, 1
        %v2241 = vrot.slane %v2164, 1
        %v2242 = vrot.slane %v2168, 1
        %v2243 = vrot.slane %v2172, 1
        %v2244 = vrot.slane %v2176, 1
        %v2245 = vrot.slane %v2180, 1
        %v2246 = vrot.slane %v2184, 1
        %v2247 = vrot.slane %v2188, 1
        %v2248 = vrot.slane %v2192, 1
        %v2249 = vrot.slane %v2196, 1
        %v2250 = vrot.slane %v2200, 1
        %v2251 = vrot.slane %v2204, 1
        %v2252 = vrot.slane %v2208, 1
        %v2253 = vrot.slane %v2212, 1
        %v2254 = vrot.slane %v2216, 1
        %v2255 = vrot.slane %v2220, 1
        %v2256 = vrot.slane %v2224, 1
        %v2257 = vrot.slane %v2225, 7
        %v2258 = vrot.slane %v2226, 7
        %v2259 = vrot.slane %v2227, 7
        %v2260 = vrot.slane %v2228, 7
        %v2261 = vrot.slane %v2229, 7
        %v2262 = vrot.slane %v2230, 7
        %v2263 = vrot.slane %v2231, 7
        %v2264 = vrot.slane %v2232, 7
        %v2265 = vrot.slane %v2233, 7
        %v2266 = vrot.slane %v2234, 7
        %v2267 = vrot.slane %v2235, 7
        %v2268 = vrot.slane %v2236, 7
        %v2269 = vrot.slane %v2237, 7
        %v2270 = vrot.slane %v2238, 7
        %v2271 = vrot.slane %v2239, 7
        %v2272 = vrot.slane %v2240, 7
        %v2273 = vrot.slane %v2241, 7
        %v2274 = vrot.slane %v2242, 7
        %v2275 = vrot.slane %v2243, 7
        %v2276 = vrot.slane %v2244, 7
        %v2277 = vrot.slane %v2245, 7
        %v2278 = vrot.slane %v2246, 7
        %v2279 = vrot.slane %v2247, 7
        %v2280 = vrot.slane %v2248, 7
        %v2281 = vrot.slane %v2249, 7
        %v2282 = vrot.slane %v2250, 7
        %v2283 = vrot.slane %v2251, 7
        %v2284 = vrot.slane %v2252, 7
        %v2285 = vrot.slane %v2253, 7
        %v2286 = vrot.slane %v2254, 7
        %v2287 = vrot.slane %v2255, 7
        %v2288 = vrot.slane %v2256, 7
        %vm2289 = vcmask 1040384
        %v2290 = vsel %vm2289, %v1964, %v2257
        %vm2291 = vcmask 1041409
        %v2292 = vsel %vm2291, %v1964, %v2257
        %v2293 = vrot.slane %v2292, 1
        %vm2294 = vcmask 1042434
        %v2295 = vsel %vm2294, %v1964, %v2257
        %v2296 = vrot.slane %v2295, 2
        %vm2297 = vcmask 1043459
        %v2298 = vsel %vm2297, %v1964, %v2257
        %v2299 = vrot.slane %v2298, 3
        %vm2300 = vcmask 1044484
        %v2301 = vsel %vm2300, %v1964, %v2257
        %v2302 = vrot.slane %v2301, 4
        %v2303 = vsel %vm2289, %v1971, %v2258
        %v2304 = vsel %vm2291, %v1971, %v2258
        %v2305 = vrot.slane %v2304, 1
        %v2306 = vsel %vm2294, %v1971, %v2258
        %v2307 = vrot.slane %v2306, 2
        %v2308 = vsel %vm2297, %v1971, %v2258
        %v2309 = vrot.slane %v2308, 3
        %v2310 = vsel %vm2300, %v1971, %v2258
        %v2311 = vrot.slane %v2310, 4
        %v2312 = vsel %vm2289, %v1975, %v2259
        %v2313 = vsel %vm2291, %v1975, %v2259
        %v2314 = vrot.slane %v2313, 1
        %v2315 = vsel %vm2294, %v1975, %v2259
        %v2316 = vrot.slane %v2315, 2
        %v2317 = vsel %vm2297, %v1975, %v2259
        %v2318 = vrot.slane %v2317, 3
        %v2319 = vsel %vm2300, %v1975, %v2259
        %v2320 = vrot.slane %v2319, 4
        %v2321 = vsel %vm2289, %v1979, %v2260
        %v2322 = vsel %vm2291, %v1979, %v2260
        %v2323 = vrot.slane %v2322, 1
        %v2324 = vsel %vm2294, %v1979, %v2260
        %v2325 = vrot.slane %v2324, 2
        %v2326 = vsel %vm2297, %v1979, %v2260
        %v2327 = vrot.slane %v2326, 3
        %v2328 = vsel %vm2300, %v1979, %v2260
        %v2329 = vrot.slane %v2328, 4
        %v2330 = vsel %vm2289, %v1983, %v2261
        %v2331 = vsel %vm2291, %v1983, %v2261
        %v2332 = vrot.slane %v2331, 1
        %v2333 = vsel %vm2294, %v1983, %v2261
        %v2334 = vrot.slane %v2333, 2
        %v2335 = vsel %vm2297, %v1983, %v2261
        %v2336 = vrot.slane %v2335, 3
        %v2337 = vsel %vm2300, %v1983, %v2261
        %v2338 = vrot.slane %v2337, 4
        %v2339 = vsel %vm2289, %v1987, %v2262
        %v2340 = vsel %vm2291, %v1987, %v2262
        %v2341 = vrot.slane %v2340, 1
        %v2342 = vsel %vm2294, %v1987, %v2262
        %v2343 = vrot.slane %v2342, 2
        %v2344 = vsel %vm2297, %v1987, %v2262
        %v2345 = vrot.slane %v2344, 3
        %v2346 = vsel %vm2300, %v1987, %v2262
        %v2347 = vrot.slane %v2346, 4
        %v2348 = vsel %vm2289, %v1991, %v2263
        %v2349 = vsel %vm2291, %v1991, %v2263
        %v2350 = vrot.slane %v2349, 1
        %v2351 = vsel %vm2294, %v1991, %v2263
        %v2352 = vrot.slane %v2351, 2
        %v2353 = vsel %vm2297, %v1991, %v2263
        %v2354 = vrot.slane %v2353, 3
        %v2355 = vsel %vm2300, %v1991, %v2263
        %v2356 = vrot.slane %v2355, 4
        %v2357 = vsel %vm2289, %v1995, %v2264
        %v2358 = vsel %vm2291, %v1995, %v2264
        %v2359 = vrot.slane %v2358, 1
        %v2360 = vsel %vm2294, %v1995, %v2264
        %v2361 = vrot.slane %v2360, 2
        %v2362 = vsel %vm2297, %v1995, %v2264
        %v2363 = vrot.slane %v2362, 3
        %v2364 = vsel %vm2300, %v1995, %v2264
        %v2365 = vrot.slane %v2364, 4
        %v2366 = vsel %vm2289, %v1999, %v2265
        %v2367 = vsel %vm2291, %v1999, %v2265
        %v2368 = vrot.slane %v2367, 1
        %v2369 = vsel %vm2294, %v1999, %v2265
        %v2370 = vrot.slane %v2369, 2
        %v2371 = vsel %vm2297, %v1999, %v2265
        %v2372 = vrot.slane %v2371, 3
        %v2373 = vsel %vm2300, %v1999, %v2265
        %v2374 = vrot.slane %v2373, 4
        %v2375 = vsel %vm2289, %v2003, %v2266
        %v2376 = vsel %vm2291, %v2003, %v2266
        %v2377 = vrot.slane %v2376, 1
        %v2378 = vsel %vm2294, %v2003, %v2266
        %v2379 = vrot.slane %v2378, 2
        %v2380 = vsel %vm2297, %v2003, %v2266
        %v2381 = vrot.slane %v2380, 3
        %v2382 = vsel %vm2300, %v2003, %v2266
        %v2383 = vrot.slane %v2382, 4
        %v2384 = vsel %vm2289, %v2007, %v2267
        %v2385 = vsel %vm2291, %v2007, %v2267
        %v2386 = vrot.slane %v2385, 1
        %v2387 = vsel %vm2294, %v2007, %v2267
        %v2388 = vrot.slane %v2387, 2
        %v2389 = vsel %vm2297, %v2007, %v2267
        %v2390 = vrot.slane %v2389, 3
        %v2391 = vsel %vm2300, %v2007, %v2267
        %v2392 = vrot.slane %v2391, 4
        %v2393 = vsel %vm2289, %v2011, %v2268
        %v2394 = vsel %vm2291, %v2011, %v2268
        %v2395 = vrot.slane %v2394, 1
        %v2396 = vsel %vm2294, %v2011, %v2268
        %v2397 = vrot.slane %v2396, 2
        %v2398 = vsel %vm2297, %v2011, %v2268
        %v2399 = vrot.slane %v2398, 3
        %v2400 = vsel %vm2300, %v2011, %v2268
        %v2401 = vrot.slane %v2400, 4
        %v2402 = vsel %vm2289, %v2015, %v2269
        %v2403 = vsel %vm2291, %v2015, %v2269
        %v2404 = vrot.slane %v2403, 1
        %v2405 = vsel %vm2294, %v2015, %v2269
        %v2406 = vrot.slane %v2405, 2
        %v2407 = vsel %vm2297, %v2015, %v2269
        %v2408 = vrot.slane %v2407, 3
        %v2409 = vsel %vm2300, %v2015, %v2269
        %v2410 = vrot.slane %v2409, 4
        %v2411 = vsel %vm2289, %v2019, %v2270
        %v2412 = vsel %vm2291, %v2019, %v2270
        %v2413 = vrot.slane %v2412, 1
        %v2414 = vsel %vm2294, %v2019, %v2270
        %v2415 = vrot.slane %v2414, 2
        %v2416 = vsel %vm2297, %v2019, %v2270
        %v2417 = vrot.slane %v2416, 3
        %v2418 = vsel %vm2300, %v2019, %v2270
        %v2419 = vrot.slane %v2418, 4
        %v2420 = vsel %vm2289, %v2023, %v2271
        %v2421 = vsel %vm2291, %v2023, %v2271
        %v2422 = vrot.slane %v2421, 1
        %v2423 = vsel %vm2294, %v2023, %v2271
        %v2424 = vrot.slane %v2423, 2
        %v2425 = vsel %vm2297, %v2023, %v2271
        %v2426 = vrot.slane %v2425, 3
        %v2427 = vsel %vm2300, %v2023, %v2271
        %v2428 = vrot.slane %v2427, 4
        %v2429 = vsel %vm2289, %v2027, %v2272
        %v2430 = vsel %vm2291, %v2027, %v2272
        %v2431 = vrot.slane %v2430, 1
        %v2432 = vsel %vm2294, %v2027, %v2272
        %v2433 = vrot.slane %v2432, 2
        %v2434 = vsel %vm2297, %v2027, %v2272
        %v2435 = vrot.slane %v2434, 3
        %v2436 = vsel %vm2300, %v2027, %v2272
        %v2437 = vrot.slane %v2436, 4
        %v2438 = vsel %vm2289, %v2031, %v2273
        %v2439 = vsel %vm2291, %v2031, %v2273
        %v2440 = vrot.slane %v2439, 1
        %v2441 = vsel %vm2294, %v2031, %v2273
        %v2442 = vrot.slane %v2441, 2
        %v2443 = vsel %vm2297, %v2031, %v2273
        %v2444 = vrot.slane %v2443, 3
        %v2445 = vsel %vm2300, %v2031, %v2273
        %v2446 = vrot.slane %v2445, 4
        %v2447 = vsel %vm2289, %v2035, %v2274
        %v2448 = vsel %vm2291, %v2035, %v2274
        %v2449 = vrot.slane %v2448, 1
        %v2450 = vsel %vm2294, %v2035, %v2274
        %v2451 = vrot.slane %v2450, 2
        %v2452 = vsel %vm2297, %v2035, %v2274
        %v2453 = vrot.slane %v2452, 3
        %v2454 = vsel %vm2300, %v2035, %v2274
        %v2455 = vrot.slane %v2454, 4
        %v2456 = vsel %vm2289, %v2039, %v2275
        %v2457 = vsel %vm2291, %v2039, %v2275
        %v2458 = vrot.slane %v2457, 1
        %v2459 = vsel %vm2294, %v2039, %v2275
        %v2460 = vrot.slane %v2459, 2
        %v2461 = vsel %vm2297, %v2039, %v2275
        %v2462 = vrot.slane %v2461, 3
        %v2463 = vsel %vm2300, %v2039, %v2275
        %v2464 = vrot.slane %v2463, 4
        %v2465 = vsel %vm2289, %v2043, %v2276
        %v2466 = vsel %vm2291, %v2043, %v2276
        %v2467 = vrot.slane %v2466, 1
        %v2468 = vsel %vm2294, %v2043, %v2276
        %v2469 = vrot.slane %v2468, 2
        %v2470 = vsel %vm2297, %v2043, %v2276
        %v2471 = vrot.slane %v2470, 3
        %v2472 = vsel %vm2300, %v2043, %v2276
        %v2473 = vrot.slane %v2472, 4
        %v2474 = vsel %vm2289, %v2047, %v2277
        %v2475 = vsel %vm2291, %v2047, %v2277
        %v2476 = vrot.slane %v2475, 1
        %v2477 = vsel %vm2294, %v2047, %v2277
        %v2478 = vrot.slane %v2477, 2
        %v2479 = vsel %vm2297, %v2047, %v2277
        %v2480 = vrot.slane %v2479, 3
        %v2481 = vsel %vm2300, %v2047, %v2277
        %v2482 = vrot.slane %v2481, 4
        %v2483 = vsel %vm2289, %v2051, %v2278
        %v2484 = vsel %vm2291, %v2051, %v2278
        %v2485 = vrot.slane %v2484, 1
        %v2486 = vsel %vm2294, %v2051, %v2278
        %v2487 = vrot.slane %v2486, 2
        %v2488 = vsel %vm2297, %v2051, %v2278
        %v2489 = vrot.slane %v2488, 3
        %v2490 = vsel %vm2300, %v2051, %v2278
        %v2491 = vrot.slane %v2490, 4
        %v2492 = vsel %vm2289, %v2055, %v2279
        %v2493 = vsel %vm2291, %v2055, %v2279
        %v2494 = vrot.slane %v2493, 1
        %v2495 = vsel %vm2294, %v2055, %v2279
        %v2496 = vrot.slane %v2495, 2
        %v2497 = vsel %vm2297, %v2055, %v2279
        %v2498 = vrot.slane %v2497, 3
        %v2499 = vsel %vm2300, %v2055, %v2279
        %v2500 = vrot.slane %v2499, 4
        %v2501 = vsel %vm2289, %v2059, %v2280
        %v2502 = vsel %vm2291, %v2059, %v2280
        %v2503 = vrot.slane %v2502, 1
        %v2504 = vsel %vm2294, %v2059, %v2280
        %v2505 = vrot.slane %v2504, 2
        %v2506 = vsel %vm2297, %v2059, %v2280
        %v2507 = vrot.slane %v2506, 3
        %v2508 = vsel %vm2300, %v2059, %v2280
        %v2509 = vrot.slane %v2508, 4
        %v2510 = vsel %vm2289, %v2063, %v2281
        %v2511 = vsel %vm2291, %v2063, %v2281
        %v2512 = vrot.slane %v2511, 1
        %v2513 = vsel %vm2294, %v2063, %v2281
        %v2514 = vrot.slane %v2513, 2
        %v2515 = vsel %vm2297, %v2063, %v2281
        %v2516 = vrot.slane %v2515, 3
        %v2517 = vsel %vm2300, %v2063, %v2281
        %v2518 = vrot.slane %v2517, 4
        %v2519 = vsel %vm2289, %v2067, %v2282
        %v2520 = vsel %vm2291, %v2067, %v2282
        %v2521 = vrot.slane %v2520, 1
        %v2522 = vsel %vm2294, %v2067, %v2282
        %v2523 = vrot.slane %v2522, 2
        %v2524 = vsel %vm2297, %v2067, %v2282
        %v2525 = vrot.slane %v2524, 3
        %v2526 = vsel %vm2300, %v2067, %v2282
        %v2527 = vrot.slane %v2526, 4
        %v2528 = vsel %vm2289, %v2071, %v2283
        %v2529 = vsel %vm2291, %v2071, %v2283
        %v2530 = vrot.slane %v2529, 1
        %v2531 = vsel %vm2294, %v2071, %v2283
        %v2532 = vrot.slane %v2531, 2
        %v2533 = vsel %vm2297, %v2071, %v2283
        %v2534 = vrot.slane %v2533, 3
        %v2535 = vsel %vm2300, %v2071, %v2283
        %v2536 = vrot.slane %v2535, 4
        %v2537 = vsel %vm2289, %v2075, %v2284
        %v2538 = vsel %vm2291, %v2075, %v2284
        %v2539 = vrot.slane %v2538, 1
        %v2540 = vsel %vm2294, %v2075, %v2284
        %v2541 = vrot.slane %v2540, 2
        %v2542 = vsel %vm2297, %v2075, %v2284
        %v2543 = vrot.slane %v2542, 3
        %v2544 = vsel %vm2300, %v2075, %v2284
        %v2545 = vrot.slane %v2544, 4
        %v2546 = vsel %vm2289, %v2079, %v2285
        %v2547 = vsel %vm2291, %v2079, %v2285
        %v2548 = vrot.slane %v2547, 1
        %v2549 = vsel %vm2294, %v2079, %v2285
        %v2550 = vrot.slane %v2549, 2
        %v2551 = vsel %vm2297, %v2079, %v2285
        %v2552 = vrot.slane %v2551, 3
        %v2553 = vsel %vm2300, %v2079, %v2285
        %v2554 = vrot.slane %v2553, 4
        %v2555 = vsel %vm2289, %v2083, %v2286
        %v2556 = vsel %vm2291, %v2083, %v2286
        %v2557 = vrot.slane %v2556, 1
        %v2558 = vsel %vm2294, %v2083, %v2286
        %v2559 = vrot.slane %v2558, 2
        %v2560 = vsel %vm2297, %v2083, %v2286
        %v2561 = vrot.slane %v2560, 3
        %v2562 = vsel %vm2300, %v2083, %v2286
        %v2563 = vrot.slane %v2562, 4
        %v2564 = vsel %vm2289, %v2087, %v2287
        %v2565 = vsel %vm2291, %v2087, %v2287
        %v2566 = vrot.slane %v2565, 1
        %v2567 = vsel %vm2294, %v2087, %v2287
        %v2568 = vrot.slane %v2567, 2
        %v2569 = vsel %vm2297, %v2087, %v2287
        %v2570 = vrot.slane %v2569, 3
        %v2571 = vsel %vm2300, %v2087, %v2287
        %v2572 = vrot.slane %v2571, 4
        %v2573 = vsel %vm2289, %v2091, %v2288
        %v2574 = vsel %vm2291, %v2091, %v2288
        %v2575 = vrot.slane %v2574, 1
        %v2576 = vsel %vm2294, %v2091, %v2288
        %v2577 = vrot.slane %v2576, 2
        %v2578 = vsel %vm2297, %v2091, %v2288
        %v2579 = vrot.slane %v2578, 3
        %v2580 = vsel %vm2300, %v2091, %v2288
        %v2581 = vrot.slane %v2580, 4
        %2582 = vst [vmem:[#allocation1] ss:$9 sm:$0xff] %v2290
        %s2583 = scalar_lea.vmem [#allocation1], 1
        %2584 = vst [vmem:[%s2583] ss:$9 sm:$0xff] %v2293
        %s2585 = scalar_lea.vmem [#allocation1], 2
        %2586 = vst [vmem:[%s2585] ss:$9 sm:$0xff] %v2296
        %s2587 = scalar_lea.vmem [#allocation1], 3
        %2588 = vst [vmem:[%s2587] ss:$9 sm:$0xff] %v2299
        %s2589 = scalar_lea.vmem [#allocation1], 4
        %2590 = vst [vmem:[%s2589] ss:$9 sm:$0xff] %v2302
        %s2591 = scalar_lea.vmem [#allocation1], 5
        %2592 = vst [vmem:[%s2591] ss:$9 sm:$0xff] %v2303
        %s2593 = scalar_lea.vmem [#allocation1], 6
        %2594 = vst [vmem:[%s2593] ss:$9 sm:$0xff] %v2305
        %s2595 = scalar_lea.vmem [#allocation1], 7
        %2596 = vst [vmem:[%s2595] ss:$9 sm:$0xff] %v2307
        %v2597 = vld [vmem:[#allocation1] sm:$0xff]
        %v2598 = vld [vmem:[#allocation1 + $0x9] sm:$0xff]
        %2599 = vst [vmem:[#allocation1] ss:$9 sm:$0xff] %v2309
        %2600 = vst [vmem:[%s2583] ss:$9 sm:$0xff] %v2311
        %2601 = vst [vmem:[%s2585] ss:$9 sm:$0xff] %v2312
        %2602 = vst [vmem:[%s2587] ss:$9 sm:$0xff] %v2314
        %2603 = vst [vmem:[%s2589] ss:$9 sm:$0xff] %v2316
        %2604 = vst [vmem:[%s2591] ss:$9 sm:$0xff] %v2318
        %2605 = vst [vmem:[%s2593] ss:$9 sm:$0xff] %v2320
        %2606 = vst [vmem:[%s2595] ss:$9 sm:$0xff] %v2321
        %v2607 = vld [vmem:[#allocation1] sm:$0xff]
        %v2608 = vld [vmem:[#allocation1 + $0x9] sm:$0xff]
        %2609 = vst [vmem:[#allocation1] ss:$9 sm:$0xff] %v2323
        %2610 = vst [vmem:[%s2583] ss:$9 sm:$0xff] %v2325
        %2611 = vst [vmem:[%s2585] ss:$9 sm:$0xff] %v2327
        %2612 = vst [vmem:[%s2587] ss:$9 sm:$0xff] %v2329
        %2613 = vst [vmem:[%s2589] ss:$9 sm:$0xff] %v2330
        %2614 = vst [vmem:[%s2591] ss:$9 sm:$0xff] %v2332
        %2615 = vst [vmem:[%s2593] ss:$9 sm:$0xff] %v2334
        %2616 = vst [vmem:[%s2595] ss:$9 sm:$0xff] %v2336
        %v2617 = vld [vmem:[#allocation1] sm:$0xff]
        %v2618 = vld [vmem:[#allocation1 + $0x9] sm:$0xff]
        %2619 = vst [vmem:[#allocation1] ss:$9 sm:$0xff] %v2338
        %2620 = vst [vmem:[%s2583] ss:$9 sm:$0xff] %v2339
        %2621 = vst [vmem:[%s2585] ss:$9 sm:$0xff] %v2341
        %2622 = vst [vmem:[%s2587] ss:$9 sm:$0xff] %v2343
        %2623 = vst [vmem:[%s2589] ss:$9 sm:$0xff] %v2345
        %2624 = vst [vmem:[%s2591] ss:$9 sm:$0xff] %v2347
        %2625 = vst [vmem:[%s2593] ss:$9 sm:$0xff] %v2348
        %2626 = vst [vmem:[%s2595] ss:$9 sm:$0xff] %v2350
        %v2627 = vld [vmem:[#allocation1] sm:$0xff]
        %v2628 = vld [vmem:[#allocation1 + $0x9] sm:$0xff]
        %2629 = vst [vmem:[#allocation1] ss:$9 sm:$0xff] %v2352
        %2630 = vst [vmem:[%s2583] ss:$9 sm:$0xff] %v2354
        %2631 = vst [vmem:[%s2585] ss:$9 sm:$0xff] %v2356
        %2632 = vst [vmem:[%s2587] ss:$9 sm:$0xff] %v2357
        %2633 = vst [vmem:[%s2589] ss:$9 sm:$0xff] %v2359
        %2634 = vst [vmem:[%s2591] ss:$9 sm:$0xff] %v2361
        %2635 = vst [vmem:[%s2593] ss:$9 sm:$0xff] %v2363
        %2636 = vst [vmem:[%s2595] ss:$9 sm:$0xff] %v2365
        %v2637 = vld [vmem:[#allocation1] sm:$0xff]
        %v2638 = vld [vmem:[#allocation1 + $0x9] sm:$0xff]
        %2639 = vst [vmem:[#allocation1] ss:$9 sm:$0xff] %v2366
        %2640 = vst [vmem:[%s2583] ss:$9 sm:$0xff] %v2368
        %2641 = vst [vmem:[%s2585] ss:$9 sm:$0xff] %v2370
        %2642 = vst [vmem:[%s2587] ss:$9 sm:$0xff] %v2372
        %2643 = vst [vmem:[%s2589] ss:$9 sm:$0xff] %v2374
        %2644 = vst [vmem:[%s2591] ss:$9 sm:$0xff] %v2375
        %2645 = vst [vmem:[%s2593] ss:$9 sm:$0xff] %v2377
        %2646 = vst [vmem:[%s2595] ss:$9 sm:$0xff] %v2379
        %v2647 = vld [vmem:[#allocation1] sm:$0xff]
        %v2648 = vld [vmem:[#allocation1 + $0x9] sm:$0xff]
        %2649 = vst [vmem:[#allocation1] ss:$9 sm:$0xff] %v2381
        %2650 = vst [vmem:[%s2583] ss:$9 sm:$0xff] %v2383
        %2651 = vst [vmem:[%s2585] ss:$9 sm:$0xff] %v2384
        %2652 = vst [vmem:[%s2587] ss:$9 sm:$0xff] %v2386
        %2653 = vst [vmem:[%s2589] ss:$9 sm:$0xff] %v2388
        %2654 = vst [vmem:[%s2591] ss:$9 sm:$0xff] %v2390
        %2655 = vst [vmem:[%s2593] ss:$9 sm:$0xff] %v2392
        %2656 = vst [vmem:[%s2595] ss:$9 sm:$0xff] %v2393
        %v2657 = vld [vmem:[#allocation1] sm:$0xff]
        %v2658 = vld [vmem:[#allocation1 + $0x9] sm:$0xff]
        %2659 = vst [vmem:[#allocation1] ss:$9 sm:$0xff] %v2395
        %2660 = vst [vmem:[%s2583] ss:$9 sm:$0xff] %v2397
        %2661 = vst [vmem:[%s2585] ss:$9 sm:$0xff] %v2399
        %2662 = vst [vmem:[%s2587] ss:$9 sm:$0xff] %v2401
        %2663 = vst [vmem:[%s2589] ss:$9 sm:$0xff] %v2402
        %2664 = vst [vmem:[%s2591] ss:$9 sm:$0xff] %v2404
        %2665 = vst [vmem:[%s2593] ss:$9 sm:$0xff] %v2406
        %2666 = vst [vmem:[%s2595] ss:$9 sm:$0xff] %v2408
        %v2667 = vld [vmem:[#allocation1] sm:$0xff]
        %v2668 = vld [vmem:[#allocation1 + $0x9] sm:$0xff]
        %2669 = vst [vmem:[#allocation1] ss:$9 sm:$0xff] %v2410
        %2670 = vst [vmem:[%s2583] ss:$9 sm:$0xff] %v2411
        %2671 = vst [vmem:[%s2585] ss:$9 sm:$0xff] %v2413
        %2672 = vst [vmem:[%s2587] ss:$9 sm:$0xff] %v2415
        %2673 = vst [vmem:[%s2589] ss:$9 sm:$0xff] %v2417
        %2674 = vst [vmem:[%s2591] ss:$9 sm:$0xff] %v2419
        %2675 = vst [vmem:[%s2593] ss:$9 sm:$0xff] %v2420
        %2676 = vst [vmem:[%s2595] ss:$9 sm:$0xff] %v2422
        %v2677 = vld [vmem:[#allocation1] sm:$0xff]
        %v2678 = vld [vmem:[#allocation1 + $0x9] sm:$0xff]
        %2679 = vst [vmem:[#allocation1] ss:$9 sm:$0xff] %v2424
        %2680 = vst [vmem:[%s2583] ss:$9 sm:$0xff] %v2426
        %2681 = vst [vmem:[%s2585] ss:$9 sm:$0xff] %v2428
        %2682 = vst [vmem:[%s2587] ss:$9 sm:$0xff] %v2429
        %2683 = vst [vmem:[%s2589] ss:$9 sm:$0xff] %v2431
        %2684 = vst [vmem:[%s2591] ss:$9 sm:$0xff] %v2433
        %2685 = vst [vmem:[%s2593] ss:$9 sm:$0xff] %v2435
        %2686 = vst [vmem:[%s2595] ss:$9 sm:$0xff] %v2437
        %v2687 = vld [vmem:[#allocation1] sm:$0xff]
        %v2688 = vld [vmem:[#allocation1 + $0x9] sm:$0xff]
        %2689 = vst [vmem:[#allocation1] ss:$9 sm:$0xff] %v2438
        %2690 = vst [vmem:[%s2583] ss:$9 sm:$0xff] %v2440
        %2691 = vst [vmem:[%s2585] ss:$9 sm:$0xff] %v2442
        %2692 = vst [vmem:[%s2587] ss:$9 sm:$0xff] %v2444
        %2693 = vst [vmem:[%s2589] ss:$9 sm:$0xff] %v2446
        %2694 = vst [vmem:[%s2591] ss:$9 sm:$0xff] %v2447
        %2695 = vst [vmem:[%s2593] ss:$9 sm:$0xff] %v2449
        %2696 = vst [vmem:[%s2595] ss:$9 sm:$0xff] %v2451
        %v2697 = vld [vmem:[#allocation1] sm:$0xff]
        %v2698 = vld [vmem:[#allocation1 + $0x9] sm:$0xff]
        %2699 = vst [vmem:[#allocation1] ss:$9 sm:$0xff] %v2453
        %2700 = vst [vmem:[%s2583] ss:$9 sm:$0xff] %v2455
        %2701 = vst [vmem:[%s2585] ss:$9 sm:$0xff] %v2456
        %2702 = vst [vmem:[%s2587] ss:$9 sm:$0xff] %v2458
        %2703 = vst [vmem:[%s2589] ss:$9 sm:$0xff] %v2460
        %2704 = vst [vmem:[%s2591] ss:$9 sm:$0xff] %v2462
        %2705 = vst [vmem:[%s2593] ss:$9 sm:$0xff] %v2464
        %2706 = vst [vmem:[%s2595] ss:$9 sm:$0xff] %v2465
        %v2707 = vld [vmem:[#allocation1] sm:$0xff]
        %v2708 = vld [vmem:[#allocation1 + $0x9] sm:$0xff]
        %2709 = vst [vmem:[#allocation1] ss:$9 sm:$0xff] %v2467
        %2710 = vst [vmem:[%s2583] ss:$9 sm:$0xff] %v2469
        %2711 = vst [vmem:[%s2585] ss:$9 sm:$0xff] %v2471
        %2712 = vst [vmem:[%s2587] ss:$9 sm:$0xff] %v2473
        %2713 = vst [vmem:[%s2589] ss:$9 sm:$0xff] %v2474
        %2714 = vst [vmem:[%s2591] ss:$9 sm:$0xff] %v2476
        %2715 = vst [vmem:[%s2593] ss:$9 sm:$0xff] %v2478
        %2716 = vst [vmem:[%s2595] ss:$9 sm:$0xff] %v2480
        %v2717 = vld [vmem:[#allocation1] sm:$0xff]
        %v2718 = vld [vmem:[#allocation1 + $0x9] sm:$0xff]
        %2719 = vst [vmem:[#allocation1] ss:$9 sm:$0xff] %v2482
        %2720 = vst [vmem:[%s2583] ss:$9 sm:$0xff] %v2483
        %2721 = vst [vmem:[%s2585] ss:$9 sm:$0xff] %v2485
        %2722 = vst [vmem:[%s2587] ss:$9 sm:$0xff] %v2487
        %2723 = vst [vmem:[%s2589] ss:$9 sm:$0xff] %v2489
        %2724 = vst [vmem:[%s2591] ss:$9 sm:$0xff] %v2491
        %2725 = vst [vmem:[%s2593] ss:$9 sm:$0xff] %v2492
        %2726 = vst [vmem:[%s2595] ss:$9 sm:$0xff] %v2494
        %v2727 = vld [vmem:[#allocation1] sm:$0xff]
        %v2728 = vld [vmem:[#allocation1 + $0x9] sm:$0xff]
        %2729 = vst [vmem:[#allocation1] ss:$9 sm:$0xff] %v2496
        %2730 = vst [vmem:[%s2583] ss:$9 sm:$0xff] %v2498
        %2731 = vst [vmem:[%s2585] ss:$9 sm:$0xff] %v2500
        %2732 = vst [vmem:[%s2587] ss:$9 sm:$0xff] %v2501
        %2733 = vst [vmem:[%s2589] ss:$9 sm:$0xff] %v2503
        %2734 = vst [vmem:[%s2591] ss:$9 sm:$0xff] %v2505
        %2735 = vst [vmem:[%s2593] ss:$9 sm:$0xff] %v2507
        %2736 = vst [vmem:[%s2595] ss:$9 sm:$0xff] %v2509
        %v2737 = vld [vmem:[#allocation1] sm:$0xff]
        %v2738 = vld [vmem:[#allocation1 + $0x9] sm:$0xff]
        %2739 = vst [vmem:[#allocation1] ss:$9 sm:$0xff] %v2510
        %2740 = vst [vmem:[%s2583] ss:$9 sm:$0xff] %v2512
        %2741 = vst [vmem:[%s2585] ss:$9 sm:$0xff] %v2514
        %2742 = vst [vmem:[%s2587] ss:$9 sm:$0xff] %v2516
        %2743 = vst [vmem:[%s2589] ss:$9 sm:$0xff] %v2518
        %2744 = vst [vmem:[%s2591] ss:$9 sm:$0xff] %v2519
        %2745 = vst [vmem:[%s2593] ss:$9 sm:$0xff] %v2521
        %2746 = vst [vmem:[%s2595] ss:$9 sm:$0xff] %v2523
        %v2747 = vld [vmem:[#allocation1] sm:$0xff]
        %v2748 = vld [vmem:[#allocation1 + $0x9] sm:$0xff]
        %2749 = vst [vmem:[#allocation1] ss:$9 sm:$0xff] %v2525
        %2750 = vst [vmem:[%s2583] ss:$9 sm:$0xff] %v2527
        %2751 = vst [vmem:[%s2585] ss:$9 sm:$0xff] %v2528
        %2752 = vst [vmem:[%s2587] ss:$9 sm:$0xff] %v2530
        %2753 = vst [vmem:[%s2589] ss:$9 sm:$0xff] %v2532
        %2754 = vst [vmem:[%s2591] ss:$9 sm:$0xff] %v2534
        %2755 = vst [vmem:[%s2593] ss:$9 sm:$0xff] %v2536
        %2756 = vst [vmem:[%s2595] ss:$9 sm:$0xff] %v2537
        %v2757 = vld [vmem:[#allocation1] sm:$0xff]
        %v2758 = vld [vmem:[#allocation1 + $0x9] sm:$0xff]
        %2759 = vst [vmem:[#allocation1] ss:$9 sm:$0xff] %v2539
        %2760 = vst [vmem:[%s2583] ss:$9 sm:$0xff] %v2541
        %2761 = vst [vmem:[%s2585] ss:$9 sm:$0xff] %v2543
        %2762 = vst [vmem:[%s2587] ss:$9 sm:$0xff] %v2545
        %2763 = vst [vmem:[%s2589] ss:$9 sm:$0xff] %v2546
        %2764 = vst [vmem:[%s2591] ss:$9 sm:$0xff] %v2548
        %2765 = vst [vmem:[%s2593] ss:$9 sm:$0xff] %v2550
        %2766 = vst [vmem:[%s2595] ss:$9 sm:$0xff] %v2552
        %v2767 = vld [vmem:[#allocation1] sm:$0xff]
        %v2768 = vld [vmem:[#allocation1 + $0x9] sm:$0xff]
        %2769 = vst [vmem:[#allocation1] ss:$9 sm:$0xff] %v2554
        %2770 = vst [vmem:[%s2583] ss:$9 sm:$0xff] %v2555
        %2771 = vst [vmem:[%s2585] ss:$9 sm:$0xff] %v2557
        %2772 = vst [vmem:[%s2587] ss:$9 sm:$0xff] %v2559
        %2773 = vst [vmem:[%s2589] ss:$9 sm:$0xff] %v2561
        %2774 = vst [vmem:[%s2591] ss:$9 sm:$0xff] %v2563
        %2775 = vst [vmem:[%s2593] ss:$9 sm:$0xff] %v2564
        %2776 = vst [vmem:[%s2595] ss:$9 sm:$0xff] %v2566
        %v2777 = vld [vmem:[#allocation1] sm:$0xff]
        %v2778 = vld [vmem:[#allocation1 + $0x9] sm:$0xff]
        %2779 = vst [vmem:[#allocation1] ss:$9 sm:$0xff] %v2568
        %2780 = vst [vmem:[%s2583] ss:$9 sm:$0xff] %v2570
        %2781 = vst [vmem:[%s2585] ss:$9 sm:$0xff] %v2572
        %2782 = vst [vmem:[%s2587] ss:$9 sm:$0xff] %v2573
        %2783 = vst [vmem:[%s2589] ss:$9 sm:$0xff] %v2575
        %2784 = vst [vmem:[%s2591] ss:$9 sm:$0xff] %v2577
        %2785 = vst [vmem:[%s2593] ss:$9 sm:$0xff] %v2579
        %2786 = vst [vmem:[%s2595] ss:$9 sm:$0xff] %v2581
        %v2787 = vld [vmem:[#allocation1] sm:$0xff]
        %v2788 = vld [vmem:[#allocation1 + $0x9] sm:$0xff]
        %v2829 = vpack.c.bf16 %v2607, %v2597
        %v2830 = vpack.c.bf16 %v2608, %v2598
        %v2831 = vpack.c.bf16 %v2627, %v2617
        %v2832 = vpack.c.bf16 %v2628, %v2618
        %v2833 = vpack.c.bf16 %v2647, %v2637
        %v2834 = vpack.c.bf16 %v2648, %v2638
        %v2835 = vpack.c.bf16 %v2667, %v2657
        %v2836 = vpack.c.bf16 %v2668, %v2658
        %v2837 = vpack.c.bf16 %v2687, %v2677
        %v2838 = vpack.c.bf16 %v2688, %v2678
        %v2839 = vpack.c.bf16 %v2707, %v2697
        %v2840 = vpack.c.bf16 %v2708, %v2698
        %v2841 = vpack.c.bf16 %v2727, %v2717
        %v2842 = vpack.c.bf16 %v2728, %v2718
        %v2843 = vpack.c.bf16 %v2747, %v2737
        %v2844 = vpack.c.bf16 %v2748, %v2738
        %v2845 = vpack.c.bf16 %v2767, %v2757
        %v2846 = vpack.c.bf16 %v2768, %v2758
        %v2847 = vpack.c.bf16 %v2787, %v2777
        %v2848 = vpack.c.bf16 %v2788, %v2778
        %v2849 = vld [vmem:[%s5] sm:$0xf]
        %v2850 = vld [vmem:[%s5 + $0x4] sm:$0xf]
        %v2851 = vld [vmem:[%s5 + $0x8] sm:$0xf]
        %v2852 = vld [vmem:[%s5 + $0xc] sm:$0xf]
        %v2853 = vld [vmem:[%s5 + $0x10] sm:$0xf]
        %v2854 = vld [vmem:[%s5 + $0x14] sm:$0xf]
        %v2855 = vld [vmem:[%s5 + $0x18] sm:$0xf]
        %v2856 = vld [vmem:[%s5 + $0x1c] sm:$0xf]
        %v2857 = vld [vmem:[%s5 + $0x20] sm:$0xf]
        %v2858 = vld [vmem:[%s5 + $0x24] sm:$0xf]
        %v2859 = vld [vmem:[%s5 + $0x28] sm:$0xf]
        %v2860 = vld [vmem:[%s5 + $0x2c] sm:$0xf]
        %v2861 = vld [vmem:[%s5 + $0x30] sm:$0xf]
        %v2862 = vld [vmem:[%s5 + $0x34] sm:$0xf]
        %v2863 = vld [vmem:[%s5 + $0x38] sm:$0xf]
        %v2864 = vld [vmem:[%s5 + $0x3c] sm:$0xf]
        %v2865 = vld [vmem:[%s5 + $0x40] sm:$0xf]
        %v2866 = vld [vmem:[%s5 + $0x44] sm:$0xf]
        %v2867 = vld [vmem:[%s5 + $0x48] sm:$0xf]
        %v2868 = vld [vmem:[%s5 + $0x4c] sm:$0xf]
        %v2869 = vld [vmem:[%s5 + $0x50] sm:$0xf]
        %v2870 = vld [vmem:[%s5 + $0x54] sm:$0xf]
        %v2871 = vld [vmem:[%s5 + $0x58] sm:$0xf]
        %v2872 = vld [vmem:[%s5 + $0x5c] sm:$0xf]
        %v2873 = vld [vmem:[%s5 + $0x60] sm:$0xf]
        %v2874 = vld [vmem:[%s5 + $0x64] sm:$0xf]
        %v2875 = vld [vmem:[%s5 + $0x68] sm:$0xf]
        %v2876 = vld [vmem:[%s5 + $0x6c] sm:$0xf]
        %v2877 = vld [vmem:[%s5 + $0x70] sm:$0xf]
        %v2878 = vld [vmem:[%s5 + $0x74] sm:$0xf]
        %v2879 = vld [vmem:[%s5 + $0x78] sm:$0xf]
        %v2880 = vld [vmem:[%s5 + $0x7c] sm:$0xf]
        %v2881 = vld [vmem:[%s6] sm:$0x1]
        %v2883 = vperm.slane %v2881, 0
        %v2917 = vunpack.c.l.b16 %v2849
        %v2918 = vunpack.c.l.b16 %v2850
        %v2919 = vunpack.c.l.b16 %v2851
        %v2920 = vunpack.c.l.b16 %v2852
        %v2921 = vunpack.c.l.b16 %v2853
        %v2922 = vunpack.c.l.b16 %v2854
        %v2923 = vunpack.c.l.b16 %v2855
        %v2924 = vunpack.c.l.b16 %v2856
        %v2925 = vunpack.c.l.b16 %v2857
        %v2926 = vunpack.c.l.b16 %v2858
        %v2927 = vunpack.c.l.b16 %v2859
        %v2928 = vunpack.c.l.b16 %v2860
        %v2929 = vunpack.c.l.b16 %v2861
        %v2930 = vunpack.c.l.b16 %v2862
        %v2931 = vunpack.c.l.b16 %v2863
        %v2932 = vunpack.c.l.b16 %v2864
        %v2933 = vunpack.c.l.b16 %v2865
        %v2934 = vunpack.c.l.b16 %v2866
        %v2935 = vunpack.c.l.b16 %v2867
        %v2936 = vunpack.c.l.b16 %v2868
        %v2937 = vunpack.c.l.b16 %v2869
        %v2938 = vunpack.c.l.b16 %v2870
        %v2939 = vunpack.c.l.b16 %v2871
        %v2940 = vunpack.c.l.b16 %v2872
        %v2941 = vunpack.c.l.b16 %v2873
        %v2942 = vunpack.c.l.b16 %v2874
        %v2943 = vunpack.c.l.b16 %v2875
        %v2944 = vunpack.c.l.b16 %v2876
        %v2945 = vunpack.c.l.b16 %v2877
        %v2946 = vunpack.c.l.b16 %v2878
        %v2947 = vunpack.c.l.b16 %v2879
        %v2948 = vunpack.c.l.b16 %v2880
        %v2949 = vpack.c.b16 %v2918, %v2917
        %v2950 = vpack.c.b16 %v2920, %v2919
        %v2951 = vpack.c.b16 %v2922, %v2921
        %v2952 = vpack.c.b16 %v2924, %v2923
        %v2953 = vpack.c.b16 %v2926, %v2925
        %v2954 = vpack.c.b16 %v2928, %v2927
        %v2955 = vpack.c.b16 %v2930, %v2929
        %v2956 = vpack.c.b16 %v2932, %v2931
        %v2957 = vpack.c.b16 %v2934, %v2933
        %v2958 = vpack.c.b16 %v2936, %v2935
        %v2959 = vpack.c.b16 %v2938, %v2937
        %v2960 = vpack.c.b16 %v2940, %v2939
        %v2961 = vpack.c.b16 %v2942, %v2941
        %v2962 = vpack.c.b16 %v2944, %v2943
        %v2963 = vpack.c.b16 %v2946, %v2945
        %v2964 = vpack.c.b16 %v2948, %v2947
        %2981 = vmatpush.bf16.msra.mxu0 %v2956
        %2982 = vmatpush.bf16.msra.mxu0 %v2955
        %2983 = vmatpush.bf16.msra.mxu0 %v2954
        %2984 = vmatpush.bf16.msra.mxu0 %v2953
        %2985 = vmatpush.bf16.msra.mxu0 %v2952
        %2986 = vmatpush.bf16.msra.mxu0 %v2951
        %2987 = vmatpush.bf16.msra.mxu0 %v2950
        %2988 = vmatpush.bf16.msra.mxu0 %v2949
        %2989 = vmatmul.bf16.gmra.mxu0 %v2829
        %v2990 = vpop.f32.mrf.mxu0
        %v2991 = vadd.f32 %v2883, %v2990
        %v2992 = vpop.f32.mrf.mxu0
        %v2993 = vadd.f32 %v2883, %v2992
        %2994 = vmatmul.bf16.gmra.mxu0 %v2831
        %v2995 = vpop.f32.mrf.mxu0
        %v2996 = vadd.f32 %v2883, %v2995
        %v2997 = vpop.f32.mrf.mxu0
        %v2998 = vadd.f32 %v2883, %v2997
        %2999 = vmatmul.bf16.gmra.mxu0 %v2833
        %v3000 = vpop.f32.mrf.mxu0
        %v3001 = vadd.f32 %v2883, %v3000
        %v3002 = vpop.f32.mrf.mxu0
        %v3003 = vadd.f32 %v2883, %v3002
        %3004 = vmatmul.bf16.gmra.mxu0 %v2835
        %v3005 = vpop.f32.mrf.mxu0
        %v3006 = vadd.f32 %v2883, %v3005
        %v3007 = vpop.f32.mrf.mxu0
        %v3008 = vadd.f32 %v2883, %v3007
        %3009 = vmatmul.bf16.gmra.mxu0 %v2837
        %v3010 = vpop.f32.mrf.mxu0
        %v3011 = vadd.f32 %v2883, %v3010
        %v3012 = vpop.f32.mrf.mxu0
        %v3013 = vadd.f32 %v2883, %v3012
        %3014 = vmatmul.bf16.gmra.mxu0 %v2839
        %v3015 = vpop.f32.mrf.mxu0
        %v3016 = vadd.f32 %v2883, %v3015
        %v3017 = vpop.f32.mrf.mxu0
        %v3018 = vadd.f32 %v2883, %v3017
        %3019 = vmatmul.bf16.gmra.mxu0 %v2841
        %v3020 = vpop.f32.mrf.mxu0
        %v3021 = vadd.f32 %v2883, %v3020
        %v3022 = vpop.f32.mrf.mxu0
        %v3023 = vadd.f32 %v2883, %v3022
        %3024 = vmatmul.bf16.gmra.mxu0 %v2843
        %v3025 = vpop.f32.mrf.mxu0
        %v3026 = vadd.f32 %v2883, %v3025
        %v3027 = vpop.f32.mrf.mxu0
        %v3028 = vadd.f32 %v2883, %v3027
        %3029 = vmatmul.bf16.gmra.mxu0 %v2845
        %v3030 = vpop.f32.mrf.mxu0
        %v3031 = vadd.f32 %v2883, %v3030
        %v3032 = vpop.f32.mrf.mxu0
        %v3033 = vadd.f32 %v2883, %v3032
        %3034 = vmatmul.bf16.gmra.mxu0 %v2847
        %v3035 = vpop.f32.mrf.mxu0
        %v3036 = vadd.f32 %v2883, %v3035
        %v3037 = vpop.f32.mrf.mxu0
        %v3038 = vadd.f32 %v2883, %v3037
        %3039 = vdwg.mxu0
        %3040 = vmatpush.bf16.msra.mxu0 %v2964
        %3041 = vmatpush.bf16.msra.mxu0 %v2963
        %3042 = vmatpush.bf16.msra.mxu0 %v2962
        %3043 = vmatpush.bf16.msra.mxu0 %v2961
        %3044 = vmatpush.bf16.msra.mxu0 %v2960
        %3045 = vmatpush.bf16.msra.mxu0 %v2959
        %3046 = vmatpush.bf16.msra.mxu0 %v2958
        %3047 = vmatpush.bf16.msra.mxu0 %v2957
        %3048 = vmatmul.bf16.gmra.mxu0 %v2830
        %v3049 = vpop.f32.mrf.mxu0
        %v3050 = vadd.f32 %v2991, %v3049
        %v3051 = vpop.f32.mrf.mxu0
        %v3052 = vadd.f32 %v2993, %v3051
        %3053 = vmatmul.bf16.gmra.mxu0 %v2832
        %v3054 = vpop.f32.mrf.mxu0
        %v3055 = vadd.f32 %v2996, %v3054
        %v3056 = vpop.f32.mrf.mxu0
        %v3057 = vadd.f32 %v2998, %v3056
        %3058 = vmatmul.bf16.gmra.mxu0 %v2834
        %v3059 = vpop.f32.mrf.mxu0
        %v3060 = vadd.f32 %v3001, %v3059
        %v3061 = vpop.f32.mrf.mxu0
        %v3062 = vadd.f32 %v3003, %v3061
        %3063 = vmatmul.bf16.gmra.mxu0 %v2836
        %v3064 = vpop.f32.mrf.mxu0
        %v3065 = vadd.f32 %v3006, %v3064
        %v3066 = vpop.f32.mrf.mxu0
        %v3067 = vadd.f32 %v3008, %v3066
        %3068 = vmatmul.bf16.gmra.mxu0 %v2838
        %v3069 = vpop.f32.mrf.mxu0
        %v3070 = vadd.f32 %v3011, %v3069
        %v3071 = vpop.f32.mrf.mxu0
        %v3072 = vadd.f32 %v3013, %v3071
        %3073 = vmatmul.bf16.gmra.mxu0 %v2840
        %v3074 = vpop.f32.mrf.mxu0
        %v3075 = vadd.f32 %v3016, %v3074
        %v3076 = vpop.f32.mrf.mxu0
        %v3077 = vadd.f32 %v3018, %v3076
        %3078 = vmatmul.bf16.gmra.mxu0 %v2842
        %v3079 = vpop.f32.mrf.mxu0
        %v3080 = vadd.f32 %v3021, %v3079
        %v3081 = vpop.f32.mrf.mxu0
        %v3082 = vadd.f32 %v3023, %v3081
        %3083 = vmatmul.bf16.gmra.mxu0 %v2844
        %v3084 = vpop.f32.mrf.mxu0
        %v3085 = vadd.f32 %v3026, %v3084
        %v3086 = vpop.f32.mrf.mxu0
        %v3087 = vadd.f32 %v3028, %v3086
        %3088 = vmatmul.bf16.gmra.mxu0 %v2846
        %v3089 = vpop.f32.mrf.mxu0
        %v3090 = vadd.f32 %v3031, %v3089
        %v3091 = vpop.f32.mrf.mxu0
        %v3092 = vadd.f32 %v3033, %v3091
        %3093 = vmatmul.bf16.gmra.mxu0 %v2848
        %v3094 = vpop.f32.mrf.mxu0
        %v3095 = vadd.f32 %v3036, %v3094
        %v3096 = vpop.f32.mrf.mxu0
        %v3097 = vadd.f32 %v3038, %v3096
        %3098 = vdwg.mxu0
        %v3099 = vmax.f32 %v3050, 0.0
        %v3100 = vmax.f32 %v3052, 0.0
        %v3101 = vmax.f32 %v3055, 0.0
        %v3102 = vmax.f32 %v3057, 0.0
        %v3103 = vmax.f32 %v3060, 0.0
        %v3104 = vmax.f32 %v3062, 0.0
        %v3105 = vmax.f32 %v3065, 0.0
        %v3106 = vmax.f32 %v3067, 0.0
        %v3107 = vmax.f32 %v3070, 0.0
        %v3108 = vmax.f32 %v3072, 0.0
        %v3109 = vmax.f32 %v3075, 0.0
        %v3110 = vmax.f32 %v3077, 0.0
        %v3111 = vmax.f32 %v3080, 0.0
        %v3112 = vmax.f32 %v3082, 0.0
        %v3113 = vmax.f32 %v3085, 0.0
        %v3114 = vmax.f32 %v3087, 0.0
        %v3115 = vmax.f32 %v3090, 0.0
        %v3116 = vmax.f32 %v3092, 0.0
        %v3117 = vmax.f32 %v3095, 0.0
        %v3118 = vmax.f32 %v3097, 0.0
        %v3139 = vrot.slane %v3099, 1
        %v3140 = vrot.slane %v3099, 2
        %v3141 = vrot.slane %v3099, 3
        %v3142 = vrot.slane %v3099, 4
        %v3143 = vrot.slane %v3099, 5
        %v3144 = vrot.slane %v3099, 6
        %v3145 = vrot.slane %v3099, 7
        %v3146 = vrot.slane %v3100, 1
        %v3147 = vrot.slane %v3100, 2
        %v3148 = vrot.slane %v3100, 3
        %v3149 = vrot.slane %v3100, 4
        %v3150 = vrot.slane %v3100, 5
        %v3151 = vrot.slane %v3100, 6
        %v3152 = vrot.slane %v3100, 7
        %v3153 = vrot.slane %v3101, 1
        %v3154 = vrot.slane %v3101, 2
        %v3155 = vrot.slane %v3101, 3
        %v3156 = vrot.slane %v3101, 4
        %v3157 = vrot.slane %v3101, 5
        %v3158 = vrot.slane %v3101, 6
        %v3159 = vrot.slane %v3101, 7
        %v3160 = vrot.slane %v3102, 1
        %v3161 = vrot.slane %v3102, 2
        %v3162 = vrot.slane %v3102, 3
        %v3163 = vrot.slane %v3102, 4
        %v3164 = vrot.slane %v3102, 5
        %v3165 = vrot.slane %v3102, 6
        %v3166 = vrot.slane %v3102, 7
        %v3167 = vrot.slane %v3103, 1
        %v3168 = vrot.slane %v3103, 2
        %v3169 = vrot.slane %v3103, 3
        %v3170 = vrot.slane %v3103, 4
        %v3171 = vrot.slane %v3103, 5
        %v3172 = vrot.slane %v3103, 6
        %v3173 = vrot.slane %v3103, 7
        %v3174 = vrot.slane %v3104, 1
        %v3175 = vrot.slane %v3104, 2
        %v3176 = vrot.slane %v3104, 3
        %v3177 = vrot.slane %v3104, 4
        %v3178 = vrot.slane %v3104, 5
        %v3179 = vrot.slane %v3104, 6
        %v3180 = vrot.slane %v3104, 7
        %v3181 = vrot.slane %v3105, 1
        %v3182 = vrot.slane %v3105, 2
        %v3183 = vrot.slane %v3105, 3
        %v3184 = vrot.slane %v3105, 4
        %v3185 = vrot.slane %v3105, 5
        %v3186 = vrot.slane %v3105, 6
        %v3187 = vrot.slane %v3105, 7
        %v3188 = vrot.slane %v3106, 1
        %v3189 = vrot.slane %v3106, 2
        %v3190 = vrot.slane %v3106, 3
        %v3191 = vrot.slane %v3106, 4
        %v3192 = vrot.slane %v3106, 5
        %v3193 = vrot.slane %v3106, 6
        %v3194 = vrot.slane %v3106, 7
        %v3195 = vrot.slane %v3107, 1
        %v3196 = vrot.slane %v3107, 2
        %v3197 = vrot.slane %v3107, 3
        %v3198 = vrot.slane %v3107, 4
        %v3199 = vrot.slane %v3107, 5
        %v3200 = vrot.slane %v3107, 6
        %v3201 = vrot.slane %v3107, 7
        %v3202 = vrot.slane %v3108, 1
        %v3203 = vrot.slane %v3108, 2
        %v3204 = vrot.slane %v3108, 3
        %v3205 = vrot.slane %v3108, 4
        %v3206 = vrot.slane %v3108, 5
        %v3207 = vrot.slane %v3108, 6
        %v3208 = vrot.slane %v3108, 7
        %v3209 = vrot.slane %v3109, 1
        %v3210 = vrot.slane %v3109, 2
        %v3211 = vrot.slane %v3109, 3
        %v3212 = vrot.slane %v3109, 4
        %v3213 = vrot.slane %v3109, 5
        %v3214 = vrot.slane %v3109, 6
        %v3215 = vrot.slane %v3109, 7
        %v3216 = vrot.slane %v3110, 1
        %v3217 = vrot.slane %v3110, 2
        %v3218 = vrot.slane %v3110, 3
        %v3219 = vrot.slane %v3110, 4
        %v3220 = vrot.slane %v3110, 5
        %v3221 = vrot.slane %v3110, 6
        %v3222 = vrot.slane %v3110, 7
        %v3223 = vrot.slane %v3111, 1
        %v3224 = vrot.slane %v3111, 2
        %v3225 = vrot.slane %v3111, 3
        %v3226 = vrot.slane %v3111, 4
        %v3227 = vrot.slane %v3111, 5
        %v3228 = vrot.slane %v3111, 6
        %v3229 = vrot.slane %v3111, 7
        %v3230 = vrot.slane %v3112, 1
        %v3231 = vrot.slane %v3112, 2
        %v3232 = vrot.slane %v3112, 3
        %v3233 = vrot.slane %v3112, 4
        %v3234 = vrot.slane %v3112, 5
        %v3235 = vrot.slane %v3112, 6
        %v3236 = vrot.slane %v3112, 7
        %v3237 = vrot.slane %v3113, 1
        %v3238 = vrot.slane %v3113, 2
        %v3239 = vrot.slane %v3113, 3
        %v3240 = vrot.slane %v3113, 4
        %v3241 = vrot.slane %v3113, 5
        %v3242 = vrot.slane %v3113, 6
        %v3243 = vrot.slane %v3113, 7
        %v3244 = vrot.slane %v3114, 1
        %v3245 = vrot.slane %v3114, 2
        %v3246 = vrot.slane %v3114, 3
        %v3247 = vrot.slane %v3114, 4
        %v3248 = vrot.slane %v3114, 5
        %v3249 = vrot.slane %v3114, 6
        %v3250 = vrot.slane %v3114, 7
        %v3251 = vrot.slane %v3115, 1
        %v3252 = vrot.slane %v3115, 2
        %v3253 = vrot.slane %v3115, 3
        %v3254 = vrot.slane %v3115, 4
        %v3255 = vrot.slane %v3115, 5
        %v3256 = vrot.slane %v3115, 6
        %v3257 = vrot.slane %v3115, 7
        %v3258 = vrot.slane %v3116, 1
        %v3259 = vrot.slane %v3116, 2
        %v3260 = vrot.slane %v3116, 3
        %v3261 = vrot.slane %v3116, 4
        %v3262 = vrot.slane %v3116, 5
        %v3263 = vrot.slane %v3116, 6
        %v3264 = vrot.slane %v3116, 7
        %v3265 = vrot.slane %v3117, 1
        %v3266 = vrot.slane %v3117, 2
        %v3267 = vrot.slane %v3117, 3
        %v3268 = vrot.slane %v3117, 4
        %v3269 = vrot.slane %v3117, 5
        %v3270 = vrot.slane %v3117, 6
        %v3271 = vrot.slane %v3117, 7
        %v3272 = vrot.slane %v3118, 1
        %v3273 = vrot.slane %v3118, 2
        %v3274 = vrot.slane %v3118, 3
        %v3275 = vrot.slane %v3118, 4
        %v3276 = vrot.slane %v3118, 5
        %v3277 = vrot.slane %v3118, 6
        %v3278 = vrot.slane %v3118, 7
        %3279 = vst [vmem:[#allocation1] ss:$9 sm:$0xff] %v3099
        %s3280 = scalar_lea.vmem [#allocation1], 1
        %3281 = vst [vmem:[%s3280] ss:$9 sm:$0xff] %v3139
        %s3282 = scalar_lea.vmem [#allocation1], 2
        %3283 = vst [vmem:[%s3282] ss:$9 sm:$0xff] %v3140
        %s3284 = scalar_lea.vmem [#allocation1], 3
        %3285 = vst [vmem:[%s3284] ss:$9 sm:$0xff] %v3141
        %s3286 = scalar_lea.vmem [#allocation1], 4
        %3287 = vst [vmem:[%s3286] ss:$9 sm:$0xff] %v3142
        %v3288 = vld [vmem:[#allocation1] sm:$0xff]
        %3289 = vst [vmem:[#allocation1] ss:$9 sm:$0xff] %v3143
        %3290 = vst [vmem:[%s3280] ss:$9 sm:$0xff] %v3144
        %3291 = vst [vmem:[%s3282] ss:$9 sm:$0xff] %v3145
        %3292 = vst [vmem:[%s3284] ss:$9 sm:$0xff] %v3100
        %3293 = vst [vmem:[%s3286] ss:$9 sm:$0xff] %v3146
        %v3294 = vld [vmem:[#allocation1] sm:$0xff]
        %3295 = vst [vmem:[#allocation1] ss:$9 sm:$0xff] %v3147
        %3296 = vst [vmem:[%s3280] ss:$9 sm:$0xff] %v3148
        %3297 = vst [vmem:[%s3282] ss:$9 sm:$0xff] %v3149
        %3298 = vst [vmem:[%s3284] ss:$9 sm:$0xff] %v3150
        %3299 = vst [vmem:[%s3286] ss:$9 sm:$0xff] %v3151
        %v3300 = vld [vmem:[#allocation1] sm:$0xff]
        %3301 = vst [vmem:[#allocation1] ss:$9 sm:$0xff] %v3152
        %3302 = vst [vmem:[%s3280] ss:$9 sm:$0xff] %v3101
        %3303 = vst [vmem:[%s3282] ss:$9 sm:$0xff] %v3153
        %3304 = vst [vmem:[%s3284] ss:$9 sm:$0xff] %v3154
        %3305 = vst [vmem:[%s3286] ss:$9 sm:$0xff] %v3155
        %v3306 = vld [vmem:[#allocation1] sm:$0xff]
        %3307 = vst [vmem:[#allocation1] ss:$9 sm:$0xff] %v3156
        %3308 = vst [vmem:[%s3280] ss:$9 sm:$0xff] %v3157
        %3309 = vst [vmem:[%s3282] ss:$9 sm:$0xff] %v3158
        %3310 = vst [vmem:[%s3284] ss:$9 sm:$0xff] %v3159
        %3311 = vst [vmem:[%s3286] ss:$9 sm:$0xff] %v3102
        %v3312 = vld [vmem:[#allocation1] sm:$0xff]
        %3313 = vst [vmem:[#allocation1] ss:$9 sm:$0xff] %v3160
        %3314 = vst [vmem:[%s3280] ss:$9 sm:$0xff] %v3161
        %3315 = vst [vmem:[%s3282] ss:$9 sm:$0xff] %v3162
        %3316 = vst [vmem:[%s3284] ss:$9 sm:$0xff] %v3163
        %3317 = vst [vmem:[%s3286] ss:$9 sm:$0xff] %v3164
        %v3318 = vld [vmem:[#allocation1] sm:$0xff]
        %3319 = vst [vmem:[#allocation1] ss:$9 sm:$0xff] %v3165
        %3320 = vst [vmem:[%s3280] ss:$9 sm:$0xff] %v3166
        %3321 = vst [vmem:[%s3282] ss:$9 sm:$0xff] %v3103
        %3322 = vst [vmem:[%s3284] ss:$9 sm:$0xff] %v3167
        %3323 = vst [vmem:[%s3286] ss:$9 sm:$0xff] %v3168
        %v3324 = vld [vmem:[#allocation1] sm:$0xff]
        %3325 = vst [vmem:[#allocation1] ss:$9 sm:$0xff] %v3169
        %3326 = vst [vmem:[%s3280] ss:$9 sm:$0xff] %v3170
        %3327 = vst [vmem:[%s3282] ss:$9 sm:$0xff] %v3171
        %3328 = vst [vmem:[%s3284] ss:$9 sm:$0xff] %v3172
        %3329 = vst [vmem:[%s3286] ss:$9 sm:$0xff] %v3173
        %v3330 = vld [vmem:[#allocation1] sm:$0xff]
        %3331 = vst [vmem:[#allocation1] ss:$9 sm:$0xff] %v3104
        %3332 = vst [vmem:[%s3280] ss:$9 sm:$0xff] %v3174
        %3333 = vst [vmem:[%s3282] ss:$9 sm:$0xff] %v3175
        %3334 = vst [vmem:[%s3284] ss:$9 sm:$0xff] %v3176
        %3335 = vst [vmem:[%s3286] ss:$9 sm:$0xff] %v3177
        %v3336 = vld [vmem:[#allocation1] sm:$0xff]
        %3337 = vst [vmem:[#allocation1] ss:$9 sm:$0xff] %v3178
        %3338 = vst [vmem:[%s3280] ss:$9 sm:$0xff] %v3179
        %3339 = vst [vmem:[%s3282] ss:$9 sm:$0xff] %v3180
        %3340 = vst [vmem:[%s3284] ss:$9 sm:$0xff] %v3105
        %3341 = vst [vmem:[%s3286] ss:$9 sm:$0xff] %v3181
        %v3342 = vld [vmem:[#allocation1] sm:$0xff]
        %3343 = vst [vmem:[#allocation1] ss:$9 sm:$0xff] %v3182
        %3344 = vst [vmem:[%s3280] ss:$9 sm:$0xff] %v3183
        %3345 = vst [vmem:[%s3282] ss:$9 sm:$0xff] %v3184
        %3346 = vst [vmem:[%s3284] ss:$9 sm:$0xff] %v3185
        %3347 = vst [vmem:[%s3286] ss:$9 sm:$0xff] %v3186
        %v3348 = vld [vmem:[#allocation1] sm:$0xff]
        %3349 = vst [vmem:[#allocation1] ss:$9 sm:$0xff] %v3187
        %3350 = vst [vmem:[%s3280] ss:$9 sm:$0xff] %v3106
        %3351 = vst [vmem:[%s3282] ss:$9 sm:$0xff] %v3188
        %3352 = vst [vmem:[%s3284] ss:$9 sm:$0xff] %v3189
        %3353 = vst [vmem:[%s3286] ss:$9 sm:$0xff] %v3190
        %v3354 = vld [vmem:[#allocation1] sm:$0xff]
        %3355 = vst [vmem:[#allocation1] ss:$9 sm:$0xff] %v3191
        %3356 = vst [vmem:[%s3280] ss:$9 sm:$0xff] %v3192
        %3357 = vst [vmem:[%s3282] ss:$9 sm:$0xff] %v3193
        %3358 = vst [vmem:[%s3284] ss:$9 sm:$0xff] %v3194
        %3359 = vst [vmem:[%s3286] ss:$9 sm:$0xff] %v3107
        %v3360 = vld [vmem:[#allocation1] sm:$0xff]
        %3361 = vst [vmem:[#allocation1] ss:$9 sm:$0xff] %v3195
        %3362 = vst [vmem:[%s3280] ss:$9 sm:$0xff] %v3196
        %3363 = vst [vmem:[%s3282] ss:$9 sm:$0xff] %v3197
        %3364 = vst [vmem:[%s3284] ss:$9 sm:$0xff] %v3198
        %3365 = vst [vmem:[%s3286] ss:$9 sm:$0xff] %v3199
        %v3366 = vld [vmem:[#allocation1] sm:$0xff]
        %3367 = vst [vmem:[#allocation1] ss:$9 sm:$0xff] %v3200
        %3368 = vst [vmem:[%s3280] ss:$9 sm:$0xff] %v3201
        %3369 = vst [vmem:[%s3282] ss:$9 sm:$0xff] %v3108
        %3370 = vst [vmem:[%s3284] ss:$9 sm:$0xff] %v3202
        %3371 = vst [vmem:[%s3286] ss:$9 sm:$0xff] %v3203
        %v3372 = vld [vmem:[#allocation1] sm:$0xff]
        %3373 = vst [vmem:[#allocation1] ss:$9 sm:$0xff] %v3204
        %3374 = vst [vmem:[%s3280] ss:$9 sm:$0xff] %v3205
        %3375 = vst [vmem:[%s3282] ss:$9 sm:$0xff] %v3206
        %3376 = vst [vmem:[%s3284] ss:$9 sm:$0xff] %v3207
        %3377 = vst [vmem:[%s3286] ss:$9 sm:$0xff] %v3208
        %v3378 = vld [vmem:[#allocation1] sm:$0xff]
        %3379 = vst [vmem:[#allocation1] ss:$9 sm:$0xff] %v3109
        %3380 = vst [vmem:[%s3280] ss:$9 sm:$0xff] %v3209
        %3381 = vst [vmem:[%s3282] ss:$9 sm:$0xff] %v3210
        %3382 = vst [vmem:[%s3284] ss:$9 sm:$0xff] %v3211
        %3383 = vst [vmem:[%s3286] ss:$9 sm:$0xff] %v3212
        %v3384 = vld [vmem:[#allocation1] sm:$0xff]
        %3385 = vst [vmem:[#allocation1] ss:$9 sm:$0xff] %v3213
        %3386 = vst [vmem:[%s3280] ss:$9 sm:$0xff] %v3214
        %3387 = vst [vmem:[%s3282] ss:$9 sm:$0xff] %v3215
        %3388 = vst [vmem:[%s3284] ss:$9 sm:$0xff] %v3110
        %3389 = vst [vmem:[%s3286] ss:$9 sm:$0xff] %v3216
        %v3390 = vld [vmem:[#allocation1] sm:$0xff]
        %3391 = vst [vmem:[#allocation1] ss:$9 sm:$0xff] %v3217
        %3392 = vst [vmem:[%s3280] ss:$9 sm:$0xff] %v3218
        %3393 = vst [vmem:[%s3282] ss:$9 sm:$0xff] %v3219
        %3394 = vst [vmem:[%s3284] ss:$9 sm:$0xff] %v3220
        %3395 = vst [vmem:[%s3286] ss:$9 sm:$0xff] %v3221
        %v3396 = vld [vmem:[#allocation1] sm:$0xff]
        %3397 = vst [vmem:[#allocation1] ss:$9 sm:$0xff] %v3222
        %3398 = vst [vmem:[%s3280] ss:$9 sm:$0xff] %v3111
        %3399 = vst [vmem:[%s3282] ss:$9 sm:$0xff] %v3223
        %3400 = vst [vmem:[%s3284] ss:$9 sm:$0xff] %v3224
        %3401 = vst [vmem:[%s3286] ss:$9 sm:$0xff] %v3225
        %v3402 = vld [vmem:[#allocation1] sm:$0xff]
        %3403 = vst [vmem:[#allocation1] ss:$9 sm:$0xff] %v3226
        %3404 = vst [vmem:[%s3280] ss:$9 sm:$0xff] %v3227
        %3405 = vst [vmem:[%s3282] ss:$9 sm:$0xff] %v3228
        %3406 = vst [vmem:[%s3284] ss:$9 sm:$0xff] %v3229
        %3407 = vst [vmem:[%s3286] ss:$9 sm:$0xff] %v3112
        %v3408 = vld [vmem:[#allocation1] sm:$0xff]
        %3409 = vst [vmem:[#allocation1] ss:$9 sm:$0xff] %v3230
        %3410 = vst [vmem:[%s3280] ss:$9 sm:$0xff] %v3231
        %3411 = vst [vmem:[%s3282] ss:$9 sm:$0xff] %v3232
        %3412 = vst [vmem:[%s3284] ss:$9 sm:$0xff] %v3233
        %3413 = vst [vmem:[%s3286] ss:$9 sm:$0xff] %v3234
        %v3414 = vld [vmem:[#allocation1] sm:$0xff]
        %3415 = vst [vmem:[#allocation1] ss:$9 sm:$0xff] %v3235
        %3416 = vst [vmem:[%s3280] ss:$9 sm:$0xff] %v3236
        %3417 = vst [vmem:[%s3282] ss:$9 sm:$0xff] %v3113
        %3418 = vst [vmem:[%s3284] ss:$9 sm:$0xff] %v3237
        %3419 = vst [vmem:[%s3286] ss:$9 sm:$0xff] %v3238
        %v3420 = vld [vmem:[#allocation1] sm:$0xff]
        %3421 = vst [vmem:[#allocation1] ss:$9 sm:$0xff] %v3239
        %3422 = vst [vmem:[%s3280] ss:$9 sm:$0xff] %v3240
        %3423 = vst [vmem:[%s3282] ss:$9 sm:$0xff] %v3241
        %3424 = vst [vmem:[%s3284] ss:$9 sm:$0xff] %v3242
        %3425 = vst [vmem:[%s3286] ss:$9 sm:$0xff] %v3243
        %v3426 = vld [vmem:[#allocation1] sm:$0xff]
        %3427 = vst [vmem:[#allocation1] ss:$9 sm:$0xff] %v3114
        %3428 = vst [vmem:[%s3280] ss:$9 sm:$0xff] %v3244
        %3429 = vst [vmem:[%s3282] ss:$9 sm:$0xff] %v3245
        %3430 = vst [vmem:[%s3284] ss:$9 sm:$0xff] %v3246
        %3431 = vst [vmem:[%s3286] ss:$9 sm:$0xff] %v3247
        %v3432 = vld [vmem:[#allocation1] sm:$0xff]
        %3433 = vst [vmem:[#allocation1] ss:$9 sm:$0xff] %v3248
        %3434 = vst [vmem:[%s3280] ss:$9 sm:$0xff] %v3249
        %3435 = vst [vmem:[%s3282] ss:$9 sm:$0xff] %v3250
        %3436 = vst [vmem:[%s3284] ss:$9 sm:$0xff] %v3115
        %3437 = vst [vmem:[%s3286] ss:$9 sm:$0xff] %v3251
        %v3438 = vld [vmem:[#allocation1] sm:$0xff]
        %3439 = vst [vmem:[#allocation1] ss:$9 sm:$0xff] %v3252
        %3440 = vst [vmem:[%s3280] ss:$9 sm:$0xff] %v3253
        %3441 = vst [vmem:[%s3282] ss:$9 sm:$0xff] %v3254
        %3442 = vst [vmem:[%s3284] ss:$9 sm:$0xff] %v3255
        %3443 = vst [vmem:[%s3286] ss:$9 sm:$0xff] %v3256
        %v3444 = vld [vmem:[#allocation1] sm:$0xff]
        %3445 = vst [vmem:[#allocation1] ss:$9 sm:$0xff] %v3257
        %3446 = vst [vmem:[%s3280] ss:$9 sm:$0xff] %v3116
        %3447 = vst [vmem:[%s3282] ss:$9 sm:$0xff] %v3258
        %3448 = vst [vmem:[%s3284] ss:$9 sm:$0xff] %v3259
        %3449 = vst [vmem:[%s3286] ss:$9 sm:$0xff] %v3260
        %v3450 = vld [vmem:[#allocation1] sm:$0xff]
        %3451 = vst [vmem:[#allocation1] ss:$9 sm:$0xff] %v3261
        %3452 = vst [vmem:[%s3280] ss:$9 sm:$0xff] %v3262
        %3453 = vst [vmem:[%s3282] ss:$9 sm:$0xff] %v3263
        %3454 = vst [vmem:[%s3284] ss:$9 sm:$0xff] %v3264
        %3455 = vst [vmem:[%s3286] ss:$9 sm:$0xff] %v3117
        %v3456 = vld [vmem:[#allocation1] sm:$0xff]
        %3457 = vst [vmem:[#allocation1] ss:$9 sm:$0xff] %v3265
        %3458 = vst [vmem:[%s3280] ss:$9 sm:$0xff] %v3266
        %3459 = vst [vmem:[%s3282] ss:$9 sm:$0xff] %v3267
        %3460 = vst [vmem:[%s3284] ss:$9 sm:$0xff] %v3268
        %3461 = vst [vmem:[%s3286] ss:$9 sm:$0xff] %v3269
        %v3462 = vld [vmem:[#allocation1] sm:$0xff]
        %3463 = vst [vmem:[#allocation1] ss:$9 sm:$0xff] %v3270
        %3464 = vst [vmem:[%s3280] ss:$9 sm:$0xff] %v3271
        %3465 = vst [vmem:[%s3282] ss:$9 sm:$0xff] %v3118
        %3466 = vst [vmem:[%s3284] ss:$9 sm:$0xff] %v3272
        %3467 = vst [vmem:[%s3286] ss:$9 sm:$0xff] %v3273
        %v3468 = vld [vmem:[#allocation1] sm:$0xff]
        %3469 = vst [vmem:[#allocation1] ss:$9 sm:$0xff] %v3274
        %3470 = vst [vmem:[%s3280] ss:$9 sm:$0xff] %v3275
        %3471 = vst [vmem:[%s3282] ss:$9 sm:$0xff] %v3276
        %3472 = vst [vmem:[%s3284] ss:$9 sm:$0xff] %v3277
        %3473 = vst [vmem:[%s3286] ss:$9 sm:$0xff] %v3278
        %v3474 = vld [vmem:[#allocation1] sm:$0xff]
        %vm3507 = vcmask 1044480
        %v3508 = vsel %vm3507, %v3288, 0.0
        %v3509 = vrot.slane %v3508, 4
        %v3510 = vadd.f32 %v3508, %v3509
        %v3511 = vrot.slane %v3510, 2
        %v3512 = vadd.f32 %v3510, %v3511
        %v3513 = vrot.slane %v3512, 1
        %v3514 = vadd.f32 %v3512, %v3513
        %v3515 = vsel %vm3507, %v3294, 0.0
        %v3516 = vrot.slane %v3515, 4
        %v3517 = vadd.f32 %v3515, %v3516
        %v3518 = vrot.slane %v3517, 2
        %v3519 = vadd.f32 %v3517, %v3518
        %v3520 = vrot.slane %v3519, 1
        %v3521 = vadd.f32 %v3519, %v3520
        %v3522 = vsel %vm3507, %v3300, 0.0
        %v3523 = vrot.slane %v3522, 4
        %v3524 = vadd.f32 %v3522, %v3523
        %v3525 = vrot.slane %v3524, 2
        %v3526 = vadd.f32 %v3524, %v3525
        %v3527 = vrot.slane %v3526, 1
        %v3528 = vadd.f32 %v3526, %v3527
        %v3529 = vsel %vm3507, %v3306, 0.0
        %v3530 = vrot.slane %v3529, 4
        %v3531 = vadd.f32 %v3529, %v3530
        %v3532 = vrot.slane %v3531, 2
        %v3533 = vadd.f32 %v3531, %v3532
        %v3534 = vrot.slane %v3533, 1
        %v3535 = vadd.f32 %v3533, %v3534
        %v3536 = vsel %vm3507, %v3312, 0.0
        %v3537 = vrot.slane %v3536, 4
        %v3538 = vadd.f32 %v3536, %v3537
        %v3539 = vrot.slane %v3538, 2
        %v3540 = vadd.f32 %v3538, %v3539
        %v3541 = vrot.slane %v3540, 1
        %v3542 = vadd.f32 %v3540, %v3541
        %v3543 = vsel %vm3507, %v3318, 0.0
        %v3544 = vrot.slane %v3543, 4
        %v3545 = vadd.f32 %v3543, %v3544
        %v3546 = vrot.slane %v3545, 2
        %v3547 = vadd.f32 %v3545, %v3546
        %v3548 = vrot.slane %v3547, 1
        %v3549 = vadd.f32 %v3547, %v3548
        %v3550 = vsel %vm3507, %v3324, 0.0
        %v3551 = vrot.slane %v3550, 4
        %v3552 = vadd.f32 %v3550, %v3551
        %v3553 = vrot.slane %v3552, 2
        %v3554 = vadd.f32 %v3552, %v3553
        %v3555 = vrot.slane %v3554, 1
        %v3556 = vadd.f32 %v3554, %v3555
        %v3557 = vsel %vm3507, %v3330, 0.0
        %v3558 = vrot.slane %v3557, 4
        %v3559 = vadd.f32 %v3557, %v3558
        %v3560 = vrot.slane %v3559, 2
        %v3561 = vadd.f32 %v3559, %v3560
        %v3562 = vrot.slane %v3561, 1
        %v3563 = vadd.f32 %v3561, %v3562
        %v3564 = vsel %vm3507, %v3336, 0.0
        %v3565 = vrot.slane %v3564, 4
        %v3566 = vadd.f32 %v3564, %v3565
        %v3567 = vrot.slane %v3566, 2
        %v3568 = vadd.f32 %v3566, %v3567
        %v3569 = vrot.slane %v3568, 1
        %v3570 = vadd.f32 %v3568, %v3569
        %v3571 = vsel %vm3507, %v3342, 0.0
        %v3572 = vrot.slane %v3571, 4
        %v3573 = vadd.f32 %v3571, %v3572
        %v3574 = vrot.slane %v3573, 2
        %v3575 = vadd.f32 %v3573, %v3574
        %v3576 = vrot.slane %v3575, 1
        %v3577 = vadd.f32 %v3575, %v3576
        %v3578 = vsel %vm3507, %v3348, 0.0
        %v3579 = vrot.slane %v3578, 4
        %v3580 = vadd.f32 %v3578, %v3579
        %v3581 = vrot.slane %v3580, 2
        %v3582 = vadd.f32 %v3580, %v3581
        %v3583 = vrot.slane %v3582, 1
        %v3584 = vadd.f32 %v3582, %v3583
        %v3585 = vsel %vm3507, %v3354, 0.0
        %v3586 = vrot.slane %v3585, 4
        %v3587 = vadd.f32 %v3585, %v3586
        %v3588 = vrot.slane %v3587, 2
        %v3589 = vadd.f32 %v3587, %v3588
        %v3590 = vrot.slane %v3589, 1
        %v3591 = vadd.f32 %v3589, %v3590
        %v3592 = vsel %vm3507, %v3360, 0.0
        %v3593 = vrot.slane %v3592, 4
        %v3594 = vadd.f32 %v3592, %v3593
        %v3595 = vrot.slane %v3594, 2
        %v3596 = vadd.f32 %v3594, %v3595
        %v3597 = vrot.slane %v3596, 1
        %v3598 = vadd.f32 %v3596, %v3597
        %v3599 = vsel %vm3507, %v3366, 0.0
        %v3600 = vrot.slane %v3599, 4
        %v3601 = vadd.f32 %v3599, %v3600
        %v3602 = vrot.slane %v3601, 2
        %v3603 = vadd.f32 %v3601, %v3602
        %v3604 = vrot.slane %v3603, 1
        %v3605 = vadd.f32 %v3603, %v3604
        %v3606 = vsel %vm3507, %v3372, 0.0
        %v3607 = vrot.slane %v3606, 4
        %v3608 = vadd.f32 %v3606, %v3607
        %v3609 = vrot.slane %v3608, 2
        %v3610 = vadd.f32 %v3608, %v3609
        %v3611 = vrot.slane %v3610, 1
        %v3612 = vadd.f32 %v3610, %v3611
        %v3613 = vsel %vm3507, %v3378, 0.0
        %v3614 = vrot.slane %v3613, 4
        %v3615 = vadd.f32 %v3613, %v3614
        %v3616 = vrot.slane %v3615, 2
        %v3617 = vadd.f32 %v3615, %v3616
        %v3618 = vrot.slane %v3617, 1
        %v3619 = vadd.f32 %v3617, %v3618
        %v3620 = vsel %vm3507, %v3384, 0.0
        %v3621 = vrot.slane %v3620, 4
        %v3622 = vadd.f32 %v3620, %v3621
        %v3623 = vrot.slane %v3622, 2
        %v3624 = vadd.f32 %v3622, %v3623
        %v3625 = vrot.slane %v3624, 1
        %v3626 = vadd.f32 %v3624, %v3625
        %v3627 = vsel %vm3507, %v3390, 0.0
        %v3628 = vrot.slane %v3627, 4
        %v3629 = vadd.f32 %v3627, %v3628
        %v3630 = vrot.slane %v3629, 2
        %v3631 = vadd.f32 %v3629, %v3630
        %v3632 = vrot.slane %v3631, 1
        %v3633 = vadd.f32 %v3631, %v3632
        %v3634 = vsel %vm3507, %v3396, 0.0
        %v3635 = vrot.slane %v3634, 4
        %v3636 = vadd.f32 %v3634, %v3635
        %v3637 = vrot.slane %v3636, 2
        %v3638 = vadd.f32 %v3636, %v3637
        %v3639 = vrot.slane %v3638, 1
        %v3640 = vadd.f32 %v3638, %v3639
        %v3641 = vsel %vm3507, %v3402, 0.0
        %v3642 = vrot.slane %v3641, 4
        %v3643 = vadd.f32 %v3641, %v3642
        %v3644 = vrot.slane %v3643, 2
        %v3645 = vadd.f32 %v3643, %v3644
        %v3646 = vrot.slane %v3645, 1
        %v3647 = vadd.f32 %v3645, %v3646
        %v3648 = vsel %vm3507, %v3408, 0.0
        %v3649 = vrot.slane %v3648, 4
        %v3650 = vadd.f32 %v3648, %v3649
        %v3651 = vrot.slane %v3650, 2
        %v3652 = vadd.f32 %v3650, %v3651
        %v3653 = vrot.slane %v3652, 1
        %v3654 = vadd.f32 %v3652, %v3653
        %v3655 = vsel %vm3507, %v3414, 0.0
        %v3656 = vrot.slane %v3655, 4
        %v3657 = vadd.f32 %v3655, %v3656
        %v3658 = vrot.slane %v3657, 2
        %v3659 = vadd.f32 %v3657, %v3658
        %v3660 = vrot.slane %v3659, 1
        %v3661 = vadd.f32 %v3659, %v3660
        %v3662 = vsel %vm3507, %v3420, 0.0
        %v3663 = vrot.slane %v3662, 4
        %v3664 = vadd.f32 %v3662, %v3663
        %v3665 = vrot.slane %v3664, 2
        %v3666 = vadd.f32 %v3664, %v3665
        %v3667 = vrot.slane %v3666, 1
        %v3668 = vadd.f32 %v3666, %v3667
        %v3669 = vsel %vm3507, %v3426, 0.0
        %v3670 = vrot.slane %v3669, 4
        %v3671 = vadd.f32 %v3669, %v3670
        %v3672 = vrot.slane %v3671, 2
        %v3673 = vadd.f32 %v3671, %v3672
        %v3674 = vrot.slane %v3673, 1
        %v3675 = vadd.f32 %v3673, %v3674
        %v3676 = vsel %vm3507, %v3432, 0.0
        %v3677 = vrot.slane %v3676, 4
        %v3678 = vadd.f32 %v3676, %v3677
        %v3679 = vrot.slane %v3678, 2
        %v3680 = vadd.f32 %v3678, %v3679
        %v3681 = vrot.slane %v3680, 1
        %v3682 = vadd.f32 %v3680, %v3681
        %v3683 = vsel %vm3507, %v3438, 0.0
        %v3684 = vrot.slane %v3683, 4
        %v3685 = vadd.f32 %v3683, %v3684
        %v3686 = vrot.slane %v3685, 2
        %v3687 = vadd.f32 %v3685, %v3686
        %v3688 = vrot.slane %v3687, 1
        %v3689 = vadd.f32 %v3687, %v3688
        %v3690 = vsel %vm3507, %v3444, 0.0
        %v3691 = vrot.slane %v3690, 4
        %v3692 = vadd.f32 %v3690, %v3691
        %v3693 = vrot.slane %v3692, 2
        %v3694 = vadd.f32 %v3692, %v3693
        %v3695 = vrot.slane %v3694, 1
        %v3696 = vadd.f32 %v3694, %v3695
        %v3697 = vsel %vm3507, %v3450, 0.0
        %v3698 = vrot.slane %v3697, 4
        %v3699 = vadd.f32 %v3697, %v3698
        %v3700 = vrot.slane %v3699, 2
        %v3701 = vadd.f32 %v3699, %v3700
        %v3702 = vrot.slane %v3701, 1
        %v3703 = vadd.f32 %v3701, %v3702
        %v3704 = vsel %vm3507, %v3456, 0.0
        %v3705 = vrot.slane %v3704, 4
        %v3706 = vadd.f32 %v3704, %v3705
        %v3707 = vrot.slane %v3706, 2
        %v3708 = vadd.f32 %v3706, %v3707
        %v3709 = vrot.slane %v3708, 1
        %v3710 = vadd.f32 %v3708, %v3709
        %v3711 = vsel %vm3507, %v3462, 0.0
        %v3712 = vrot.slane %v3711, 4
        %v3713 = vadd.f32 %v3711, %v3712
        %v3714 = vrot.slane %v3713, 2
        %v3715 = vadd.f32 %v3713, %v3714
        %v3716 = vrot.slane %v3715, 1
        %v3717 = vadd.f32 %v3715, %v3716
        %v3718 = vsel %vm3507, %v3468, 0.0
        %v3719 = vrot.slane %v3718, 4
        %v3720 = vadd.f32 %v3718, %v3719
        %v3721 = vrot.slane %v3720, 2
        %v3722 = vadd.f32 %v3720, %v3721
        %v3723 = vrot.slane %v3722, 1
        %v3724 = vadd.f32 %v3722, %v3723
        %v3725 = vsel %vm3507, %v3474, 0.0
        %v3726 = vrot.slane %v3725, 4
        %v3727 = vadd.f32 %v3725, %v3726
        %v3728 = vrot.slane %v3727, 2
        %v3729 = vadd.f32 %v3727, %v3728
        %v3730 = vrot.slane %v3729, 1
        %v3731 = vadd.f32 %v3729, %v3730
        %v3732 = vpack.c.bf16 %v3514, %v3514
        %v3733 = vpack.c.bf16 %v3521, %v3521
        %v3734 = vpack.c.bf16 %v3528, %v3528
        %v3735 = vpack.c.bf16 %v3535, %v3535
        %v3736 = vpack.c.bf16 %v3542, %v3542
        %v3737 = vpack.c.bf16 %v3549, %v3549
        %v3738 = vpack.c.bf16 %v3556, %v3556
        %v3739 = vpack.c.bf16 %v3563, %v3563
        %v3740 = vpack.c.bf16 %v3570, %v3570
        %v3741 = vpack.c.bf16 %v3577, %v3577
        %v3742 = vpack.c.bf16 %v3584, %v3584
        %v3743 = vpack.c.bf16 %v3591, %v3591
        %v3744 = vpack.c.bf16 %v3598, %v3598
        %v3745 = vpack.c.bf16 %v3605, %v3605
        %v3746 = vpack.c.bf16 %v3612, %v3612
        %v3747 = vpack.c.bf16 %v3619, %v3619
        %v3748 = vpack.c.bf16 %v3626, %v3626
        %v3749 = vpack.c.bf16 %v3633, %v3633
        %v3750 = vpack.c.bf16 %v3640, %v3640
        %v3751 = vpack.c.bf16 %v3647, %v3647
        %v3752 = vpack.c.bf16 %v3654, %v3654
        %v3753 = vpack.c.bf16 %v3661, %v3661
        %v3754 = vpack.c.bf16 %v3668, %v3668
        %v3755 = vpack.c.bf16 %v3675, %v3675
        %v3756 = vpack.c.bf16 %v3682, %v3682
        %v3757 = vpack.c.bf16 %v3689, %v3689
        %v3758 = vpack.c.bf16 %v3696, %v3696
        %v3759 = vpack.c.bf16 %v3703, %v3703
        %v3760 = vpack.c.bf16 %v3710, %v3710
        %v3761 = vpack.c.bf16 %v3717, %v3717
        %v3762 = vpack.c.bf16 %v3724, %v3724
        %v3763 = vpack.c.bf16 %v3731, %v3731
        %v3764 = vld [vmem:[%s7] sm:$0xf]
        %v3765 = vld [vmem:[%s7 + $0x4] sm:$0xf]
        %v3766 = vld [vmem:[%s7 + $0x8] sm:$0xf]
        %v3767 = vld [vmem:[%s7 + $0xc] sm:$0xf]
        %v3768 = vld [vmem:[%s7 + $0x10] sm:$0xf]
        %v3769 = vld [vmem:[%s7 + $0x14] sm:$0xf]
        %v3770 = vld [vmem:[%s7 + $0x18] sm:$0xf]
        %v3771 = vld [vmem:[%s7 + $0x1c] sm:$0xf]
        %v3772 = vld [vmem:[%s7 + $0x20] sm:$0xf]
        %v3773 = vld [vmem:[%s7 + $0x24] sm:$0xf]
        %v3774 = vld [vmem:[%s7 + $0x28] sm:$0xf]
        %v3775 = vld [vmem:[%s7 + $0x2c] sm:$0xf]
        %v3776 = vld [vmem:[%s7 + $0x30] sm:$0xf]
        %v3777 = vld [vmem:[%s7 + $0x34] sm:$0xf]
        %v3778 = vld [vmem:[%s7 + $0x38] sm:$0xf]
        %v3779 = vld [vmem:[%s7 + $0x3c] sm:$0xf]
        %v3780 = vld [vmem:[%s8] sm:$0x1]
        %v3782 = vperm.slane %v3780, 0
        %v3816 = vunpack.c.l.b16 %v3732
        %v3817 = vunpack.c.l.b16 %v3733
        %v3818 = vunpack.c.l.b16 %v3734
        %v3819 = vunpack.c.l.b16 %v3735
        %v3820 = vunpack.c.l.b16 %v3736
        %v3821 = vunpack.c.l.b16 %v3737
        %v3822 = vunpack.c.l.b16 %v3738
        %v3823 = vunpack.c.l.b16 %v3739
        %v3824 = vunpack.c.l.b16 %v3740
        %v3825 = vunpack.c.l.b16 %v3741
        %v3826 = vunpack.c.l.b16 %v3742
        %v3827 = vunpack.c.l.b16 %v3743
        %v3828 = vunpack.c.l.b16 %v3744
        %v3829 = vunpack.c.l.b16 %v3745
        %v3830 = vunpack.c.l.b16 %v3746
        %v3831 = vunpack.c.l.b16 %v3747
        %v3832 = vunpack.c.l.b16 %v3748
        %v3833 = vunpack.c.l.b16 %v3749
        %v3834 = vunpack.c.l.b16 %v3750
        %v3835 = vunpack.c.l.b16 %v3751
        %v3836 = vunpack.c.l.b16 %v3752
        %v3837 = vunpack.c.l.b16 %v3753
        %v3838 = vunpack.c.l.b16 %v3754
        %v3839 = vunpack.c.l.b16 %v3755
        %v3840 = vunpack.c.l.b16 %v3756
        %v3841 = vunpack.c.l.b16 %v3757
        %v3842 = vunpack.c.l.b16 %v3758
        %v3843 = vunpack.c.l.b16 %v3759
        %v3844 = vunpack.c.l.b16 %v3760
        %v3845 = vunpack.c.l.b16 %v3761
        %v3846 = vunpack.c.l.b16 %v3762
        %v3847 = vunpack.c.l.b16 %v3763
        %v3848 = vsel %vm2291, %v3817, %v3816
        %v3849 = vsel %vm2294, %v3818, %v3848
        %v3850 = vsel %vm2297, %v3819, %v3849
        %v3851 = vsel %vm2300, %v3820, %v3850
        %vm3852 = vcmask 1045509
        %v3853 = vsel %vm3852, %v3821, %v3851
        %vm3854 = vcmask 1046534
        %v3855 = vsel %vm3854, %v3822, %v3853
        %vm3856 = vcmask 1047559
        %v3857 = vsel %vm3856, %v3823, %v3855
        %v3858 = vsel %vm2291, %v3825, %v3824
        %v3859 = vsel %vm2294, %v3826, %v3858
        %v3860 = vsel %vm2297, %v3827, %v3859
        %v3861 = vsel %vm2300, %v3828, %v3860
        %v3862 = vsel %vm3852, %v3829, %v3861
        %v3863 = vsel %vm3854, %v3830, %v3862
        %v3864 = vsel %vm3856, %v3831, %v3863
        %v3865 = vsel %vm2291, %v3833, %v3832
        %v3866 = vsel %vm2294, %v3834, %v3865
        %v3867 = vsel %vm2297, %v3835, %v3866
        %v3868 = vsel %vm2300, %v3836, %v3867
        %v3869 = vsel %vm3852, %v3837, %v3868
        %v3870 = vsel %vm3854, %v3838, %v3869
        %v3871 = vsel %vm3856, %v3839, %v3870
        %v3872 = vsel %vm2291, %v3841, %v3840
        %v3873 = vsel %vm2294, %v3842, %v3872
        %v3874 = vsel %vm2297, %v3843, %v3873
        %v3875 = vsel %vm2300, %v3844, %v3874
        %v3876 = vsel %vm3852, %v3845, %v3875
        %v3877 = vsel %vm3854, %v3846, %v3876
        %v3878 = vsel %vm3856, %v3847, %v3877
        %v3879 = vpack.c.b16 %v3864, %v3857
        %v3880 = vpack.c.b16 %v3878, %v3871
        %v3899 = vunpack.c.l.b16 %v3764
        %v3900 = vunpack.c.l.b16 %v3765
        %v3901 = vunpack.c.l.b16 %v3766
        %v3902 = vunpack.c.l.b16 %v3767
        %v3903 = vunpack.c.l.b16 %v3768
        %v3904 = vunpack.c.l.b16 %v3769
        %v3905 = vunpack.c.l.b16 %v3770
        %v3906 = vunpack.c.l.b16 %v3771
        %v3907 = vunpack.c.l.b16 %v3772
        %v3908 = vunpack.c.l.b16 %v3773
        %v3909 = vunpack.c.l.b16 %v3774
        %v3910 = vunpack.c.l.b16 %v3775
        %v3911 = vunpack.c.l.b16 %v3776
        %v3912 = vunpack.c.l.b16 %v3777
        %v3913 = vunpack.c.l.b16 %v3778
        %v3914 = vunpack.c.l.b16 %v3779
        %v3915 = vpack.c.b16 %v3900, %v3899
        %v3916 = vpack.c.b16 %v3902, %v3901
        %v3917 = vpack.c.b16 %v3904, %v3903
        %v3918 = vpack.c.b16 %v3906, %v3905
        %v3919 = vpack.c.b16 %v3908, %v3907
        %v3920 = vpack.c.b16 %v3910, %v3909
        %v3921 = vpack.c.b16 %v3912, %v3911
        %v3922 = vpack.c.b16 %v3914, %v3913
        %3931 = vmatpush.bf16.msra.mxu0 %v3922
        %3932 = vmatpush.bf16.msra.mxu0 %v3921
        %3933 = vmatpush.bf16.msra.mxu0 %v3920
        %3934 = vmatpush.bf16.msra.mxu0 %v3919
        %3935 = vmatpush.bf16.msra.mxu0 %v3918
        %3936 = vmatpush.bf16.msra.mxu0 %v3917
        %3937 = vmatpush.bf16.msra.mxu0 %v3916
        %3938 = vmatpush.bf16.msra.mxu0 %v3915
        %3939 = vmatmul.bf16.gmra.mxu0 %v3879
        %v3940 = vpop.f32.mrf.mxu0
        %v3941 = vadd.f32 %v3782, %v3940
        %v3942 = vpop.f32.mrf.mxu0
        %v3943 = vadd.f32 %v3782, %v3942
        %3944 = vmatmul.bf16.gmra.mxu0 %v3880
        %v3945 = vpop.f32.mrf.mxu0
        %v3946 = vadd.f32 %v3782, %v3945
        %v3947 = vpop.f32.mrf.mxu0
        %v3948 = vadd.f32 %v3782, %v3947
        %3949 = vdwg.mxu0
        %3950 = vst [vmem:[%s326] sm:$0xff] %v3941
        %3951 = vst [vmem:[%s326 + $0x8] sm:$0xff] %v3943
        %3952 = vst [vmem:[%s326 + $0x10] sm:$0xff] %v3946
        %3953 = vst [vmem:[%s326 + $0x18] sm:$0xff] %v3948
        %s3954 = sand.u32 %s225, 1
        %s3955 = scalar_lea.sflag [#allocation3], %s3954
        %s3956 = sand.u32 %s225, 1
        %s3957 = smul.addr %s3956, 32
        %s3958 = scalar_lea.vmem [#allocation2], %s3957
        // Predicated region
        $region57: #{tpu_custom_call.1} parent=55 // pred_check
          %p3959 = pneg %p235
        $region58: #{tpu_custom_call.1} parent=55 // pred_check_branch
          %3961 = sbr.rel (%p3959) target = $region60
        $region59: #{tpu_custom_call.1} parent=55 // pred_region
          %s3962 = smul.u32 4, %s23
          %3964 = vsyncadd %s3955, 0
          %s3965 = smul.addr %s3962, 8
          %s3966 = scalar_lea.hbm %s9, %s3965
          %s3967 = sshll.u32 %s3958, 4
          %s3968 = int_to_ptr.vmem [resolvable:$true] %s3967
          %s3969 = sshll.u32 %s3966, 4
          %s3970 = int_to_ptr.hbm [resolvable:$true] %s3969
          %3975 = dma.vmem_to_hbm [thread:$0]  %s3968, 512, %s3970, %s3955, 128, 128, 8
        $region60: #{tpu_custom_call.1} parent=55 // pred_fallthru
          _
      $region56: #{tpu_custom_call.1} parent=5 // pred_fallthru
        _
      %p3976 = scmp.le.s32.totalorder 2, %s18
      // Predicated region
      $region61: #{tpu_custom_call.1} parent=5 // pred_check
        %p3977 = pneg %p3976
      $region62: #{tpu_custom_call.1} parent=5 // pred_check_branch
        %3979 = sbr.rel (%p3977) target = $region64
      $region63: #{tpu_custom_call.1} parent=5 // pred_region
        %s3980 = ssub.s32 %s18, 2
        // Predicated region
        $region65: #{tpu_custom_call.1} parent=63 // pred_check
          %p3981 = pneg %p241
        $region66: #{tpu_custom_call.1} parent=63 // pred_check_branch
          %3983 = sbr.rel (%p3981) target = $region68
        $region67: #{tpu_custom_call.1} parent=63 // pred_region
          %s3984 = sand.u32 %s226, 1
          %s3985 = scalar_lea.sflag [#allocation3], %s3984
          %s3986 = sand.u32 %s226, 1
          %s3987 = smul.addr %s3986, 32
          %s3988 = scalar_lea.vmem [#allocation2], %s3987
          %3990 = dma.done %s3985, 512
        $region68: #{tpu_custom_call.1} parent=63 // pred_fallthru
          _
      $region64: #{tpu_custom_call.1} parent=5 // pred_fallthru
        _
    $region6: #{tpu_custom_call.1} parent=1 // loop_footer
      %s22 = sadd.s32 1, %s18
    $region7: #{tpu_custom_call.1} parent=1 // loop_footer_branch
      %17 = sbr.rel target = $region3
    $region8: #{tpu_custom_call.1} parent=1 // loop_exit
      _
    %3991 = vsyncpa [#allocation3], 1
    %s3992 = scalar_lea.sflag [#allocation3], 1
    %3993 = vsyncpa %s3992, 1

</llo_original>
